<compile_context>
chip_gen: v6e
topology: v6e:2x2x1
jax: 0.10.0
libtpu: 0.0.40
codegen_flags: <defaults>
</compile_context>

<pallas_src>
import math

import jax
import jax.numpy as jnp
from jax.experimental import pallas as pl
from jax.experimental.pallas import tpu as pltpu

NUM_HIDDEN = 32
NUM_HEADS = 4
HEAD_DIM = NUM_HIDDEN // NUM_HEADS
LN_EPS = 1e-5


def attention_kernel(mem_ref, dec_ref, wk_ref, wv_ref, wq_ref,
                     wfd_ref, wfr_ref, bf_ref, gamma_ref, beta_ref,
                     out_ref, attn_ref):
    """One batch tile (Bt elements) per grid step.

    mem_ref : (Bt, S_k, H)   dec_ref : (Bt, S_q, H)
    wk/wv/wq: (NUM_HEADS, H, HEAD_DIM)   (pre-transposed, per-head slabs)
    wfd_ref : (H, H)   wfr_ref : (NUM_HEADS, HEAD_DIM, H)
    bf/gamma/beta : (1, H)
    out_ref : (Bt, S_q, H)   attn_ref: (NUM_HEADS, Bt, S_q, S_k)  (head-major)
    """
    Bt, S_k, H = mem_ref.shape
    S_q = dec_ref.shape[1]

    mem2 = mem_ref[...].reshape(Bt * S_k, H).astype(jnp.float32)   # (Bt*S_k, H)
    dec2 = dec_ref[...].reshape(Bt * S_q, H).astype(jnp.float32)   # (Bt*S_q, H)

    scale = 1.0 / math.sqrt(HEAD_DIM)

    # Final-linear contribution of decoder_input (first half of Wf) plus bias.
    acc = jnp.dot(dec2, wfd_ref[...], preferred_element_type=jnp.float32) + bf_ref[...]

    # Static per-head unroll; per-head weights arrive pre-split, so there is no
    # lane slicing, no transpose, and no concatenate inside the kernel.
    for h in range(NUM_HEADS):
        Kh = jnp.dot(mem2, wk_ref[h],
                     preferred_element_type=jnp.float32).reshape(Bt, S_k, HEAD_DIM)
        Vh = jnp.dot(mem2, wv_ref[h],
                     preferred_element_type=jnp.float32).reshape(Bt, S_k, HEAD_DIM)
        Qh = jnp.dot(dec2, wq_ref[h],
                     preferred_element_type=jnp.float32).reshape(Bt, S_q, HEAD_DIM)

        logits = jnp.einsum('bqd,bkd->bqk', Qh, Kh,
                            preferred_element_type=jnp.float32) * scale
        logits = logits - jnp.max(logits, axis=-1, keepdims=True)
        e = jnp.exp(logits)
        probs = e * pl.reciprocal(jnp.sum(e, axis=-1, keepdims=True), approx=True)

        # Head-major attention-probability output, written directly in the
        # final layout (leading-dim store, no lane/sublane shuffles).
        attn_ref[h] = probs.astype(attn_ref.dtype)

        res_h = jnp.einsum('bqk,bkd->bqd', probs, Vh,
                           preferred_element_type=jnp.float32)       # (Bt, S_q, d)
        # result_h @ Wf_res_h accumulates the "result" half of the final linear.
        acc = acc + jnp.dot(res_h.reshape(Bt * S_q, HEAD_DIM), wfr_ref[h],
                            preferred_element_type=jnp.float32)

    # residual + layer norm (biased variance, eps=1e-5, like nn.LayerNorm)
    resid = acc + dec2
    mean = jnp.mean(resid, axis=-1, keepdims=True)
    var = jnp.mean(jnp.square(resid - mean), axis=-1, keepdims=True)
    normed = (resid - mean) * jax.lax.rsqrt(var + LN_EPS)
    out = normed * gamma_ref[...] + beta_ref[...]

    out_ref[...] = out.reshape(Bt, S_q, H).astype(out_ref.dtype)


def attention_forward(memory, decoder_input, params, *, max_batch_block=8):
    """memory: (B, S_k, H), decoder_input: (B, S_q, H). Returns (out, attns)."""
    B, S_k, H = memory.shape
    S_q = decoder_input.shape[1]
    assert H == NUM_HIDDEN

    # Largest divisor of B that fits the batch-tile budget.
    Bt = max(d for d in range(1, min(B, max_batch_block) + 1) if B % d == 0)
    grid = (B // Bt,)

    # ---- Host-side weight preparation (done once; free relative to the kernel) ----
    # nn.Linear stores W as (out, in), y = x @ W.T.  Pre-transpose so the kernel
    # computes plain x @ W, and split per-head so the kernel never lane-slices.
    wk_s = params["wk"].reshape(NUM_HEADS, HEAD_DIM, H).transpose(0, 2, 1)  # (NH,H,D)
    wv_s = params["wv"].reshape(NUM_HEADS, HEAD_DIM, H).transpose(0, 2, 1)  # (NH,H,D)
    wq_s = params["wq"].reshape(NUM_HEADS, HEAD_DIM, H).transpose(0, 2, 1)  # (NH,H,D)
    # Final linear Wf: (H_out, 2H_in); in = [decoder_input, result].
    wf_dec = params["wf"][:, :H].T                                          # (H, H)
    wf_res_s = params["wf"][:, H:].T.reshape(NUM_HEADS, HEAD_DIM, H)        # (NH,D,H)
    bf = params["bf"].reshape(1, H)
    gamma = params["gamma"].reshape(1, H)
    beta = params["beta"].reshape(1, H)

    out_shapes = (
        jax.ShapeDtypeStruct((B, S_q, H), memory.dtype),
        jax.ShapeDtypeStruct((NUM_HEADS, B, S_q, S_k), jnp.float32),  # head-major
    )
    in_specs = [
        pl.BlockSpec((Bt, S_k, H), lambda b: (b, 0, 0)),                  # memory
        pl.BlockSpec((Bt, S_q, H), lambda b: (b, 0, 0)),                  # decoder_input
        pl.BlockSpec((NUM_HEADS, H, HEAD_DIM), lambda b: (0, 0, 0)),      # Wk (per-head)
        pl.BlockSpec((NUM_HEADS, H, HEAD_DIM), lambda b: (0, 0, 0)),      # Wv (per-head)
        pl.BlockSpec((NUM_HEADS, H, HEAD_DIM), lambda b: (0, 0, 0)),      # Wq (per-head)
        pl.BlockSpec((H, H), lambda b: (0, 0)),                           # Wf (dec half)
        pl.BlockSpec((NUM_HEADS, HEAD_DIM, H), lambda b: (0, 0, 0)),      # Wf (res half)
        pl.BlockSpec((1, H), lambda b: (0, 0)),                           # bf
        pl.BlockSpec((1, H), lambda b: (0, 0)),                           # ln gamma
        pl.BlockSpec((1, H), lambda b: (0, 0)),                           # ln beta
    ]
    out_specs = (
        pl.BlockSpec((Bt, S_q, H), lambda b: (b, 0, 0)),
        pl.BlockSpec((NUM_HEADS, Bt, S_q, S_k), lambda b: (0, b, 0, 0)),
    )

    out, attn = pl.pallas_call(
        attention_kernel,
        out_shape=out_shapes,
        grid=grid,
        in_specs=in_specs,
        out_specs=out_specs,
        compiler_params=pltpu.CompilerParams(
            dimension_semantics=("parallel",)),
    )(memory, decoder_input, wk_s, wv_s, wq_s, wf_dec, wf_res_s, bf, gamma, beta)

    # attn is already head-major (NH, B, S_q, S_k); PyTorch's flattened first axis
    # is h*B + b, so these are pure (free) reshapes — no transpose needed.
    attns = attn.reshape(NUM_HEADS * B // 4, 4, S_q, S_k)
    return out, attns


def xavier_uniform(key, shape, gain=1.0):
    fan_out, fan_in = shape
    bound = gain * math.sqrt(6.0 / (fan_in + fan_out))
    return jax.random.uniform(key, shape, jnp.float32, -bound, bound)


def init_params(key):
    k = jax.random.split(key, 6)
    H = NUM_HIDDEN
    bf_bound = 1.0 / math.sqrt(2 * H)
    return {
        "wk": xavier_uniform(k[0], (H, H)),
        "wv": xavier_uniform(k[1], (H, H)),
        "wq": xavier_uniform(k[2], (H, H)),
        "wf": xavier_uniform(k[3], (H, 2 * H)),
        "bf": jax.random.uniform(k[4], (H,), jnp.float32, -bf_bound, bf_bound),
        "gamma": jnp.ones((H,), jnp.float32),
        "beta": jnp.zeros((H,), jnp.float32),
    }


if __name__ == "__main__":
    key = jax.random.PRNGKey(0)
    k_mem, k_dec, k_par = jax.random.split(key, 3)

    B, S = 2, 8
    memory = jax.random.normal(k_mem, (B, S, NUM_HIDDEN), jnp.float32)
    decoder_input = jax.random.normal(k_dec, (B, S, NUM_HIDDEN), jnp.float32)
    params = init_params(k_par)

    out, attns = attention_forward(memory, decoder_input, params)
    jax.block_until_ready(out)
    jax.block_until_ready(attns)
    assert out.shape == (B, S, NUM_HIDDEN)
    assert attns.shape == (NUM_HEADS * B // 4, 4, S, S)
    print("KERNEL_OK")
</pallas_src>

<mosaic_0001>
module attributes {stable_mosaic.version = 11 : i64} {
  func.func @attention_kernel(%arg0: i32, %arg1: memref<2x8x32xf32, #tpu.memory_space<vmem>>, %arg2: memref<2x8x32xf32, #tpu.memory_space<vmem>>, %arg3: memref<4x32x8xf32, #tpu.memory_space<vmem>>, %arg4: memref<4x32x8xf32, #tpu.memory_space<vmem>>, %arg5: memref<4x32x8xf32, #tpu.memory_space<vmem>>, %arg6: memref<32x32xf32, #tpu.memory_space<vmem>>, %arg7: memref<4x8x32xf32, #tpu.memory_space<vmem>>, %arg8: memref<1x32xf32, #tpu.memory_space<vmem>>, %arg9: memref<1x32xf32, #tpu.memory_space<vmem>>, %arg10: memref<1x32xf32, #tpu.memory_space<vmem>>, %arg11: memref<2x8x32xf32, #tpu.memory_space<vmem>>, %arg12: memref<4x2x8x8xf32, #tpu.memory_space<vmem>>) attributes {dimension_semantics = [#tpu.dimension_semantics<parallel>], iteration_bounds = array<i64: 1>, scalar_prefetch = 0 : i64, scratch_operands = 0 : i64, tpu.core_type = #tpu.core_type<tc>, window_params = [{transform_indices = @transform_0, window_bounds = array<i64: 2, 8, 32>}, {transform_indices = @transform_1, window_bounds = array<i64: 2, 8, 32>}, {pipeline_mode = #tpu.pipeline_mode<synchronous>, transform_indices = @transform_2, window_bounds = array<i64: 4, 32, 8>}, {pipeline_mode = #tpu.pipeline_mode<synchronous>, transform_indices = @transform_3, window_bounds = array<i64: 4, 32, 8>}, {pipeline_mode = #tpu.pipeline_mode<synchronous>, transform_indices = @transform_4, window_bounds = array<i64: 4, 32, 8>}, {pipeline_mode = #tpu.pipeline_mode<synchronous>, transform_indices = @transform_5, window_bounds = array<i64: 32, 32>}, {pipeline_mode = #tpu.pipeline_mode<synchronous>, transform_indices = @transform_6, window_bounds = array<i64: 4, 8, 32>}, {pipeline_mode = #tpu.pipeline_mode<synchronous>, transform_indices = @transform_7, window_bounds = array<i64: 1, 32>}, {pipeline_mode = #tpu.pipeline_mode<synchronous>, transform_indices = @transform_8, window_bounds = array<i64: 1, 32>}, {pipeline_mode = #tpu.pipeline_mode<synchronous>, transform_indices = @transform_9, window_bounds = array<i64: 1, 32>}, {transform_indices = @transform_10, window_bounds = array<i64: 2, 8, 32>}, {transform_indices = @transform_11, window_bounds = array<i64: 4, 2, 8, 8>}]} {
    %c0 = arith.constant 0 : index
    %c0_0 = arith.constant 0 : index
    %c0_1 = arith.constant 0 : index
    %0 = vector.load %arg1[%c0, %c0_0, %c0_1] : memref<2x8x32xf32, #tpu.memory_space<vmem>>, vector<2x8x32xf32>
    %1 = vector.shape_cast %0 : vector<2x8x32xf32> to vector<16x32xf32>
    %c0_2 = arith.constant 0 : index
    %c0_3 = arith.constant 0 : index
    %c0_4 = arith.constant 0 : index
    %2 = vector.load %arg2[%c0_2, %c0_3, %c0_4] : memref<2x8x32xf32, #tpu.memory_space<vmem>>, vector<2x8x32xf32>
    %3 = vector.shape_cast %2 : vector<2x8x32xf32> to vector<16x32xf32>
    %c0_5 = arith.constant 0 : index
    %c0_6 = arith.constant 0 : index
    %4 = vector.load %arg6[%c0_5, %c0_6] : memref<32x32xf32, #tpu.memory_space<vmem>>, vector<32x32xf32>
    %cst = arith.constant dense<0.000000e+00> : vector<16x32xf32>
    %5 = tpu.matmul %3, %4, %cst {dimension_numbers = #tpu.dot_dimension_numbers<[1], [0], [0], [1], [0, 0, 1, 1], [], []>} : vector<16x32xf32>, vector<32x32xf32>, vector<16x32xf32> -> vector<16x32xf32>
    %c0_7 = arith.constant 0 : index
    %c0_8 = arith.constant 0 : index
    %6 = vector.load %arg8[%c0_7, %c0_8] : memref<1x32xf32, #tpu.memory_space<vmem>>, vector<1x32xf32>
    %7 = vector.broadcast %6 : vector<1x32xf32> to vector<16x32xf32>
    %8 = arith.addf %5, %7 : vector<16x32xf32>
    %c0_9 = arith.constant 0 : index
    %c0_10 = arith.constant 0 : index
    %c0_11 = arith.constant 0 : index
    %9 = vector.load %arg3[%c0_9, %c0_10, %c0_11] : memref<4x32x8xf32, #tpu.memory_space<vmem>>, vector<1x32x8xf32>
    %10 = vector.shape_cast %9 : vector<1x32x8xf32> to vector<32x8xf32>
    %cst_12 = arith.constant dense<0.000000e+00> : vector<16x8xf32>
    %11 = tpu.matmul %1, %10, %cst_12 {dimension_numbers = #tpu.dot_dimension_numbers<[1], [0], [0], [1], [0, 0, 1, 1], [], []>} : vector<16x32xf32>, vector<32x8xf32>, vector<16x8xf32> -> vector<16x8xf32>
    %12 = vector.shape_cast %11 : vector<16x8xf32> to vector<2x8x8xf32>
    %c0_13 = arith.constant 0 : index
    %c0_14 = arith.constant 0 : index
    %c0_15 = arith.constant 0 : index
    %13 = vector.load %arg4[%c0_13, %c0_14, %c0_15] : memref<4x32x8xf32, #tpu.memory_space<vmem>>, vector<1x32x8xf32>
    %14 = vector.shape_cast %13 : vector<1x32x8xf32> to vector<32x8xf32>
    %cst_16 = arith.constant dense<0.000000e+00> : vector<16x8xf32>
    %15 = tpu.matmul %1, %14, %cst_16 {dimension_numbers = #tpu.dot_dimension_numbers<[1], [0], [0], [1], [0, 0, 1, 1], [], []>} : vector<16x32xf32>, vector<32x8xf32>, vector<16x8xf32> -> vector<16x8xf32>
    %16 = vector.shape_cast %15 : vector<16x8xf32> to vector<2x8x8xf32>
    %c0_17 = arith.constant 0 : index
    %c0_18 = arith.constant 0 : index
    %c0_19 = arith.constant 0 : index
    %17 = vector.load %arg5[%c0_17, %c0_18, %c0_19] : memref<4x32x8xf32, #tpu.memory_space<vmem>>, vector<1x32x8xf32>
    %18 = vector.shape_cast %17 : vector<1x32x8xf32> to vector<32x8xf32>
    %cst_20 = arith.constant dense<0.000000e+00> : vector<16x8xf32>
    %19 = tpu.matmul %3, %18, %cst_20 {dimension_numbers = #tpu.dot_dimension_numbers<[1], [0], [0], [1], [0, 0, 1, 1], [], []>} : vector<16x32xf32>, vector<32x8xf32>, vector<16x8xf32> -> vector<16x8xf32>
    %20 = vector.shape_cast %19 : vector<16x8xf32> to vector<2x8x8xf32>
    "tpu.trace_start"() <{level = 10 : i32, message = "bqd,bkd->bqk"}> : () -> ()
    %cst_21 = arith.constant dense<0.000000e+00> : vector<2x8x8xf32>
    %21 = tpu.matmul %20, %12, %cst_21 {dimension_numbers = #tpu.dot_dimension_numbers<[2], [2], [1], [1], [0, 0, 0, 1, 1, 1], [0], [0]>} : vector<2x8x8xf32>, vector<2x8x8xf32>, vector<2x8x8xf32> -> vector<2x8x8xf32>
    "tpu.trace_stop"() : () -> ()
    %cst_22 = arith.constant 0.353553385 : f32
    %22 = vector.broadcast %cst_22 : f32 to vector<2x8x8xf32>
    %23 = arith.mulf %21, %22 : vector<2x8x8xf32>
    %cst_23 = arith.constant dense<0xFF800000> : vector<2x8xf32>
    %24 = vector.multi_reduction <maximumf>, %23, %cst_23 [2] : vector<2x8x8xf32> to vector<2x8xf32>
    %25 = vector.shape_cast %24 : vector<2x8xf32> to vector<2x8x1xf32>
    %26 = vector.broadcast %25 : vector<2x8x1xf32> to vector<2x8x8xf32>
    %27 = arith.subf %23, %26 : vector<2x8x8xf32>
    %28 = math.exp %27 : vector<2x8x8xf32>
    %cst_24 = arith.constant dense<0.000000e+00> : vector<2x8xf32>
    %29 = vector.multi_reduction <add>, %28, %cst_24 [2] : vector<2x8x8xf32> to vector<2x8xf32>
    %30 = vector.shape_cast %29 : vector<2x8xf32> to vector<2x8x1xf32>
    %31 = tpu.reciprocal %30 {approx = true} : vector<2x8x1xf32> -> vector<2x8x1xf32>
    %32 = vector.broadcast %31 : vector<2x8x1xf32> to vector<2x8x8xf32>
    %33 = arith.mulf %28, %32 : vector<2x8x8xf32>
    %c0_25 = arith.constant 0 : index
    %c0_26 = arith.constant 0 : index
    %c0_27 = arith.constant 0 : index
    %c0_28 = arith.constant 0 : index
    %34 = vector.load %arg12[%c0_25, %c0_26, %c0_27, %c0_28] : memref<4x2x8x8xf32, #tpu.memory_space<vmem>>, vector<1x2x8x8xf32>
    %35 = vector.shape_cast %34 : vector<1x2x8x8xf32> to vector<2x8x8xf32>
    %36 = vector.shape_cast %33 : vector<2x8x8xf32> to vector<1x2x8x8xf32>
    tpu.vector_store %arg12[%c0_25, %c0_26, %c0_27, %c0_28], %36 {strides = array<i32>} : memref<4x2x8x8xf32, #tpu.memory_space<vmem>>, vector<1x2x8x8xf32>,
    "tpu.trace_start"() <{level = 10 : i32, message = "bqk,bkd->bqd"}> : () -> ()
    %cst_29 = arith.constant dense<0.000000e+00> : vector<2x8x8xf32>
    %37 = tpu.matmul %33, %16, %cst_29 {dimension_numbers = #tpu.dot_dimension_numbers<[2], [1], [1], [2], [0, 0, 0, 1, 1, 2], [0], [0]>} : vector<2x8x8xf32>, vector<2x8x8xf32>, vector<2x8x8xf32> -> vector<2x8x8xf32>
    "tpu.trace_stop"() : () -> ()
    %38 = vector.shape_cast %37 : vector<2x8x8xf32> to vector<16x8xf32>
    %c0_30 = arith.constant 0 : index
    %c0_31 = arith.constant 0 : index
    %c0_32 = arith.constant 0 : index
    %39 = vector.load %arg7[%c0_30, %c0_31, %c0_32] : memref<4x8x32xf32, #tpu.memory_space<vmem>>, vector<1x8x32xf32>
    %40 = vector.shape_cast %39 : vector<1x8x32xf32> to vector<8x32xf32>
    %cst_33 = arith.constant dense<0.000000e+00> : vector<16x32xf32>
    %41 = tpu.matmul %38, %40, %cst_33 {dimension_numbers = #tpu.dot_dimension_numbers<[1], [0], [0], [1], [0, 0, 1, 1], [], []>} : vector<16x8xf32>, vector<8x32xf32>, vector<16x32xf32> -> vector<16x32xf32>
    %42 = arith.addf %8, %41 : vector<16x32xf32>
    %c1 = arith.constant 1 : index
    %c0_34 = arith.constant 0 : index
    %c0_35 = arith.constant 0 : index
    %43 = vector.load %arg3[%c1, %c0_34, %c0_35] : memref<4x32x8xf32, #tpu.memory_space<vmem>>, vector<1x32x8xf32>
    %44 = vector.shape_cast %43 : vector<1x32x8xf32> to vector<32x8xf32>
    %cst_36 = arith.constant dense<0.000000e+00> : vector<16x8xf32>
    %45 = tpu.matmul %1, %44, %cst_36 {dimension_numbers = #tpu.dot_dimension_numbers<[1], [0], [0], [1], [0, 0, 1, 1], [], []>} : vector<16x32xf32>, vector<32x8xf32>, vector<16x8xf32> -> vector<16x8xf32>
    %46 = vector.shape_cast %45 : vector<16x8xf32> to vector<2x8x8xf32>
    %c1_37 = arith.constant 1 : index
    %c0_38 = arith.constant 0 : index
    %c0_39 = arith.constant 0 : index
    %47 = vector.load %arg4[%c1_37, %c0_38, %c0_39] : memref<4x32x8xf32, #tpu.memory_space<vmem>>, vector<1x32x8xf32>
    %48 = vector.shape_cast %47 : vector<1x32x8xf32> to vector<32x8xf32>
    %cst_40 = arith.constant dense<0.000000e+00> : vector<16x8xf32>
    %49 = tpu.matmul %1, %48, %cst_40 {dimension_numbers = #tpu.dot_dimension_numbers<[1], [0], [0], [1], [0, 0, 1, 1], [], []>} : vector<16x32xf32>, vector<32x8xf32>, vector<16x8xf32> -> vector<16x8xf32>
    %50 = vector.shape_cast %49 : vector<16x8xf32> to vector<2x8x8xf32>
    %c1_41 = arith.constant 1 : index
    %c0_42 = arith.constant 0 : index
    %c0_43 = arith.constant 0 : index
    %51 = vector.load %arg5[%c1_41, %c0_42, %c0_43] : memref<4x32x8xf32, #tpu.memory_space<vmem>>, vector<1x32x8xf32>
    %52 = vector.shape_cast %51 : vector<1x32x8xf32> to vector<32x8xf32>
    %cst_44 = arith.constant dense<0.000000e+00> : vector<16x8xf32>
    %53 = tpu.matmul %3, %52, %cst_44 {dimension_numbers = #tpu.dot_dimension_numbers<[1], [0], [0], [1], [0, 0, 1, 1], [], []>} : vector<16x32xf32>, vector<32x8xf32>, vector<16x8xf32> -> vector<16x8xf32>
    %54 = vector.shape_cast %53 : vector<16x8xf32> to vector<2x8x8xf32>
    "tpu.trace_start"() <{level = 10 : i32, message = "bqd,bkd->bqk"}> : () -> ()
    %cst_45 = arith.constant dense<0.000000e+00> : vector<2x8x8xf32>
    %55 = tpu.matmul %54, %46, %cst_45 {dimension_numbers = #tpu.dot_dimension_numbers<[2], [2], [1], [1], [0, 0, 0, 1, 1, 1], [0], [0]>} : vector<2x8x8xf32>, vector<2x8x8xf32>, vector<2x8x8xf32> -> vector<2x8x8xf32>
    "tpu.trace_stop"() : () -> ()
    %cst_46 = arith.constant 0.353553385 : f32
    %56 = vector.broadcast %cst_46 : f32 to vector<2x8x8xf32>
    %57 = arith.mulf %55, %56 : vector<2x8x8xf32>
    %cst_47 = arith.constant dense<0xFF800000> : vector<2x8xf32>
    %58 = vector.multi_reduction <maximumf>, %57, %cst_47 [2] : vector<2x8x8xf32> to vector<2x8xf32>
    %59 = vector.shape_cast %58 : vector<2x8xf32> to vector<2x8x1xf32>
    %60 = vector.broadcast %59 : vector<2x8x1xf32> to vector<2x8x8xf32>
    %61 = arith.subf %57, %60 : vector<2x8x8xf32>
    %62 = math.exp %61 : vector<2x8x8xf32>
    %cst_48 = arith.constant dense<0.000000e+00> : vector<2x8xf32>
    %63 = vector.multi_reduction <add>, %62, %cst_48 [2] : vector<2x8x8xf32> to vector<2x8xf32>
    %64 = vector.shape_cast %63 : vector<2x8xf32> to vector<2x8x1xf32>
    %65 = tpu.reciprocal %64 {approx = true} : vector<2x8x1xf32> -> vector<2x8x1xf32>
    %66 = vector.broadcast %65 : vector<2x8x1xf32> to vector<2x8x8xf32>
    %67 = arith.mulf %62, %66 : vector<2x8x8xf32>
    %c1_49 = arith.constant 1 : index
    %c0_50 = arith.constant 0 : index
    %c0_51 = arith.constant 0 : index
    %c0_52 = arith.constant 0 : index
    %68 = vector.load %arg12[%c1_49, %c0_50, %c0_51, %c0_52] : memref<4x2x8x8xf32, #tpu.memory_space<vmem>>, vector<1x2x8x8xf32>
    %69 = vector.shape_cast %68 : vector<1x2x8x8xf32> to vector<2x8x8xf32>
    %70 = vector.shape_cast %67 : vector<2x8x8xf32> to vector<1x2x8x8xf32>
    tpu.vector_store %arg12[%c1_49, %c0_50, %c0_51, %c0_52], %70 {strides = array<i32>} : memref<4x2x8x8xf32, #tpu.memory_space<vmem>>, vector<1x2x8x8xf32>,
    "tpu.trace_start"() <{level = 10 : i32, message = "bqk,bkd->bqd"}> : () -> ()
    %cst_53 = arith.constant dense<0.000000e+00> : vector<2x8x8xf32>
    %71 = tpu.matmul %67, %50, %cst_53 {dimension_numbers = #tpu.dot_dimension_numbers<[2], [1], [1], [2], [0, 0, 0, 1, 1, 2], [0], [0]>} : vector<2x8x8xf32>, vector<2x8x8xf32>, vector<2x8x8xf32> -> vector<2x8x8xf32>
    "tpu.trace_stop"() : () -> ()
    %72 = vector.shape_cast %71 : vector<2x8x8xf32> to vector<16x8xf32>
    %c1_54 = arith.constant 1 : index
    %c0_55 = arith.constant 0 : index
    %c0_56 = arith.constant 0 : index
    %73 = vector.load %arg7[%c1_54, %c0_55, %c0_56] : memref<4x8x32xf32, #tpu.memory_space<vmem>>, vector<1x8x32xf32>
    %74 = vector.shape_cast %73 : vector<1x8x32xf32> to vector<8x32xf32>
    %cst_57 = arith.constant dense<0.000000e+00> : vector<16x32xf32>
    %75 = tpu.matmul %72, %74, %cst_57 {dimension_numbers = #tpu.dot_dimension_numbers<[1], [0], [0], [1], [0, 0, 1, 1], [], []>} : vector<16x8xf32>, vector<8x32xf32>, vector<16x32xf32> -> vector<16x32xf32>
    %76 = arith.addf %42, %75 : vector<16x32xf32>
    %c2 = arith.constant 2 : index
    %c0_58 = arith.constant 0 : index
    %c0_59 = arith.constant 0 : index
    %77 = vector.load %arg3[%c2, %c0_58, %c0_59] : memref<4x32x8xf32, #tpu.memory_space<vmem>>, vector<1x32x8xf32>
    %78 = vector.shape_cast %77 : vector<1x32x8xf32> to vector<32x8xf32>
    %cst_60 = arith.constant dense<0.000000e+00> : vector<16x8xf32>
    %79 = tpu.matmul %1, %78, %cst_60 {dimension_numbers = #tpu.dot_dimension_numbers<[1], [0], [0], [1], [0, 0, 1, 1], [], []>} : vector<16x32xf32>, vector<32x8xf32>, vector<16x8xf32> -> vector<16x8xf32>
    %80 = vector.shape_cast %79 : vector<16x8xf32> to vector<2x8x8xf32>
    %c2_61 = arith.constant 2 : index
    %c0_62 = arith.constant 0 : index
    %c0_63 = arith.constant 0 : index
    %81 = vector.load %arg4[%c2_61, %c0_62, %c0_63] : memref<4x32x8xf32, #tpu.memory_space<vmem>>, vector<1x32x8xf32>
    %82 = vector.shape_cast %81 : vector<1x32x8xf32> to vector<32x8xf32>
    %cst_64 = arith.constant dense<0.000000e+00> : vector<16x8xf32>
    %83 = tpu.matmul %1, %82, %cst_64 {dimension_numbers = #tpu.dot_dimension_numbers<[1], [0], [0], [1], [0, 0, 1, 1], [], []>} : vector<16x32xf32>, vector<32x8xf32>, vector<16x8xf32> -> vector<16x8xf32>
    %84 = vector.shape_cast %83 : vector<16x8xf32> to vector<2x8x8xf32>
    %c2_65 = arith.constant 2 : index
    %c0_66 = arith.constant 0 : index
    %c0_67 = arith.constant 0 : index
    %85 = vector.load %arg5[%c2_65, %c0_66, %c0_67] : memref<4x32x8xf32, #tpu.memory_space<vmem>>, vector<1x32x8xf32>
    %86 = vector.shape_cast %85 : vector<1x32x8xf32> to vector<32x8xf32>
    %cst_68 = arith.constant dense<0.000000e+00> : vector<16x8xf32>
    %87 = tpu.matmul %3, %86, %cst_68 {dimension_numbers = #tpu.dot_dimension_numbers<[1], [0], [0], [1], [0, 0, 1, 1], [], []>} : vector<16x32xf32>, vector<32x8xf32>, vector<16x8xf32> -> vector<16x8xf32>
    %88 = vector.shape_cast %87 : vector<16x8xf32> to vector<2x8x8xf32>
    "tpu.trace_start"() <{level = 10 : i32, message = "bqd,bkd->bqk"}> : () -> ()
    %cst_69 = arith.constant dense<0.000000e+00> : vector<2x8x8xf32>
    %89 = tpu.matmul %88, %80, %cst_69 {dimension_numbers = #tpu.dot_dimension_numbers<[2], [2], [1], [1], [0, 0, 0, 1, 1, 1], [0], [0]>} : vector<2x8x8xf32>, vector<2x8x8xf32>, vector<2x8x8xf32> -> vector<2x8x8xf32>
    "tpu.trace_stop"() : () -> ()
    %cst_70 = arith.constant 0.353553385 : f32
    %90 = vector.broadcast %cst_70 : f32 to vector<2x8x8xf32>
    %91 = arith.mulf %89, %90 : vector<2x8x8xf32>
    %cst_71 = arith.constant dense<0xFF800000> : vector<2x8xf32>
    %92 = vector.multi_reduction <maximumf>, %91, %cst_71 [2] : vector<2x8x8xf32> to vector<2x8xf32>
    %93 = vector.shape_cast %92 : vector<2x8xf32> to vector<2x8x1xf32>
    %94 = vector.broadcast %93 : vector<2x8x1xf32> to vector<2x8x8xf32>
    %95 = arith.subf %91, %94 : vector<2x8x8xf32>
    %96 = math.exp %95 : vector<2x8x8xf32>
    %cst_72 = arith.constant dense<0.000000e+00> : vector<2x8xf32>
    %97 = vector.multi_reduction <add>, %96, %cst_72 [2] : vector<2x8x8xf32> to vector<2x8xf32>
    %98 = vector.shape_cast %97 : vector<2x8xf32> to vector<2x8x1xf32>
    %99 = tpu.reciprocal %98 {approx = true} : vector<2x8x1xf32> -> vector<2x8x1xf32>
    %100 = vector.broadcast %99 : vector<2x8x1xf32> to vector<2x8x8xf32>
    %101 = arith.mulf %96, %100 : vector<2x8x8xf32>
    %c2_73 = arith.constant 2 : index
    %c0_74 = arith.constant 0 : index
    %c0_75 = arith.constant 0 : index
    %c0_76 = arith.constant 0 : index
    %102 = vector.load %arg12[%c2_73, %c0_74, %c0_75, %c0_76] : memref<4x2x8x8xf32, #tpu.memory_space<vmem>>, vector<1x2x8x8xf32>
    %103 = vector.shape_cast %102 : vector<1x2x8x8xf32> to vector<2x8x8xf32>
    %104 = vector.shape_cast %101 : vector<2x8x8xf32> to vector<1x2x8x8xf32>
    tpu.vector_store %arg12[%c2_73, %c0_74, %c0_75, %c0_76], %104 {strides = array<i32>} : memref<4x2x8x8xf32, #tpu.memory_space<vmem>>, vector<1x2x8x8xf32>,
    "tpu.trace_start"() <{level = 10 : i32, message = "bqk,bkd->bqd"}> : () -> ()
    %cst_77 = arith.constant dense<0.000000e+00> : vector<2x8x8xf32>
    %105 = tpu.matmul %101, %84, %cst_77 {dimension_numbers = #tpu.dot_dimension_numbers<[2], [1], [1], [2], [0, 0, 0, 1, 1, 2], [0], [0]>} : vector<2x8x8xf32>, vector<2x8x8xf32>, vector<2x8x8xf32> -> vector<2x8x8xf32>
    "tpu.trace_stop"() : () -> ()
    %106 = vector.shape_cast %105 : vector<2x8x8xf32> to vector<16x8xf32>
    %c2_78 = arith.constant 2 : index
    %c0_79 = arith.constant 0 : index
    %c0_80 = arith.constant 0 : index
    %107 = vector.load %arg7[%c2_78, %c0_79, %c0_80] : memref<4x8x32xf32, #tpu.memory_space<vmem>>, vector<1x8x32xf32>
    %108 = vector.shape_cast %107 : vector<1x8x32xf32> to vector<8x32xf32>
    %cst_81 = arith.constant dense<0.000000e+00> : vector<16x32xf32>
    %109 = tpu.matmul %106, %108, %cst_81 {dimension_numbers = #tpu.dot_dimension_numbers<[1], [0], [0], [1], [0, 0, 1, 1], [], []>} : vector<16x8xf32>, vector<8x32xf32>, vector<16x32xf32> -> vector<16x32xf32>
    %110 = arith.addf %76, %109 : vector<16x32xf32>
    %c3 = arith.constant 3 : index
    %c0_82 = arith.constant 0 : index
    %c0_83 = arith.constant 0 : index
    %111 = vector.load %arg3[%c3, %c0_82, %c0_83] : memref<4x32x8xf32, #tpu.memory_space<vmem>>, vector<1x32x8xf32>
    %112 = vector.shape_cast %111 : vector<1x32x8xf32> to vector<32x8xf32>
    %cst_84 = arith.constant dense<0.000000e+00> : vector<16x8xf32>
    %113 = tpu.matmul %1, %112, %cst_84 {dimension_numbers = #tpu.dot_dimension_numbers<[1], [0], [0], [1], [0, 0, 1, 1], [], []>} : vector<16x32xf32>, vector<32x8xf32>, vector<16x8xf32> -> vector<16x8xf32>
    %114 = vector.shape_cast %113 : vector<16x8xf32> to vector<2x8x8xf32>
    %c3_85 = arith.constant 3 : index
    %c0_86 = arith.constant 0 : index
    %c0_87 = arith.constant 0 : index
    %115 = vector.load %arg4[%c3_85, %c0_86, %c0_87] : memref<4x32x8xf32, #tpu.memory_space<vmem>>, vector<1x32x8xf32>
    %116 = vector.shape_cast %115 : vector<1x32x8xf32> to vector<32x8xf32>
    %cst_88 = arith.constant dense<0.000000e+00> : vector<16x8xf32>
    %117 = tpu.matmul %1, %116, %cst_88 {dimension_numbers = #tpu.dot_dimension_numbers<[1], [0], [0], [1], [0, 0, 1, 1], [], []>} : vector<16x32xf32>, vector<32x8xf32>, vector<16x8xf32> -> vector<16x8xf32>
    %118 = vector.shape_cast %117 : vector<16x8xf32> to vector<2x8x8xf32>
    %c3_89 = arith.constant 3 : index
    %c0_90 = arith.constant 0 : index
    %c0_91 = arith.constant 0 : index
    %119 = vector.load %arg5[%c3_89, %c0_90, %c0_91] : memref<4x32x8xf32, #tpu.memory_space<vmem>>, vector<1x32x8xf32>
    %120 = vector.shape_cast %119 : vector<1x32x8xf32> to vector<32x8xf32>
    %cst_92 = arith.constant dense<0.000000e+00> : vector<16x8xf32>
    %121 = tpu.matmul %3, %120, %cst_92 {dimension_numbers = #tpu.dot_dimension_numbers<[1], [0], [0], [1], [0, 0, 1, 1], [], []>} : vector<16x32xf32>, vector<32x8xf32>, vector<16x8xf32> -> vector<16x8xf32>
    %122 = vector.shape_cast %121 : vector<16x8xf32> to vector<2x8x8xf32>
    "tpu.trace_start"() <{level = 10 : i32, message = "bqd,bkd->bqk"}> : () -> ()
    %cst_93 = arith.constant dense<0.000000e+00> : vector<2x8x8xf32>
    %123 = tpu.matmul %122, %114, %cst_93 {dimension_numbers = #tpu.dot_dimension_numbers<[2], [2], [1], [1], [0, 0, 0, 1, 1, 1], [0], [0]>} : vector<2x8x8xf32>, vector<2x8x8xf32>, vector<2x8x8xf32> -> vector<2x8x8xf32>
    "tpu.trace_stop"() : () -> ()
    %cst_94 = arith.constant 0.353553385 : f32
    %124 = vector.broadcast %cst_94 : f32 to vector<2x8x8xf32>
    %125 = arith.mulf %123, %124 : vector<2x8x8xf32>
    %cst_95 = arith.constant dense<0xFF800000> : vector<2x8xf32>
    %126 = vector.multi_reduction <maximumf>, %125, %cst_95 [2] : vector<2x8x8xf32> to vector<2x8xf32>
    %127 = vector.shape_cast %126 : vector<2x8xf32> to vector<2x8x1xf32>
    %128 = vector.broadcast %127 : vector<2x8x1xf32> to vector<2x8x8xf32>
    %129 = arith.subf %125, %128 : vector<2x8x8xf32>
    %130 = math.exp %129 : vector<2x8x8xf32>
    %cst_96 = arith.constant dense<0.000000e+00> : vector<2x8xf32>
    %131 = vector.multi_reduction <add>, %130, %cst_96 [2] : vector<2x8x8xf32> to vector<2x8xf32>
    %132 = vector.shape_cast %131 : vector<2x8xf32> to vector<2x8x1xf32>
    %133 = tpu.reciprocal %132 {approx = true} : vector<2x8x1xf32> -> vector<2x8x1xf32>
    %134 = vector.broadcast %133 : vector<2x8x1xf32> to vector<2x8x8xf32>
    %135 = arith.mulf %130, %134 : vector<2x8x8xf32>
    %c3_97 = arith.constant 3 : index
    %c0_98 = arith.constant 0 : index
    %c0_99 = arith.constant 0 : index
    %c0_100 = arith.constant 0 : index
    %136 = vector.load %arg12[%c3_97, %c0_98, %c0_99, %c0_100] : memref<4x2x8x8xf32, #tpu.memory_space<vmem>>, vector<1x2x8x8xf32>
    %137 = vector.shape_cast %136 : vector<1x2x8x8xf32> to vector<2x8x8xf32>
    %138 = vector.shape_cast %135 : vector<2x8x8xf32> to vector<1x2x8x8xf32>
    tpu.vector_store %arg12[%c3_97, %c0_98, %c0_99, %c0_100], %138 {strides = array<i32>} : memref<4x2x8x8xf32, #tpu.memory_space<vmem>>, vector<1x2x8x8xf32>,
    "tpu.trace_start"() <{level = 10 : i32, message = "bqk,bkd->bqd"}> : () -> ()
    %cst_101 = arith.constant dense<0.000000e+00> : vector<2x8x8xf32>
    %139 = tpu.matmul %135, %118, %cst_101 {dimension_numbers = #tpu.dot_dimension_numbers<[2], [1], [1], [2], [0, 0, 0, 1, 1, 2], [0], [0]>} : vector<2x8x8xf32>, vector<2x8x8xf32>, vector<2x8x8xf32> -> vector<2x8x8xf32>
    "tpu.trace_stop"() : () -> ()
    %140 = vector.shape_cast %139 : vector<2x8x8xf32> to vector<16x8xf32>
    %c3_102 = arith.constant 3 : index
    %c0_103 = arith.constant 0 : index
    %c0_104 = arith.constant 0 : index
    %141 = vector.load %arg7[%c3_102, %c0_103, %c0_104] : memref<4x8x32xf32, #tpu.memory_space<vmem>>, vector<1x8x32xf32>
    %142 = vector.shape_cast %141 : vector<1x8x32xf32> to vector<8x32xf32>
    %cst_105 = arith.constant dense<0.000000e+00> : vector<16x32xf32>
    %143 = tpu.matmul %140, %142, %cst_105 {dimension_numbers = #tpu.dot_dimension_numbers<[1], [0], [0], [1], [0, 0, 1, 1], [], []>} : vector<16x8xf32>, vector<8x32xf32>, vector<16x32xf32> -> vector<16x32xf32>
    %144 = arith.addf %110, %143 : vector<16x32xf32>
    %145 = arith.addf %144, %3 : vector<16x32xf32>
    %cst_106 = arith.constant dense<0.000000e+00> : vector<16xf32>
    %146 = vector.multi_reduction <add>, %145, %cst_106 [1] : vector<16x32xf32> to vector<16xf32>
    %147 = vector.shape_cast %146 : vector<16xf32> to vector<16x1xf32>
    %cst_107 = arith.constant 3.200000e+01 : f32
    %148 = vector.broadcast %cst_107 : f32 to vector<16x1xf32>
    %149 = arith.divf %147, %148 : vector<16x1xf32>
    %150 = vector.broadcast %149 : vector<16x1xf32> to vector<16x32xf32>
    %151 = arith.subf %145, %150 : vector<16x32xf32>
    %152 = arith.mulf %151, %151 : vector<16x32xf32>
    %cst_108 = arith.constant dense<0.000000e+00> : vector<16xf32>
    %153 = vector.multi_reduction <add>, %152, %cst_108 [1] : vector<16x32xf32> to vector<16xf32>
    %154 = vector.shape_cast %153 : vector<16xf32> to vector<16x1xf32>
    %cst_109 = arith.constant 3.200000e+01 : f32
    %155 = vector.broadcast %cst_109 : f32 to vector<16x1xf32>
    %156 = arith.divf %154, %155 : vector<16x1xf32>
    %157 = vector.broadcast %149 : vector<16x1xf32> to vector<16x32xf32>
    %158 = arith.subf %145, %157 : vector<16x32xf32>
    %cst_110 = arith.constant 9.99999974E-6 : f32
    %159 = vector.broadcast %cst_110 : f32 to vector<16x1xf32>
    %160 = arith.addf %156, %159 : vector<16x1xf32>
    %161 = math.rsqrt %160 : vector<16x1xf32>
    %162 = vector.broadcast %161 : vector<16x1xf32> to vector<16x32xf32>
    %163 = arith.mulf %158, %162 : vector<16x32xf32>
    %c0_111 = arith.constant 0 : index
    %c0_112 = arith.constant 0 : index
    %164 = vector.load %arg9[%c0_111, %c0_112] : memref<1x32xf32, #tpu.memory_space<vmem>>, vector<1x32xf32>
    %165 = vector.broadcast %164 : vector<1x32xf32> to vector<16x32xf32>
    %166 = arith.mulf %163, %165 : vector<16x32xf32>
    %c0_113 = arith.constant 0 : index
    %c0_114 = arith.constant 0 : index
    %167 = vector.load %arg10[%c0_113, %c0_114] : memref<1x32xf32, #tpu.memory_space<vmem>>, vector<1x32xf32>
    %168 = vector.broadcast %167 : vector<1x32xf32> to vector<16x32xf32>
    %169 = arith.addf %166, %168 : vector<16x32xf32>
    %170 = vector.shape_cast %169 : vector<16x32xf32> to vector<2x8x32xf32>
    %c0_115 = arith.constant 0 : index
    %c0_116 = arith.constant 0 : index
    %c0_117 = arith.constant 0 : index
    %171 = vector.load %arg11[%c0_115, %c0_116, %c0_117] : memref<2x8x32xf32, #tpu.memory_space<vmem>>, vector<2x8x32xf32>
    tpu.vector_store %arg11[%c0_115, %c0_116, %c0_117], %170 {strides = array<i32>} : memref<2x8x32xf32, #tpu.memory_space<vmem>>, vector<2x8x32xf32>,
    return
  }
  func.func @transform_0(%arg0: i32) -> (i32, i32, i32) {
    %c0_i32 = arith.constant 0 : i32
    %c0_i32_0 = arith.constant 0 : i32
    %c0_i32_1 = arith.constant 0 : i32
    return %arg0, %c0_i32, %c0_i32_0 : i32, i32, i32
  }
  func.func @transform_1(%arg0: i32) -> (i32, i32, i32) {
    %c0_i32 = arith.constant 0 : i32
    %c0_i32_0 = arith.constant 0 : i32
    %c0_i32_1 = arith.constant 0 : i32
    return %arg0, %c0_i32, %c0_i32_0 : i32, i32, i32
  }
  func.func @transform_2(%arg0: i32) -> (i32, i32, i32) {
    %c0_i32 = arith.constant 0 : i32
    %c0_i32_0 = arith.constant 0 : i32
    %c0_i32_1 = arith.constant 0 : i32
    %c0_i32_2 = arith.constant 0 : i32
    return %c0_i32, %c0_i32_0, %c0_i32_1 : i32, i32, i32
  }
  func.func @transform_3(%arg0: i32) -> (i32, i32, i32) {
    %c0_i32 = arith.constant 0 : i32
    %c0_i32_0 = arith.constant 0 : i32
    %c0_i32_1 = arith.constant 0 : i32
    %c0_i32_2 = arith.constant 0 : i32
    return %c0_i32, %c0_i32_0, %c0_i32_1 : i32, i32, i32
  }
  func.func @transform_4(%arg0: i32) -> (i32, i32, i32) {
    %c0_i32 = arith.constant 0 : i32
    %c0_i32_0 = arith.constant 0 : i32
    %c0_i32_1 = arith.constant 0 : i32
    %c0_i32_2 = arith.constant 0 : i32
    return %c0_i32, %c0_i32_0, %c0_i32_1 : i32, i32, i32
  }
  func.func @transform_5(%arg0: i32) -> (i32, i32) {
    %c0_i32 = arith.constant 0 : i32
    %c0_i32_0 = arith.constant 0 : i32
    %c0_i32_1 = arith.constant 0 : i32
    return %c0_i32, %c0_i32_0 : i32, i32
  }
  func.func @transform_6(%arg0: i32) -> (i32, i32, i32) {
    %c0_i32 = arith.constant 0 : i32
    %c0_i32_0 = arith.constant 0 : i32
    %c0_i32_1 = arith.constant 0 : i32
    %c0_i32_2 = arith.constant 0 : i32
    return %c0_i32, %c0_i32_0, %c0_i32_1 : i32, i32, i32
  }
  func.func @transform_7(%arg0: i32) -> (i32, i32) {
    %c0_i32 = arith.constant 0 : i32
    %c0_i32_0 = arith.constant 0 : i32
    %c0_i32_1 = arith.constant 0 : i32
    return %c0_i32, %c0_i32_0 : i32, i32
  }
  func.func @transform_8(%arg0: i32) -> (i32, i32) {
    %c0_i32 = arith.constant 0 : i32
    %c0_i32_0 = arith.constant 0 : i32
    %c0_i32_1 = arith.constant 0 : i32
    return %c0_i32, %c0_i32_0 : i32, i32
  }
  func.func @transform_9(%arg0: i32) -> (i32, i32) {
    %c0_i32 = arith.constant 0 : i32
    %c0_i32_0 = arith.constant 0 : i32
    %c0_i32_1 = arith.constant 0 : i32
    return %c0_i32, %c0_i32_0 : i32, i32
  }
  func.func @transform_10(%arg0: i32) -> (i32, i32, i32) {
    %c0_i32 = arith.constant 0 : i32
    %c0_i32_0 = arith.constant 0 : i32
    %c0_i32_1 = arith.constant 0 : i32
    return %arg0, %c0_i32, %c0_i32_0 : i32, i32, i32
  }
  func.func @transform_11(%arg0: i32) -> (i32, i32, i32, i32) {
    %c0_i32 = arith.constant 0 : i32
    %c0_i32_0 = arith.constant 0 : i32
    %c0_i32_1 = arith.constant 0 : i32
    %c0_i32_2 = arith.constant 0 : i32
    return %c0_i32, %arg0, %c0_i32_0, %c0_i32_1 : i32, i32, i32, i32
  }
}

</mosaic_0001>

<llo_original>
// kernel: tpu_custom_call.1
$region0: #{tpu_custom_call.1}
  #allocation0 [shape = 'u32[]', space=smem, size = 0x4, offset = 0x4, fixed_abs, tag = 'smem constant byte address 0x4 - core index']
  #allocation1 [shape = 'u32[144,128]{1,0:T(1,128)}', space=vmem, size = 0x12000, scoped, tag = 'internal scratch']
  %s0 = inlined_call_operand.vmem [shape: f32[2,8,32], index: 0, kind: input, shape index: {}]
  %s1 = inlined_call_operand.vmem [shape: f32[2,8,32], index: 1, kind: input, shape index: {}]
  %s2 = inlined_call_operand.vmem [shape: f32[4,32,8], index: 2, kind: input, shape index: {}]
  %s3 = inlined_call_operand.vmem [shape: f32[4,32,8], index: 3, kind: input, shape index: {}]
  %s4 = inlined_call_operand.vmem [shape: f32[4,32,8], index: 4, kind: input, shape index: {}]
  %s5 = inlined_call_operand.vmem [shape: f32[32,32], index: 5, kind: input, shape index: {}]
  %s6 = inlined_call_operand.vmem [shape: f32[4,8,32], index: 6, kind: input, shape index: {}]
  %s7 = inlined_call_operand.vmem [shape: f32[1,32], index: 7, kind: input, shape index: {}]
  %s8 = inlined_call_operand.vmem [shape: f32[1,32], index: 8, kind: input, shape index: {}]
  %s9 = inlined_call_operand.vmem [shape: f32[1,32], index: 9, kind: input, shape index: {}]
  %s10 = inlined_call_operand.hbm [shape: f32[2,8,32], index: 10, kind: output, shape index: {0}]
  %s11 = inlined_call_operand.hbm [shape: f32[4,2,8,8], index: 11, kind: output, shape index: {1}]
  %12 = xla_tuple %s10, %s11
  %s13 = sld [smem:[#allocation0]]
  $region58: #{tpu_custom_call.1} parent=0
    _
  %s15 = ssub.s32 1, %s13
  %s16 = scalar_select 0, %s15, %s13
  $region1: #{tpu_custom_call.1} parent=0
    #allocation2 [shape = 'u8[8192]{0}', space=vmem, size = 0x2000, scoped, tag = 'output window, operand 0, single buffered']
    #allocation3 [shape = 's32[1]{0}', space=sflag, size = 0x4, scoped, tag = 'scoped memory for tpu_custom_call.1']
    #allocation4 [shape = 'u8[32768]{0}', space=vmem, size = 0x8000, scoped, tag = 'output window, operand 1, single buffered']
    #allocation5 [shape = 's32[1]{0}', space=sflag, size = 0x4, scoped, tag = 'scoped memory for tpu_custom_call.1']
    %17 = vsyncpa [#allocation3], 0
    %18 = vsyncpa [#allocation5], 0
    // Predicated region
    $region2: #{tpu_custom_call.1} parent=1 // pred_check
      _
    $region3: #{tpu_custom_call.1} parent=1 // pred_check_branch
      %20 = sbr.rel (0) target = $region5
    $region4: #{tpu_custom_call.1} parent=1 // pred_region
      _
    $region5: #{tpu_custom_call.1} parent=1 // pred_fallthru
      _
    // Predicated region
    $region6: #{tpu_custom_call.1} parent=1 // pred_check
      _
    $region7: #{tpu_custom_call.1} parent=1 // pred_check_branch
      %22 = sbr.rel (0) target = $region9
    $region8: #{tpu_custom_call.1} parent=1 // pred_region
      _
    $region9: #{tpu_custom_call.1} parent=1 // pred_fallthru
      _
    // Predicated region
    $region10: #{tpu_custom_call.1} parent=1 // pred_check
      _
    $region11: #{tpu_custom_call.1} parent=1 // pred_check_branch
      %24 = sbr.rel (0) target = $region13
    $region12: #{tpu_custom_call.1} parent=1 // pred_region
      _
    $region13: #{tpu_custom_call.1} parent=1 // pred_fallthru
      _
    // Predicated region
    $region14: #{tpu_custom_call.1} parent=1 // pred_check
      _
    $region15: #{tpu_custom_call.1} parent=1 // pred_check_branch
      %26 = sbr.rel (0) target = $region17
    $region16: #{tpu_custom_call.1} parent=1 // pred_region
      _
    $region17: #{tpu_custom_call.1} parent=1 // pred_fallthru
      _
    // Predicated region
    $region18: #{tpu_custom_call.1} parent=1 // pred_check
      _
    $region19: #{tpu_custom_call.1} parent=1 // pred_check_branch
      %28 = sbr.rel (0) target = $region21
    $region20: #{tpu_custom_call.1} parent=1 // pred_region
      _
    $region21: #{tpu_custom_call.1} parent=1 // pred_fallthru
      _
    // Predicated region
    $region22: #{tpu_custom_call.1} parent=1 // pred_check
      _
    $region23: #{tpu_custom_call.1} parent=1 // pred_check_branch
      %30 = sbr.rel (0) target = $region25
    $region24: #{tpu_custom_call.1} parent=1 // pred_region
      _
    $region25: #{tpu_custom_call.1} parent=1 // pred_fallthru
      _
    // Predicated region
    $region26: #{tpu_custom_call.1} parent=1 // pred_check
      _
    $region27: #{tpu_custom_call.1} parent=1 // pred_check_branch
      %32 = sbr.rel (0) target = $region29
    $region28: #{tpu_custom_call.1} parent=1 // pred_region
      _
    $region29: #{tpu_custom_call.1} parent=1 // pred_fallthru
      _
    // Predicated region
    $region30: #{tpu_custom_call.1} parent=1 // pred_check
      _
    $region31: #{tpu_custom_call.1} parent=1 // pred_check_branch
      %34 = sbr.rel (0) target = $region33
    $region32: #{tpu_custom_call.1} parent=1 // pred_region
      _
    $region33: #{tpu_custom_call.1} parent=1 // pred_fallthru
      _
    // Predicated region
    $region34: #{tpu_custom_call.1} parent=1 // pred_check
      _
    $region35: #{tpu_custom_call.1} parent=1 // pred_check_branch
      %36 = sbr.rel (0) target = $region37
    $region36: #{tpu_custom_call.1} parent=1 // pred_region
      _
    $region37: #{tpu_custom_call.1} parent=1 // pred_fallthru
      _
    // Predicated region
    $region38: #{tpu_custom_call.1} parent=1 // pred_check
      _
    $region39: #{tpu_custom_call.1} parent=1 // pred_check_branch
      %38 = sbr.rel (0) target = $region41
    $region40: #{tpu_custom_call.1} parent=1 // pred_region
      _
    $region41: #{tpu_custom_call.1} parent=1 // pred_fallthru
      _
    %v39 = vld [vmem:[%s0] sm:$0xff]
    %v40 = vld [vmem:[%s0 + $0x8] sm:$0xff]
    %v41 = vld [vmem:[%s1] sm:$0xff]
    %v42 = vld [vmem:[%s1 + $0x8] sm:$0xff]
    %v43 = vld [vmem:[%s5] sm:$0xff]
    %v44 = vld [vmem:[%s5 + $0x8] sm:$0xff]
    %v45 = vld [vmem:[%s5 + $0x10] sm:$0xff]
    %v46 = vld [vmem:[%s5 + $0x18] sm:$0xff]
    %v47 = vld [vmem:[%s7] sm:$0x1]
    %v49 = vlaneseq
    %v50 = vshrl.u32 %v49, 7
    %v51 = vsub.s32 0, %v50
    %v52 = vrot.slane %v47, %v51
    %vm54 = vcmask 261120
    %v56 = vsel %vm54, %v41, 0
    %v59 = vsel %vm54, %v42, 0
    %61 = vmatprep.subr.mxu0 0.0
    %62 = vmatpush1.msra.mxu0 0.0
    %63 = vmatprep.subr.mxu0 0.0
    %64 = vmatpush1.msra.mxu0 0.0
    %65 = vmatprep.subr.mxu0 0.0
    %66 = vmatpush1.msra.mxu0 0.0
    %67 = vmatprep.subr.mxu0 0.0
    %68 = vmatpush1.msra.mxu0 0.0
    %69 = vmatprep.subr.mxu0 0.0
    %70 = vmatpush1.msra.mxu0 0.0
    %71 = vmatprep.subr.mxu0 0.0
    %72 = vmatpush1.msra.mxu0 0.0
    %73 = vmatprep.subr.mxu0 0.0
    %74 = vmatpush1.msra.mxu0 0.0
    %75 = vmatprep.subr.mxu0 0.0
    %76 = vmatpush1.msra.mxu0 0.0
    %77 = vmatprep.subr.mxu0 0.0
    %78 = vmatpush1.msra.mxu0 0.0
    %79 = vmatprep.subr.mxu0 0.0
    %80 = vmatpush1.msra.mxu0 0.0
    %81 = vmatprep.subr.mxu0 0.0
    %82 = vmatpush1.msra.mxu0 0.0
    %83 = vmatprep.subr.mxu0 0.0
    %84 = vmatpush1.msra.mxu0 0.0
    %85 = vmatprep.subr.mxu0 0.0
    %86 = vmatpush1.msra.mxu0 %v46
    %87 = vmatprep.subr.mxu0 0.0
    %88 = vmatpush1.msra.mxu0 %v45
    %89 = vmatprep.subr.mxu0 0.0
    %90 = vmatpush1.msra.mxu0 %v44
    %91 = vmatprep.subr.mxu0 0.0
    %92 = vmatpush1.msra.mxu0 %v43
    %93 = vmatprep.subr.mxu0 0.0
    %94 = vmatpush2.msra.mxu0 0.0
    %95 = vmatprep.subr.mxu0 0.0
    %96 = vmatpush2.msra.mxu0 0.0
    %97 = vmatprep.subr.mxu0 0.0
    %98 = vmatpush2.msra.mxu0 0.0
    %99 = vmatprep.subr.mxu0 0.0
    %100 = vmatpush2.msra.mxu0 0.0
    %101 = vmatprep.subr.mxu0 0.0
    %102 = vmatpush2.msra.mxu0 0.0
    %103 = vmatprep.subr.mxu0 0.0
    %104 = vmatpush2.msra.mxu0 0.0
    %105 = vmatprep.subr.mxu0 0.0
    %106 = vmatpush2.msra.mxu0 0.0
    %107 = vmatprep.subr.mxu0 0.0
    %108 = vmatpush2.msra.mxu0 0.0
    %109 = vmatprep.subr.mxu0 0.0
    %110 = vmatpush2.msra.mxu0 0.0
    %111 = vmatprep.subr.mxu0 0.0
    %112 = vmatpush2.msra.mxu0 0.0
    %113 = vmatprep.subr.mxu0 0.0
    %114 = vmatpush2.msra.mxu0 0.0
    %115 = vmatprep.subr.mxu0 0.0
    %116 = vmatpush2.msra.mxu0 0.0
    %117 = vmatprep.subr.mxu0 0.0
    %118 = vmatpush2.msra.mxu0 0.0
    %119 = vmatprep.subr.mxu0 0.0
    %120 = vmatpush2.msra.mxu0 0.0
    %121 = vmatprep.subr.mxu0 0.0
    %122 = vmatpush2.msra.mxu0 0.0
    %123 = vmatprep.subr.mxu0 0.0
    %124 = vmatpush2.msra.mxu0 0.0
    %125 = vmatprep.mubr.f32.mxu0 0.0
    %126 = vmatmul.mubr.f32.gmra.mxu0 %v56
    %v127 = vpop.f32.mrf.mxu0
    %v128 = vadd.f32 %v52, %v127
    %v129 = vpop.f32.mrf.mxu0
    %130 = vmatprep.mubr.f32.mxu0 0.0
    %131 = vmatmul.mubr.f32.gmra.mxu0 %v59
    %v132 = vpop.f32.mrf.mxu0
    %v133 = vadd.f32 %v52, %v132
    %v134 = vpop.f32.mrf.mxu0
    %135 = vdwg.mxu0
    %v136 = vld [vmem:[%s2] sm:$0xff]
    %v137 = vld [vmem:[%s2 + $0x8] sm:$0xff]
    %v138 = vld [vmem:[%s2 + $0x10] sm:$0xff]
    %v139 = vld [vmem:[%s2 + $0x18] sm:$0xff]
    %v141 = vsel %vm54, %v39, 0
    %v144 = vsel %vm54, %v40, 0
    %146 = vmatprep.subr.mxu0 0.0
    %147 = vmatpush1.msra.mxu0 0.0
    %148 = vmatprep.subr.mxu0 0.0
    %149 = vmatpush1.msra.mxu0 0.0
    %150 = vmatprep.subr.mxu0 0.0
    %151 = vmatpush1.msra.mxu0 0.0
    %152 = vmatprep.subr.mxu0 0.0
    %153 = vmatpush1.msra.mxu0 0.0
    %154 = vmatprep.subr.mxu0 0.0
    %155 = vmatpush1.msra.mxu0 0.0
    %156 = vmatprep.subr.mxu0 0.0
    %157 = vmatpush1.msra.mxu0 0.0
    %158 = vmatprep.subr.mxu0 0.0
    %159 = vmatpush1.msra.mxu0 0.0
    %160 = vmatprep.subr.mxu0 0.0
    %161 = vmatpush1.msra.mxu0 0.0
    %162 = vmatprep.subr.mxu0 0.0
    %163 = vmatpush1.msra.mxu0 0.0
    %164 = vmatprep.subr.mxu0 0.0
    %165 = vmatpush1.msra.mxu0 0.0
    %166 = vmatprep.subr.mxu0 0.0
    %167 = vmatpush1.msra.mxu0 0.0
    %168 = vmatprep.subr.mxu0 0.0
    %169 = vmatpush1.msra.mxu0 0.0
    %170 = vmatprep.subr.mxu0 0.0
    %171 = vmatpush1.msra.mxu0 %v139
    %172 = vmatprep.subr.mxu0 0.0
    %173 = vmatpush1.msra.mxu0 %v138
    %174 = vmatprep.subr.mxu0 0.0
    %175 = vmatpush1.msra.mxu0 %v137
    %176 = vmatprep.subr.mxu0 0.0
    %177 = vmatpush1.msra.mxu0 %v136
    %178 = vmatprep.subr.mxu0 0.0
    %179 = vmatpush2.msra.mxu0 0.0
    %180 = vmatprep.subr.mxu0 0.0
    %181 = vmatpush2.msra.mxu0 0.0
    %182 = vmatprep.subr.mxu0 0.0
    %183 = vmatpush2.msra.mxu0 0.0
    %184 = vmatprep.subr.mxu0 0.0
    %185 = vmatpush2.msra.mxu0 0.0
    %186 = vmatprep.subr.mxu0 0.0
    %187 = vmatpush2.msra.mxu0 0.0
    %188 = vmatprep.subr.mxu0 0.0
    %189 = vmatpush2.msra.mxu0 0.0
    %190 = vmatprep.subr.mxu0 0.0
    %191 = vmatpush2.msra.mxu0 0.0
    %192 = vmatprep.subr.mxu0 0.0
    %193 = vmatpush2.msra.mxu0 0.0
    %194 = vmatprep.subr.mxu0 0.0
    %195 = vmatpush2.msra.mxu0 0.0
    %196 = vmatprep.subr.mxu0 0.0
    %197 = vmatpush2.msra.mxu0 0.0
    %198 = vmatprep.subr.mxu0 0.0
    %199 = vmatpush2.msra.mxu0 0.0
    %200 = vmatprep.subr.mxu0 0.0
    %201 = vmatpush2.msra.mxu0 0.0
    %202 = vmatprep.subr.mxu0 0.0
    %203 = vmatpush2.msra.mxu0 0.0
    %204 = vmatprep.subr.mxu0 0.0
    %205 = vmatpush2.msra.mxu0 0.0
    %206 = vmatprep.subr.mxu0 0.0
    %207 = vmatpush2.msra.mxu0 0.0
    %208 = vmatprep.subr.mxu0 0.0
    %209 = vmatpush2.msra.mxu0 0.0
    %210 = vmatprep.mubr.f32.mxu0 0.0
    %211 = vmatmul.mubr.f32.gmra.mxu0 %v141
    %v212 = vpop.f32.mrf.mxu0
    %v213 = vadd.f32 0.0, %v212
    %v214 = vpop.f32.mrf.mxu0
    %215 = vmatprep.mubr.f32.mxu0 0.0
    %216 = vmatmul.mubr.f32.gmra.mxu0 %v144
    %v217 = vpop.f32.mrf.mxu0
    %v218 = vadd.f32 0.0, %v217
    %v219 = vpop.f32.mrf.mxu0
    %220 = vdwg.mxu0
    %v221 = vld [vmem:[%s3] sm:$0xff]
    %v222 = vld [vmem:[%s3 + $0x8] sm:$0xff]
    %v223 = vld [vmem:[%s3 + $0x10] sm:$0xff]
    %v224 = vld [vmem:[%s3 + $0x18] sm:$0xff]
    %225 = vmatprep.subr.mxu0 0.0
    %226 = vmatpush1.msra.mxu0 0.0
    %227 = vmatprep.subr.mxu0 0.0
    %228 = vmatpush1.msra.mxu0 0.0
    %229 = vmatprep.subr.mxu0 0.0
    %230 = vmatpush1.msra.mxu0 0.0
    %231 = vmatprep.subr.mxu0 0.0
    %232 = vmatpush1.msra.mxu0 0.0
    %233 = vmatprep.subr.mxu0 0.0
    %234 = vmatpush1.msra.mxu0 0.0
    %235 = vmatprep.subr.mxu0 0.0
    %236 = vmatpush1.msra.mxu0 0.0
    %237 = vmatprep.subr.mxu0 0.0
    %238 = vmatpush1.msra.mxu0 0.0
    %239 = vmatprep.subr.mxu0 0.0
    %240 = vmatpush1.msra.mxu0 0.0
    %241 = vmatprep.subr.mxu0 0.0
    %242 = vmatpush1.msra.mxu0 0.0
    %243 = vmatprep.subr.mxu0 0.0
    %244 = vmatpush1.msra.mxu0 0.0
    %245 = vmatprep.subr.mxu0 0.0
    %246 = vmatpush1.msra.mxu0 0.0
    %247 = vmatprep.subr.mxu0 0.0
    %248 = vmatpush1.msra.mxu0 0.0
    %249 = vmatprep.subr.mxu0 0.0
    %250 = vmatpush1.msra.mxu0 %v224
    %251 = vmatprep.subr.mxu0 0.0
    %252 = vmatpush1.msra.mxu0 %v223
    %253 = vmatprep.subr.mxu0 0.0
    %254 = vmatpush1.msra.mxu0 %v222
    %255 = vmatprep.subr.mxu0 0.0
    %256 = vmatpush1.msra.mxu0 %v221
    %257 = vmatprep.subr.mxu0 0.0
    %258 = vmatpush2.msra.mxu0 0.0
    %259 = vmatprep.subr.mxu0 0.0
    %260 = vmatpush2.msra.mxu0 0.0
    %261 = vmatprep.subr.mxu0 0.0
    %262 = vmatpush2.msra.mxu0 0.0
    %263 = vmatprep.subr.mxu0 0.0
    %264 = vmatpush2.msra.mxu0 0.0
    %265 = vmatprep.subr.mxu0 0.0
    %266 = vmatpush2.msra.mxu0 0.0
    %267 = vmatprep.subr.mxu0 0.0
    %268 = vmatpush2.msra.mxu0 0.0
    %269 = vmatprep.subr.mxu0 0.0
    %270 = vmatpush2.msra.mxu0 0.0
    %271 = vmatprep.subr.mxu0 0.0
    %272 = vmatpush2.msra.mxu0 0.0
    %273 = vmatprep.subr.mxu0 0.0
    %274 = vmatpush2.msra.mxu0 0.0
    %275 = vmatprep.subr.mxu0 0.0
    %276 = vmatpush2.msra.mxu0 0.0
    %277 = vmatprep.subr.mxu0 0.0
    %278 = vmatpush2.msra.mxu0 0.0
    %279 = vmatprep.subr.mxu0 0.0
    %280 = vmatpush2.msra.mxu0 0.0
    %281 = vmatprep.subr.mxu0 0.0
    %282 = vmatpush2.msra.mxu0 0.0
    %283 = vmatprep.subr.mxu0 0.0
    %284 = vmatpush2.msra.mxu0 0.0
    %285 = vmatprep.subr.mxu0 0.0
    %286 = vmatpush2.msra.mxu0 0.0
    %287 = vmatprep.subr.mxu0 0.0
    %288 = vmatpush2.msra.mxu0 0.0
    %289 = vmatprep.mubr.f32.mxu0 0.0
    %290 = vmatmul.mubr.f32.gmra.mxu0 %v141
    %v291 = vpop.f32.mrf.mxu0
    %v292 = vadd.f32 0.0, %v291
    %v293 = vpop.f32.mrf.mxu0
    %294 = vmatprep.mubr.f32.mxu0 0.0
    %295 = vmatmul.mubr.f32.gmra.mxu0 %v144
    %v296 = vpop.f32.mrf.mxu0
    %v297 = vadd.f32 0.0, %v296
    %v298 = vpop.f32.mrf.mxu0
    %299 = vdwg.mxu0
    %v300 = vld [vmem:[%s4] sm:$0xff]
    %v301 = vld [vmem:[%s4 + $0x8] sm:$0xff]
    %v302 = vld [vmem:[%s4 + $0x10] sm:$0xff]
    %v303 = vld [vmem:[%s4 + $0x18] sm:$0xff]
    %304 = vmatprep.subr.mxu0 0.0
    %305 = vmatpush1.msra.mxu0 0.0
    %306 = vmatprep.subr.mxu0 0.0
    %307 = vmatpush1.msra.mxu0 0.0
    %308 = vmatprep.subr.mxu0 0.0
    %309 = vmatpush1.msra.mxu0 0.0
    %310 = vmatprep.subr.mxu0 0.0
    %311 = vmatpush1.msra.mxu0 0.0
    %312 = vmatprep.subr.mxu0 0.0
    %313 = vmatpush1.msra.mxu0 0.0
    %314 = vmatprep.subr.mxu0 0.0
    %315 = vmatpush1.msra.mxu0 0.0
    %316 = vmatprep.subr.mxu0 0.0
    %317 = vmatpush1.msra.mxu0 0.0
    %318 = vmatprep.subr.mxu0 0.0
    %319 = vmatpush1.msra.mxu0 0.0
    %320 = vmatprep.subr.mxu0 0.0
    %321 = vmatpush1.msra.mxu0 0.0
    %322 = vmatprep.subr.mxu0 0.0
    %323 = vmatpush1.msra.mxu0 0.0
    %324 = vmatprep.subr.mxu0 0.0
    %325 = vmatpush1.msra.mxu0 0.0
    %326 = vmatprep.subr.mxu0 0.0
    %327 = vmatpush1.msra.mxu0 0.0
    %328 = vmatprep.subr.mxu0 0.0
    %329 = vmatpush1.msra.mxu0 %v303
    %330 = vmatprep.subr.mxu0 0.0
    %331 = vmatpush1.msra.mxu0 %v302
    %332 = vmatprep.subr.mxu0 0.0
    %333 = vmatpush1.msra.mxu0 %v301
    %334 = vmatprep.subr.mxu0 0.0
    %335 = vmatpush1.msra.mxu0 %v300
    %336 = vmatprep.subr.mxu0 0.0
    %337 = vmatpush2.msra.mxu0 0.0
    %338 = vmatprep.subr.mxu0 0.0
    %339 = vmatpush2.msra.mxu0 0.0
    %340 = vmatprep.subr.mxu0 0.0
    %341 = vmatpush2.msra.mxu0 0.0
    %342 = vmatprep.subr.mxu0 0.0
    %343 = vmatpush2.msra.mxu0 0.0
    %344 = vmatprep.subr.mxu0 0.0
    %345 = vmatpush2.msra.mxu0 0.0
    %346 = vmatprep.subr.mxu0 0.0
    %347 = vmatpush2.msra.mxu0 0.0
    %348 = vmatprep.subr.mxu0 0.0
    %349 = vmatpush2.msra.mxu0 0.0
    %350 = vmatprep.subr.mxu0 0.0
    %351 = vmatpush2.msra.mxu0 0.0
    %352 = vmatprep.subr.mxu0 0.0
    %353 = vmatpush2.msra.mxu0 0.0
    %354 = vmatprep.subr.mxu0 0.0
    %355 = vmatpush2.msra.mxu0 0.0
    %356 = vmatprep.subr.mxu0 0.0
    %357 = vmatpush2.msra.mxu0 0.0
    %358 = vmatprep.subr.mxu0 0.0
    %359 = vmatpush2.msra.mxu0 0.0
    %360 = vmatprep.subr.mxu0 0.0
    %361 = vmatpush2.msra.mxu0 0.0
    %362 = vmatprep.subr.mxu0 0.0
    %363 = vmatpush2.msra.mxu0 0.0
    %364 = vmatprep.subr.mxu0 0.0
    %365 = vmatpush2.msra.mxu0 0.0
    %366 = vmatprep.subr.mxu0 0.0
    %367 = vmatpush2.msra.mxu0 0.0
    %368 = vmatprep.mubr.f32.mxu0 0.0
    %369 = vmatmul.mubr.f32.gmra.mxu0 %v56
    %v370 = vpop.f32.mrf.mxu0
    %v371 = vadd.f32 0.0, %v370
    %v372 = vpop.f32.mrf.mxu0
    %373 = vmatprep.mubr.f32.mxu0 0.0
    %374 = vmatmul.mubr.f32.gmra.mxu0 %v59
    %v375 = vpop.f32.mrf.mxu0
    %v376 = vadd.f32 0.0, %v375
    %v377 = vpop.f32.mrf.mxu0
    %378 = vdwg.mxu0
    %vm379 = vcmask 64512
    %v381 = vsel %vm379, %v371, 0
    %v384 = vsel %vm379, %v213, 0
    %386 = vmatprep.subr.mxu0 0.0
    %387 = vmatpush1.xpose.msra.mxu0 0.0
    %388 = vmatprep.subr.mxu0 0.0
    %389 = vmatpush1.xpose.msra.mxu0 0.0
    %390 = vmatprep.subr.mxu0 0.0
    %391 = vmatpush1.xpose.msra.mxu0 0.0
    %392 = vmatprep.subr.mxu0 0.0
    %393 = vmatpush1.xpose.msra.mxu0 0.0
    %394 = vmatprep.subr.mxu0 0.0
    %395 = vmatpush1.xpose.msra.mxu0 0.0
    %396 = vmatprep.subr.mxu0 0.0
    %397 = vmatpush1.xpose.msra.mxu0 0.0
    %398 = vmatprep.subr.mxu0 0.0
    %399 = vmatpush1.xpose.msra.mxu0 0.0
    %400 = vmatprep.subr.mxu0 0.0
    %401 = vmatpush1.xpose.msra.mxu0 0.0
    %402 = vmatprep.subr.mxu0 0.0
    %403 = vmatpush1.xpose.msra.mxu0 0.0
    %404 = vmatprep.subr.mxu0 0.0
    %405 = vmatpush1.xpose.msra.mxu0 0.0
    %406 = vmatprep.subr.mxu0 0.0
    %407 = vmatpush1.xpose.msra.mxu0 0.0
    %408 = vmatprep.subr.mxu0 0.0
    %409 = vmatpush1.xpose.msra.mxu0 0.0
    %410 = vmatprep.subr.mxu0 0.0
    %411 = vmatpush1.xpose.msra.mxu0 0.0
    %412 = vmatprep.subr.mxu0 0.0
    %413 = vmatpush1.xpose.msra.mxu0 0.0
    %414 = vmatprep.subr.mxu0 0.0
    %415 = vmatpush1.xpose.msra.mxu0 0.0
    %416 = vmatprep.subr.mxu0 0.0
    %417 = vmatpush1.xpose.msra.mxu0 %v384
    %418 = vmatprep.subr.mxu0 0.0
    %419 = vmatpush2.xpose.msra.mxu0 0.0
    %420 = vmatprep.subr.mxu0 0.0
    %421 = vmatpush2.xpose.msra.mxu0 0.0
    %422 = vmatprep.subr.mxu0 0.0
    %423 = vmatpush2.xpose.msra.mxu0 0.0
    %424 = vmatprep.subr.mxu0 0.0
    %425 = vmatpush2.xpose.msra.mxu0 0.0
    %426 = vmatprep.subr.mxu0 0.0
    %427 = vmatpush2.xpose.msra.mxu0 0.0
    %428 = vmatprep.subr.mxu0 0.0
    %429 = vmatpush2.xpose.msra.mxu0 0.0
    %430 = vmatprep.subr.mxu0 0.0
    %431 = vmatpush2.xpose.msra.mxu0 0.0
    %432 = vmatprep.subr.mxu0 0.0
    %433 = vmatpush2.xpose.msra.mxu0 0.0
    %434 = vmatprep.subr.mxu0 0.0
    %435 = vmatpush2.xpose.msra.mxu0 0.0
    %436 = vmatprep.subr.mxu0 0.0
    %437 = vmatpush2.xpose.msra.mxu0 0.0
    %438 = vmatprep.subr.mxu0 0.0
    %439 = vmatpush2.xpose.msra.mxu0 0.0
    %440 = vmatprep.subr.mxu0 0.0
    %441 = vmatpush2.xpose.msra.mxu0 0.0
    %442 = vmatprep.subr.mxu0 0.0
    %443 = vmatpush2.xpose.msra.mxu0 0.0
    %444 = vmatprep.subr.mxu0 0.0
    %445 = vmatpush2.xpose.msra.mxu0 0.0
    %446 = vmatprep.subr.mxu0 0.0
    %447 = vmatpush2.xpose.msra.mxu0 0.0
    %448 = vmatprep.subr.mxu0 0.0
    %449 = vmatpush2.xpose.msra.mxu0 0.0
    %450 = vmatprep.mubr.f32.mxu0 0.0
    %451 = vmatmul.mubr.f32.gmra.mxu0 %v381
    %v452 = vpop.f32.mrf.mxu0
    %v453 = vadd.f32 0.0, %v452
    %v454 = vpop.f32.mrf.mxu0
    %455 = vdwg.mxu0
    %v457 = vsel %vm379, %v376, 0
    %v460 = vsel %vm379, %v218, 0
    %462 = vmatprep.subr.mxu0 0.0
    %463 = vmatpush1.xpose.msra.mxu0 0.0
    %464 = vmatprep.subr.mxu0 0.0
    %465 = vmatpush1.xpose.msra.mxu0 0.0
    %466 = vmatprep.subr.mxu0 0.0
    %467 = vmatpush1.xpose.msra.mxu0 0.0
    %468 = vmatprep.subr.mxu0 0.0
    %469 = vmatpush1.xpose.msra.mxu0 0.0
    %470 = vmatprep.subr.mxu0 0.0
    %471 = vmatpush1.xpose.msra.mxu0 0.0
    %472 = vmatprep.subr.mxu0 0.0
    %473 = vmatpush1.xpose.msra.mxu0 0.0
    %474 = vmatprep.subr.mxu0 0.0
    %475 = vmatpush1.xpose.msra.mxu0 0.0
    %476 = vmatprep.subr.mxu0 0.0
    %477 = vmatpush1.xpose.msra.mxu0 0.0
    %478 = vmatprep.subr.mxu0 0.0
    %479 = vmatpush1.xpose.msra.mxu0 0.0
    %480 = vmatprep.subr.mxu0 0.0
    %481 = vmatpush1.xpose.msra.mxu0 0.0
    %482 = vmatprep.subr.mxu0 0.0
    %483 = vmatpush1.xpose.msra.mxu0 0.0
    %484 = vmatprep.subr.mxu0 0.0
    %485 = vmatpush1.xpose.msra.mxu0 0.0
    %486 = vmatprep.subr.mxu0 0.0
    %487 = vmatpush1.xpose.msra.mxu0 0.0
    %488 = vmatprep.subr.mxu0 0.0
    %489 = vmatpush1.xpose.msra.mxu0 0.0
    %490 = vmatprep.subr.mxu0 0.0
    %491 = vmatpush1.xpose.msra.mxu0 0.0
    %492 = vmatprep.subr.mxu0 0.0
    %493 = vmatpush1.xpose.msra.mxu0 %v460
    %494 = vmatprep.subr.mxu0 0.0
    %495 = vmatpush2.xpose.msra.mxu0 0.0
    %496 = vmatprep.subr.mxu0 0.0
    %497 = vmatpush2.xpose.msra.mxu0 0.0
    %498 = vmatprep.subr.mxu0 0.0
    %499 = vmatpush2.xpose.msra.mxu0 0.0
    %500 = vmatprep.subr.mxu0 0.0
    %501 = vmatpush2.xpose.msra.mxu0 0.0
    %502 = vmatprep.subr.mxu0 0.0
    %503 = vmatpush2.xpose.msra.mxu0 0.0
    %504 = vmatprep.subr.mxu0 0.0
    %505 = vmatpush2.xpose.msra.mxu0 0.0
    %506 = vmatprep.subr.mxu0 0.0
    %507 = vmatpush2.xpose.msra.mxu0 0.0
    %508 = vmatprep.subr.mxu0 0.0
    %509 = vmatpush2.xpose.msra.mxu0 0.0
    %510 = vmatprep.subr.mxu0 0.0
    %511 = vmatpush2.xpose.msra.mxu0 0.0
    %512 = vmatprep.subr.mxu0 0.0
    %513 = vmatpush2.xpose.msra.mxu0 0.0
    %514 = vmatprep.subr.mxu0 0.0
    %515 = vmatpush2.xpose.msra.mxu0 0.0
    %516 = vmatprep.subr.mxu0 0.0
    %517 = vmatpush2.xpose.msra.mxu0 0.0
    %518 = vmatprep.subr.mxu0 0.0
    %519 = vmatpush2.xpose.msra.mxu0 0.0
    %520 = vmatprep.subr.mxu0 0.0
    %521 = vmatpush2.xpose.msra.mxu0 0.0
    %522 = vmatprep.subr.mxu0 0.0
    %523 = vmatpush2.xpose.msra.mxu0 0.0
    %524 = vmatprep.subr.mxu0 0.0
    %525 = vmatpush2.xpose.msra.mxu0 0.0
    %526 = vmatprep.mubr.f32.mxu0 0.0
    %527 = vmatmul.mubr.f32.gmra.mxu0 %v457
    %v528 = vpop.f32.mrf.mxu0
    %v529 = vadd.f32 0.0, %v528
    %v530 = vpop.f32.mrf.mxu0
    %531 = vdwg.mxu0
    %v532 = vmul.f32 %v453, 0.35355338
    %v533 = vmul.f32 %v529, 0.35355338
    %v534 = vsel %vm379, %v532, -inf
    %535 = vmax.xlane.f32.xlu0 %v534
    %v536 = vpop.xlane.xlu0 %535
    %v537 = vsel %vm379, %v533, -inf
    %538 = vmax.xlane.f32.xlu0 %v537
    %v539 = vpop.xlane.xlu0 %538
    %v540 = vsub.f32 %v532, %v536
    %v541 = vsub.f32 %v533, %v539
    %v542 = vmul.f32 %v540, 1.442695
    %v543 = vpow.pop %v542
    %v544 = vmul.f32 %v541, 1.442695
    %v545 = vpow.pop %v544
    %v546 = vsel %vm379, %v543, 0.0
    %547 = vadd.xlane.f32.xlu0 %v546
    %v548 = vpop.xlane.xlu0 %547
    %v549 = vsel %vm379, %v545, 0.0
    %550 = vadd.xlane.f32.xlu0 %v549
    %v551 = vpop.xlane.xlu0 %550
    %v552 = vrcp.pop %v548
    %v553 = vrcp.pop %v551
    %v554 = vmul.f32 %v543, %v552
    %v555 = vmul.f32 %v545, %v553
    %556 = vst.msk [vmem:[#allocation4] sm:$0xff] %vm379, %v554
    %557 = vst.msk [vmem:[#allocation4 + $0x8] sm:$0xff] %vm379, %v555
    %v559 = vsel %vm379, %v554, 0
    %561 = vmatprep.subr.mxu0 0.0
    %562 = vmatpush1.msra.mxu0 0.0
    %563 = vmatprep.subr.mxu0 0.0
    %564 = vmatpush1.msra.mxu0 0.0
    %565 = vmatprep.subr.mxu0 0.0
    %566 = vmatpush1.msra.mxu0 0.0
    %567 = vmatprep.subr.mxu0 0.0
    %568 = vmatpush1.msra.mxu0 0.0
    %569 = vmatprep.subr.mxu0 0.0
    %570 = vmatpush1.msra.mxu0 0.0
    %571 = vmatprep.subr.mxu0 0.0
    %572 = vmatpush1.msra.mxu0 0.0
    %573 = vmatprep.subr.mxu0 0.0
    %574 = vmatpush1.msra.mxu0 0.0
    %575 = vmatprep.subr.mxu0 0.0
    %576 = vmatpush1.msra.mxu0 0.0
    %577 = vmatprep.subr.mxu0 0.0
    %578 = vmatpush1.msra.mxu0 0.0
    %579 = vmatprep.subr.mxu0 0.0
    %580 = vmatpush1.msra.mxu0 0.0
    %581 = vmatprep.subr.mxu0 0.0
    %582 = vmatpush1.msra.mxu0 0.0
    %583 = vmatprep.subr.mxu0 0.0
    %584 = vmatpush1.msra.mxu0 0.0
    %585 = vmatprep.subr.mxu0 0.0
    %586 = vmatpush1.msra.mxu0 0.0
    %587 = vmatprep.subr.mxu0 0.0
    %588 = vmatpush1.msra.mxu0 0.0
    %589 = vmatprep.subr.mxu0 0.0
    %590 = vmatpush1.msra.mxu0 0.0
    %591 = vmatprep.subr.mxu0 0.0
    %592 = vmatpush1.msra.mxu0 %v292
    %593 = vmatprep.subr.mxu0 0.0
    %594 = vmatpush2.msra.mxu0 0.0
    %595 = vmatprep.subr.mxu0 0.0
    %596 = vmatpush2.msra.mxu0 0.0
    %597 = vmatprep.subr.mxu0 0.0
    %598 = vmatpush2.msra.mxu0 0.0
    %599 = vmatprep.subr.mxu0 0.0
    %600 = vmatpush2.msra.mxu0 0.0
    %601 = vmatprep.subr.mxu0 0.0
    %602 = vmatpush2.msra.mxu0 0.0
    %603 = vmatprep.subr.mxu0 0.0
    %604 = vmatpush2.msra.mxu0 0.0
    %605 = vmatprep.subr.mxu0 0.0
    %606 = vmatpush2.msra.mxu0 0.0
    %607 = vmatprep.subr.mxu0 0.0
    %608 = vmatpush2.msra.mxu0 0.0
    %609 = vmatprep.subr.mxu0 0.0
    %610 = vmatpush2.msra.mxu0 0.0
    %611 = vmatprep.subr.mxu0 0.0
    %612 = vmatpush2.msra.mxu0 0.0
    %613 = vmatprep.subr.mxu0 0.0
    %614 = vmatpush2.msra.mxu0 0.0
    %615 = vmatprep.subr.mxu0 0.0
    %616 = vmatpush2.msra.mxu0 0.0
    %617 = vmatprep.subr.mxu0 0.0
    %618 = vmatpush2.msra.mxu0 0.0
    %619 = vmatprep.subr.mxu0 0.0
    %620 = vmatpush2.msra.mxu0 0.0
    %621 = vmatprep.subr.mxu0 0.0
    %622 = vmatpush2.msra.mxu0 0.0
    %623 = vmatprep.subr.mxu0 0.0
    %624 = vmatpush2.msra.mxu0 0.0
    %625 = vmatprep.mubr.f32.mxu0 0.0
    %626 = vmatmul.mubr.f32.gmra.mxu0 %v559
    %v627 = vpop.f32.mrf.mxu0
    %v628 = vadd.f32 0.0, %v627
    %v629 = vpop.f32.mrf.mxu0
    %630 = vdwg.mxu0
    %v632 = vsel %vm379, %v555, 0
    %634 = vmatprep.subr.mxu0 0.0
    %635 = vmatpush1.msra.mxu0 0.0
    %636 = vmatprep.subr.mxu0 0.0
    %637 = vmatpush1.msra.mxu0 0.0
    %638 = vmatprep.subr.mxu0 0.0
    %639 = vmatpush1.msra.mxu0 0.0
    %640 = vmatprep.subr.mxu0 0.0
    %641 = vmatpush1.msra.mxu0 0.0
    %642 = vmatprep.subr.mxu0 0.0
    %643 = vmatpush1.msra.mxu0 0.0
    %644 = vmatprep.subr.mxu0 0.0
    %645 = vmatpush1.msra.mxu0 0.0
    %646 = vmatprep.subr.mxu0 0.0
    %647 = vmatpush1.msra.mxu0 0.0
    %648 = vmatprep.subr.mxu0 0.0
    %649 = vmatpush1.msra.mxu0 0.0
    %650 = vmatprep.subr.mxu0 0.0
    %651 = vmatpush1.msra.mxu0 0.0
    %652 = vmatprep.subr.mxu0 0.0
    %653 = vmatpush1.msra.mxu0 0.0
    %654 = vmatprep.subr.mxu0 0.0
    %655 = vmatpush1.msra.mxu0 0.0
    %656 = vmatprep.subr.mxu0 0.0
    %657 = vmatpush1.msra.mxu0 0.0
    %658 = vmatprep.subr.mxu0 0.0
    %659 = vmatpush1.msra.mxu0 0.0
    %660 = vmatprep.subr.mxu0 0.0
    %661 = vmatpush1.msra.mxu0 0.0
    %662 = vmatprep.subr.mxu0 0.0
    %663 = vmatpush1.msra.mxu0 0.0
    %664 = vmatprep.subr.mxu0 0.0
    %665 = vmatpush1.msra.mxu0 %v297
    %666 = vmatprep.subr.mxu0 0.0
    %667 = vmatpush2.msra.mxu0 0.0
    %668 = vmatprep.subr.mxu0 0.0
    %669 = vmatpush2.msra.mxu0 0.0
    %670 = vmatprep.subr.mxu0 0.0
    %671 = vmatpush2.msra.mxu0 0.0
    %672 = vmatprep.subr.mxu0 0.0
    %673 = vmatpush2.msra.mxu0 0.0
    %674 = vmatprep.subr.mxu0 0.0
    %675 = vmatpush2.msra.mxu0 0.0
    %676 = vmatprep.subr.mxu0 0.0
    %677 = vmatpush2.msra.mxu0 0.0
    %678 = vmatprep.subr.mxu0 0.0
    %679 = vmatpush2.msra.mxu0 0.0
    %680 = vmatprep.subr.mxu0 0.0
    %681 = vmatpush2.msra.mxu0 0.0
    %682 = vmatprep.subr.mxu0 0.0
    %683 = vmatpush2.msra.mxu0 0.0
    %684 = vmatprep.subr.mxu0 0.0
    %685 = vmatpush2.msra.mxu0 0.0
    %686 = vmatprep.subr.mxu0 0.0
    %687 = vmatpush2.msra.mxu0 0.0
    %688 = vmatprep.subr.mxu0 0.0
    %689 = vmatpush2.msra.mxu0 0.0
    %690 = vmatprep.subr.mxu0 0.0
    %691 = vmatpush2.msra.mxu0 0.0
    %692 = vmatprep.subr.mxu0 0.0
    %693 = vmatpush2.msra.mxu0 0.0
    %694 = vmatprep.subr.mxu0 0.0
    %695 = vmatpush2.msra.mxu0 0.0
    %696 = vmatprep.subr.mxu0 0.0
    %697 = vmatpush2.msra.mxu0 0.0
    %698 = vmatprep.mubr.f32.mxu0 0.0
    %699 = vmatmul.mubr.f32.gmra.mxu0 %v632
    %v700 = vpop.f32.mrf.mxu0
    %v701 = vadd.f32 0.0, %v700
    %v702 = vpop.f32.mrf.mxu0
    %703 = vdwg.mxu0
    %v704 = vld [vmem:[%s6] sm:$0xff]
    %v706 = vsel %vm379, %v628, 0
    %v709 = vsel %vm379, %v701, 0
    %711 = vmatprep.subr.mxu0 0.0
    %712 = vmatpush1.msra.mxu0 0.0
    %713 = vmatprep.subr.mxu0 0.0
    %714 = vmatpush1.msra.mxu0 0.0
    %715 = vmatprep.subr.mxu0 0.0
    %716 = vmatpush1.msra.mxu0 0.0
    %717 = vmatprep.subr.mxu0 0.0
    %718 = vmatpush1.msra.mxu0 0.0
    %719 = vmatprep.subr.mxu0 0.0
    %720 = vmatpush1.msra.mxu0 0.0
    %721 = vmatprep.subr.mxu0 0.0
    %722 = vmatpush1.msra.mxu0 0.0
    %723 = vmatprep.subr.mxu0 0.0
    %724 = vmatpush1.msra.mxu0 0.0
    %725 = vmatprep.subr.mxu0 0.0
    %726 = vmatpush1.msra.mxu0 0.0
    %727 = vmatprep.subr.mxu0 0.0
    %728 = vmatpush1.msra.mxu0 0.0
    %729 = vmatprep.subr.mxu0 0.0
    %730 = vmatpush1.msra.mxu0 0.0
    %731 = vmatprep.subr.mxu0 0.0
    %732 = vmatpush1.msra.mxu0 0.0
    %733 = vmatprep.subr.mxu0 0.0
    %734 = vmatpush1.msra.mxu0 0.0
    %735 = vmatprep.subr.mxu0 0.0
    %736 = vmatpush1.msra.mxu0 0.0
    %737 = vmatprep.subr.mxu0 0.0
    %738 = vmatpush1.msra.mxu0 0.0
    %739 = vmatprep.subr.mxu0 0.0
    %740 = vmatpush1.msra.mxu0 0.0
    %741 = vmatprep.subr.mxu0 0.0
    %742 = vmatpush1.msra.mxu0 %v704
    %743 = vmatprep.subr.mxu0 0.0
    %744 = vmatpush2.msra.mxu0 0.0
    %745 = vmatprep.subr.mxu0 0.0
    %746 = vmatpush2.msra.mxu0 0.0
    %747 = vmatprep.subr.mxu0 0.0
    %748 = vmatpush2.msra.mxu0 0.0
    %749 = vmatprep.subr.mxu0 0.0
    %750 = vmatpush2.msra.mxu0 0.0
    %751 = vmatprep.subr.mxu0 0.0
    %752 = vmatpush2.msra.mxu0 0.0
    %753 = vmatprep.subr.mxu0 0.0
    %754 = vmatpush2.msra.mxu0 0.0
    %755 = vmatprep.subr.mxu0 0.0
    %756 = vmatpush2.msra.mxu0 0.0
    %757 = vmatprep.subr.mxu0 0.0
    %758 = vmatpush2.msra.mxu0 0.0
    %759 = vmatprep.subr.mxu0 0.0
    %760 = vmatpush2.msra.mxu0 0.0
    %761 = vmatprep.subr.mxu0 0.0
    %762 = vmatpush2.msra.mxu0 0.0
    %763 = vmatprep.subr.mxu0 0.0
    %764 = vmatpush2.msra.mxu0 0.0
    %765 = vmatprep.subr.mxu0 0.0
    %766 = vmatpush2.msra.mxu0 0.0
    %767 = vmatprep.subr.mxu0 0.0
    %768 = vmatpush2.msra.mxu0 0.0
    %769 = vmatprep.subr.mxu0 0.0
    %770 = vmatpush2.msra.mxu0 0.0
    %771 = vmatprep.subr.mxu0 0.0
    %772 = vmatpush2.msra.mxu0 0.0
    %773 = vmatprep.subr.mxu0 0.0
    %774 = vmatpush2.msra.mxu0 0.0
    %775 = vmatprep.mubr.f32.mxu0 0.0
    %776 = vmatmul.mubr.f32.gmra.mxu0 %v706
    %v777 = vpop.f32.mrf.mxu0
    %v778 = vadd.f32 0.0, %v777
    %v779 = vpop.f32.mrf.mxu0
    %780 = vmatprep.mubr.f32.mxu0 0.0
    %781 = vmatmul.mubr.f32.gmra.mxu0 %v709
    %v782 = vpop.f32.mrf.mxu0
    %v783 = vadd.f32 0.0, %v782
    %v784 = vpop.f32.mrf.mxu0
    %785 = vdwg.mxu0
    %v786 = vadd.f32 %v128, %v778
    %v787 = vadd.f32 %v133, %v783
    %s788 = scalar_lea.vmem %s2, 32
    %v789 = vld [vmem:[%s788] sm:$0xff]
    %v790 = vld [vmem:[%s788 + $0x8] sm:$0xff]
    %v791 = vld [vmem:[%s788 + $0x10] sm:$0xff]
    %v792 = vld [vmem:[%s788 + $0x18] sm:$0xff]
    %793 = vmatprep.subr.mxu0 0.0
    %794 = vmatpush1.msra.mxu0 0.0
    %795 = vmatprep.subr.mxu0 0.0
    %796 = vmatpush1.msra.mxu0 0.0
    %797 = vmatprep.subr.mxu0 0.0
    %798 = vmatpush1.msra.mxu0 0.0
    %799 = vmatprep.subr.mxu0 0.0
    %800 = vmatpush1.msra.mxu0 0.0
    %801 = vmatprep.subr.mxu0 0.0
    %802 = vmatpush1.msra.mxu0 0.0
    %803 = vmatprep.subr.mxu0 0.0
    %804 = vmatpush1.msra.mxu0 0.0
    %805 = vmatprep.subr.mxu0 0.0
    %806 = vmatpush1.msra.mxu0 0.0
    %807 = vmatprep.subr.mxu0 0.0
    %808 = vmatpush1.msra.mxu0 0.0
    %809 = vmatprep.subr.mxu0 0.0
    %810 = vmatpush1.msra.mxu0 0.0
    %811 = vmatprep.subr.mxu0 0.0
    %812 = vmatpush1.msra.mxu0 0.0
    %813 = vmatprep.subr.mxu0 0.0
    %814 = vmatpush1.msra.mxu0 0.0
    %815 = vmatprep.subr.mxu0 0.0
    %816 = vmatpush1.msra.mxu0 0.0
    %817 = vmatprep.subr.mxu0 0.0
    %818 = vmatpush1.msra.mxu0 %v792
    %819 = vmatprep.subr.mxu0 0.0
    %820 = vmatpush1.msra.mxu0 %v791
    %821 = vmatprep.subr.mxu0 0.0
    %822 = vmatpush1.msra.mxu0 %v790
    %823 = vmatprep.subr.mxu0 0.0
    %824 = vmatpush1.msra.mxu0 %v789
    %825 = vmatprep.subr.mxu0 0.0
    %826 = vmatpush2.msra.mxu0 0.0
    %827 = vmatprep.subr.mxu0 0.0
    %828 = vmatpush2.msra.mxu0 0.0
    %829 = vmatprep.subr.mxu0 0.0
    %830 = vmatpush2.msra.mxu0 0.0
    %831 = vmatprep.subr.mxu0 0.0
    %832 = vmatpush2.msra.mxu0 0.0
    %833 = vmatprep.subr.mxu0 0.0
    %834 = vmatpush2.msra.mxu0 0.0
    %835 = vmatprep.subr.mxu0 0.0
    %836 = vmatpush2.msra.mxu0 0.0
    %837 = vmatprep.subr.mxu0 0.0
    %838 = vmatpush2.msra.mxu0 0.0
    %839 = vmatprep.subr.mxu0 0.0
    %840 = vmatpush2.msra.mxu0 0.0
    %841 = vmatprep.subr.mxu0 0.0
    %842 = vmatpush2.msra.mxu0 0.0
    %843 = vmatprep.subr.mxu0 0.0
    %844 = vmatpush2.msra.mxu0 0.0
    %845 = vmatprep.subr.mxu0 0.0
    %846 = vmatpush2.msra.mxu0 0.0
    %847 = vmatprep.subr.mxu0 0.0
    %848 = vmatpush2.msra.mxu0 0.0
    %849 = vmatprep.subr.mxu0 0.0
    %850 = vmatpush2.msra.mxu0 0.0
    %851 = vmatprep.subr.mxu0 0.0
    %852 = vmatpush2.msra.mxu0 0.0
    %853 = vmatprep.subr.mxu0 0.0
    %854 = vmatpush2.msra.mxu0 0.0
    %855 = vmatprep.subr.mxu0 0.0
    %856 = vmatpush2.msra.mxu0 0.0
    %857 = vmatprep.mubr.f32.mxu0 0.0
    %858 = vmatmul.mubr.f32.gmra.mxu0 %v141
    %v859 = vpop.f32.mrf.mxu0
    %v860 = vadd.f32 0.0, %v859
    %v861 = vpop.f32.mrf.mxu0
    %862 = vmatprep.mubr.f32.mxu0 0.0
    %863 = vmatmul.mubr.f32.gmra.mxu0 %v144
    %v864 = vpop.f32.mrf.mxu0
    %v865 = vadd.f32 0.0, %v864
    %v866 = vpop.f32.mrf.mxu0
    %867 = vdwg.mxu0
    %s868 = scalar_lea.vmem %s3, 32
    %v869 = vld [vmem:[%s868] sm:$0xff]
    %v870 = vld [vmem:[%s868 + $0x8] sm:$0xff]
    %v871 = vld [vmem:[%s868 + $0x10] sm:$0xff]
    %v872 = vld [vmem:[%s868 + $0x18] sm:$0xff]
    %873 = vmatprep.subr.mxu0 0.0
    %874 = vmatpush1.msra.mxu0 0.0
    %875 = vmatprep.subr.mxu0 0.0
    %876 = vmatpush1.msra.mxu0 0.0
    %877 = vmatprep.subr.mxu0 0.0
    %878 = vmatpush1.msra.mxu0 0.0
    %879 = vmatprep.subr.mxu0 0.0
    %880 = vmatpush1.msra.mxu0 0.0
    %881 = vmatprep.subr.mxu0 0.0
    %882 = vmatpush1.msra.mxu0 0.0
    %883 = vmatprep.subr.mxu0 0.0
    %884 = vmatpush1.msra.mxu0 0.0
    %885 = vmatprep.subr.mxu0 0.0
    %886 = vmatpush1.msra.mxu0 0.0
    %887 = vmatprep.subr.mxu0 0.0
    %888 = vmatpush1.msra.mxu0 0.0
    %889 = vmatprep.subr.mxu0 0.0
    %890 = vmatpush1.msra.mxu0 0.0
    %891 = vmatprep.subr.mxu0 0.0
    %892 = vmatpush1.msra.mxu0 0.0
    %893 = vmatprep.subr.mxu0 0.0
    %894 = vmatpush1.msra.mxu0 0.0
    %895 = vmatprep.subr.mxu0 0.0
    %896 = vmatpush1.msra.mxu0 0.0
    %897 = vmatprep.subr.mxu0 0.0
    %898 = vmatpush1.msra.mxu0 %v872
    %899 = vmatprep.subr.mxu0 0.0
    %900 = vmatpush1.msra.mxu0 %v871
    %901 = vmatprep.subr.mxu0 0.0
    %902 = vmatpush1.msra.mxu0 %v870
    %903 = vmatprep.subr.mxu0 0.0
    %904 = vmatpush1.msra.mxu0 %v869
    %905 = vmatprep.subr.mxu0 0.0
    %906 = vmatpush2.msra.mxu0 0.0
    %907 = vmatprep.subr.mxu0 0.0
    %908 = vmatpush2.msra.mxu0 0.0
    %909 = vmatprep.subr.mxu0 0.0
    %910 = vmatpush2.msra.mxu0 0.0
    %911 = vmatprep.subr.mxu0 0.0
    %912 = vmatpush2.msra.mxu0 0.0
    %913 = vmatprep.subr.mxu0 0.0
    %914 = vmatpush2.msra.mxu0 0.0
    %915 = vmatprep.subr.mxu0 0.0
    %916 = vmatpush2.msra.mxu0 0.0
    %917 = vmatprep.subr.mxu0 0.0
    %918 = vmatpush2.msra.mxu0 0.0
    %919 = vmatprep.subr.mxu0 0.0
    %920 = vmatpush2.msra.mxu0 0.0
    %921 = vmatprep.subr.mxu0 0.0
    %922 = vmatpush2.msra.mxu0 0.0
    %923 = vmatprep.subr.mxu0 0.0
    %924 = vmatpush2.msra.mxu0 0.0
    %925 = vmatprep.subr.mxu0 0.0
    %926 = vmatpush2.msra.mxu0 0.0
    %927 = vmatprep.subr.mxu0 0.0
    %928 = vmatpush2.msra.mxu0 0.0
    %929 = vmatprep.subr.mxu0 0.0
    %930 = vmatpush2.msra.mxu0 0.0
    %931 = vmatprep.subr.mxu0 0.0
    %932 = vmatpush2.msra.mxu0 0.0
    %933 = vmatprep.subr.mxu0 0.0
    %934 = vmatpush2.msra.mxu0 0.0
    %935 = vmatprep.subr.mxu0 0.0
    %936 = vmatpush2.msra.mxu0 0.0
    %937 = vmatprep.mubr.f32.mxu0 0.0
    %938 = vmatmul.mubr.f32.gmra.mxu0 %v141
    %v939 = vpop.f32.mrf.mxu0
    %v940 = vadd.f32 0.0, %v939
    %v941 = vpop.f32.mrf.mxu0
    %942 = vmatprep.mubr.f32.mxu0 0.0
    %943 = vmatmul.mubr.f32.gmra.mxu0 %v144
    %v944 = vpop.f32.mrf.mxu0
    %v945 = vadd.f32 0.0, %v944
    %v946 = vpop.f32.mrf.mxu0
    %947 = vdwg.mxu0
    %s948 = scalar_lea.vmem %s4, 32
    %v949 = vld [vmem:[%s948] sm:$0xff]
    %v950 = vld [vmem:[%s948 + $0x8] sm:$0xff]
    %v951 = vld [vmem:[%s948 + $0x10] sm:$0xff]
    %v952 = vld [vmem:[%s948 + $0x18] sm:$0xff]
    %953 = vmatprep.subr.mxu0 0.0
    %954 = vmatpush1.msra.mxu0 0.0
    %955 = vmatprep.subr.mxu0 0.0
    %956 = vmatpush1.msra.mxu0 0.0
    %957 = vmatprep.subr.mxu0 0.0
    %958 = vmatpush1.msra.mxu0 0.0
    %959 = vmatprep.subr.mxu0 0.0
    %960 = vmatpush1.msra.mxu0 0.0
    %961 = vmatprep.subr.mxu0 0.0
    %962 = vmatpush1.msra.mxu0 0.0
    %963 = vmatprep.subr.mxu0 0.0
    %964 = vmatpush1.msra.mxu0 0.0
    %965 = vmatprep.subr.mxu0 0.0
    %966 = vmatpush1.msra.mxu0 0.0
    %967 = vmatprep.subr.mxu0 0.0
    %968 = vmatpush1.msra.mxu0 0.0
    %969 = vmatprep.subr.mxu0 0.0
    %970 = vmatpush1.msra.mxu0 0.0
    %971 = vmatprep.subr.mxu0 0.0
    %972 = vmatpush1.msra.mxu0 0.0
    %973 = vmatprep.subr.mxu0 0.0
    %974 = vmatpush1.msra.mxu0 0.0
    %975 = vmatprep.subr.mxu0 0.0
    %976 = vmatpush1.msra.mxu0 0.0
    %977 = vmatprep.subr.mxu0 0.0
    %978 = vmatpush1.msra.mxu0 %v952
    %979 = vmatprep.subr.mxu0 0.0
    %980 = vmatpush1.msra.mxu0 %v951
    %981 = vmatprep.subr.mxu0 0.0
    %982 = vmatpush1.msra.mxu0 %v950
    %983 = vmatprep.subr.mxu0 0.0
    %984 = vmatpush1.msra.mxu0 %v949
    %985 = vmatprep.subr.mxu0 0.0
    %986 = vmatpush2.msra.mxu0 0.0
    %987 = vmatprep.subr.mxu0 0.0
    %988 = vmatpush2.msra.mxu0 0.0
    %989 = vmatprep.subr.mxu0 0.0
    %990 = vmatpush2.msra.mxu0 0.0
    %991 = vmatprep.subr.mxu0 0.0
    %992 = vmatpush2.msra.mxu0 0.0
    %993 = vmatprep.subr.mxu0 0.0
    %994 = vmatpush2.msra.mxu0 0.0
    %995 = vmatprep.subr.mxu0 0.0
    %996 = vmatpush2.msra.mxu0 0.0
    %997 = vmatprep.subr.mxu0 0.0
    %998 = vmatpush2.msra.mxu0 0.0
    %999 = vmatprep.subr.mxu0 0.0
    %1000 = vmatpush2.msra.mxu0 0.0
    %1001 = vmatprep.subr.mxu0 0.0
    %1002 = vmatpush2.msra.mxu0 0.0
    %1003 = vmatprep.subr.mxu0 0.0
    %1004 = vmatpush2.msra.mxu0 0.0
    %1005 = vmatprep.subr.mxu0 0.0
    %1006 = vmatpush2.msra.mxu0 0.0
    %1007 = vmatprep.subr.mxu0 0.0
    %1008 = vmatpush2.msra.mxu0 0.0
    %1009 = vmatprep.subr.mxu0 0.0
    %1010 = vmatpush2.msra.mxu0 0.0
    %1011 = vmatprep.subr.mxu0 0.0
    %1012 = vmatpush2.msra.mxu0 0.0
    %1013 = vmatprep.subr.mxu0 0.0
    %1014 = vmatpush2.msra.mxu0 0.0
    %1015 = vmatprep.subr.mxu0 0.0
    %1016 = vmatpush2.msra.mxu0 0.0
    %1017 = vmatprep.mubr.f32.mxu0 0.0
    %1018 = vmatmul.mubr.f32.gmra.mxu0 %v56
    %v1019 = vpop.f32.mrf.mxu0
    %v1020 = vadd.f32 0.0, %v1019
    %v1021 = vpop.f32.mrf.mxu0
    %1022 = vmatprep.mubr.f32.mxu0 0.0
    %1023 = vmatmul.mubr.f32.gmra.mxu0 %v59
    %v1024 = vpop.f32.mrf.mxu0
    %v1025 = vadd.f32 0.0, %v1024
    %v1026 = vpop.f32.mrf.mxu0
    %1027 = vdwg.mxu0
    %v1029 = vsel %vm379, %v1020, 0
    %v1032 = vsel %vm379, %v860, 0
    %1034 = vmatprep.subr.mxu0 0.0
    %1035 = vmatpush1.xpose.msra.mxu0 0.0
    %1036 = vmatprep.subr.mxu0 0.0
    %1037 = vmatpush1.xpose.msra.mxu0 0.0
    %1038 = vmatprep.subr.mxu0 0.0
    %1039 = vmatpush1.xpose.msra.mxu0 0.0
    %1040 = vmatprep.subr.mxu0 0.0
    %1041 = vmatpush1.xpose.msra.mxu0 0.0
    %1042 = vmatprep.subr.mxu0 0.0
    %1043 = vmatpush1.xpose.msra.mxu0 0.0
    %1044 = vmatprep.subr.mxu0 0.0
    %1045 = vmatpush1.xpose.msra.mxu0 0.0
    %1046 = vmatprep.subr.mxu0 0.0
    %1047 = vmatpush1.xpose.msra.mxu0 0.0
    %1048 = vmatprep.subr.mxu0 0.0
    %1049 = vmatpush1.xpose.msra.mxu0 0.0
    %1050 = vmatprep.subr.mxu0 0.0
    %1051 = vmatpush1.xpose.msra.mxu0 0.0
    %1052 = vmatprep.subr.mxu0 0.0
    %1053 = vmatpush1.xpose.msra.mxu0 0.0
    %1054 = vmatprep.subr.mxu0 0.0
    %1055 = vmatpush1.xpose.msra.mxu0 0.0
    %1056 = vmatprep.subr.mxu0 0.0
    %1057 = vmatpush1.xpose.msra.mxu0 0.0
    %1058 = vmatprep.subr.mxu0 0.0
    %1059 = vmatpush1.xpose.msra.mxu0 0.0
    %1060 = vmatprep.subr.mxu0 0.0
    %1061 = vmatpush1.xpose.msra.mxu0 0.0
    %1062 = vmatprep.subr.mxu0 0.0
    %1063 = vmatpush1.xpose.msra.mxu0 0.0
    %1064 = vmatprep.subr.mxu0 0.0
    %1065 = vmatpush1.xpose.msra.mxu0 %v1032
    %1066 = vmatprep.subr.mxu0 0.0
    %1067 = vmatpush2.xpose.msra.mxu0 0.0
    %1068 = vmatprep.subr.mxu0 0.0
    %1069 = vmatpush2.xpose.msra.mxu0 0.0
    %1070 = vmatprep.subr.mxu0 0.0
    %1071 = vmatpush2.xpose.msra.mxu0 0.0
    %1072 = vmatprep.subr.mxu0 0.0
    %1073 = vmatpush2.xpose.msra.mxu0 0.0
    %1074 = vmatprep.subr.mxu0 0.0
    %1075 = vmatpush2.xpose.msra.mxu0 0.0
    %1076 = vmatprep.subr.mxu0 0.0
    %1077 = vmatpush2.xpose.msra.mxu0 0.0
    %1078 = vmatprep.subr.mxu0 0.0
    %1079 = vmatpush2.xpose.msra.mxu0 0.0
    %1080 = vmatprep.subr.mxu0 0.0
    %1081 = vmatpush2.xpose.msra.mxu0 0.0
    %1082 = vmatprep.subr.mxu0 0.0
    %1083 = vmatpush2.xpose.msra.mxu0 0.0
    %1084 = vmatprep.subr.mxu0 0.0
    %1085 = vmatpush2.xpose.msra.mxu0 0.0
    %1086 = vmatprep.subr.mxu0 0.0
    %1087 = vmatpush2.xpose.msra.mxu0 0.0
    %1088 = vmatprep.subr.mxu0 0.0
    %1089 = vmatpush2.xpose.msra.mxu0 0.0
    %1090 = vmatprep.subr.mxu0 0.0
    %1091 = vmatpush2.xpose.msra.mxu0 0.0
    %1092 = vmatprep.subr.mxu0 0.0
    %1093 = vmatpush2.xpose.msra.mxu0 0.0
    %1094 = vmatprep.subr.mxu0 0.0
    %1095 = vmatpush2.xpose.msra.mxu0 0.0
    %1096 = vmatprep.subr.mxu0 0.0
    %1097 = vmatpush2.xpose.msra.mxu0 0.0
    %1098 = vmatprep.mubr.f32.mxu0 0.0
    %1099 = vmatmul.mubr.f32.gmra.mxu0 %v1029
    %v1100 = vpop.f32.mrf.mxu0
    %v1101 = vadd.f32 0.0, %v1100
    %v1102 = vpop.f32.mrf.mxu0
    %1103 = vdwg.mxu0
    %v1105 = vsel %vm379, %v1025, 0
    %v1108 = vsel %vm379, %v865, 0
    %1110 = vmatprep.subr.mxu0 0.0
    %1111 = vmatpush1.xpose.msra.mxu0 0.0
    %1112 = vmatprep.subr.mxu0 0.0
    %1113 = vmatpush1.xpose.msra.mxu0 0.0
    %1114 = vmatprep.subr.mxu0 0.0
    %1115 = vmatpush1.xpose.msra.mxu0 0.0
    %1116 = vmatprep.subr.mxu0 0.0
    %1117 = vmatpush1.xpose.msra.mxu0 0.0
    %1118 = vmatprep.subr.mxu0 0.0
    %1119 = vmatpush1.xpose.msra.mxu0 0.0
    %1120 = vmatprep.subr.mxu0 0.0
    %1121 = vmatpush1.xpose.msra.mxu0 0.0
    %1122 = vmatprep.subr.mxu0 0.0
    %1123 = vmatpush1.xpose.msra.mxu0 0.0
    %1124 = vmatprep.subr.mxu0 0.0
    %1125 = vmatpush1.xpose.msra.mxu0 0.0
    %1126 = vmatprep.subr.mxu0 0.0
    %1127 = vmatpush1.xpose.msra.mxu0 0.0
    %1128 = vmatprep.subr.mxu0 0.0
    %1129 = vmatpush1.xpose.msra.mxu0 0.0
    %1130 = vmatprep.subr.mxu0 0.0
    %1131 = vmatpush1.xpose.msra.mxu0 0.0
    %1132 = vmatprep.subr.mxu0 0.0
    %1133 = vmatpush1.xpose.msra.mxu0 0.0
    %1134 = vmatprep.subr.mxu0 0.0
    %1135 = vmatpush1.xpose.msra.mxu0 0.0
    %1136 = vmatprep.subr.mxu0 0.0
    %1137 = vmatpush1.xpose.msra.mxu0 0.0
    %1138 = vmatprep.subr.mxu0 0.0
    %1139 = vmatpush1.xpose.msra.mxu0 0.0
    %1140 = vmatprep.subr.mxu0 0.0
    %1141 = vmatpush1.xpose.msra.mxu0 %v1108
    %1142 = vmatprep.subr.mxu0 0.0
    %1143 = vmatpush2.xpose.msra.mxu0 0.0
    %1144 = vmatprep.subr.mxu0 0.0
    %1145 = vmatpush2.xpose.msra.mxu0 0.0
    %1146 = vmatprep.subr.mxu0 0.0
    %1147 = vmatpush2.xpose.msra.mxu0 0.0
    %1148 = vmatprep.subr.mxu0 0.0
    %1149 = vmatpush2.xpose.msra.mxu0 0.0
    %1150 = vmatprep.subr.mxu0 0.0
    %1151 = vmatpush2.xpose.msra.mxu0 0.0
    %1152 = vmatprep.subr.mxu0 0.0
    %1153 = vmatpush2.xpose.msra.mxu0 0.0
    %1154 = vmatprep.subr.mxu0 0.0
    %1155 = vmatpush2.xpose.msra.mxu0 0.0
    %1156 = vmatprep.subr.mxu0 0.0
    %1157 = vmatpush2.xpose.msra.mxu0 0.0
    %1158 = vmatprep.subr.mxu0 0.0
    %1159 = vmatpush2.xpose.msra.mxu0 0.0
    %1160 = vmatprep.subr.mxu0 0.0
    %1161 = vmatpush2.xpose.msra.mxu0 0.0
    %1162 = vmatprep.subr.mxu0 0.0
    %1163 = vmatpush2.xpose.msra.mxu0 0.0
    %1164 = vmatprep.subr.mxu0 0.0
    %1165 = vmatpush2.xpose.msra.mxu0 0.0
    %1166 = vmatprep.subr.mxu0 0.0
    %1167 = vmatpush2.xpose.msra.mxu0 0.0
    %1168 = vmatprep.subr.mxu0 0.0
    %1169 = vmatpush2.xpose.msra.mxu0 0.0
    %1170 = vmatprep.subr.mxu0 0.0
    %1171 = vmatpush2.xpose.msra.mxu0 0.0
    %1172 = vmatprep.subr.mxu0 0.0
    %1173 = vmatpush2.xpose.msra.mxu0 0.0
    %1174 = vmatprep.mubr.f32.mxu0 0.0
    %1175 = vmatmul.mubr.f32.gmra.mxu0 %v1105
    %v1176 = vpop.f32.mrf.mxu0
    %v1177 = vadd.f32 0.0, %v1176
    %v1178 = vpop.f32.mrf.mxu0
    %1179 = vdwg.mxu0
    %v1180 = vmul.f32 %v1101, 0.35355338
    %v1181 = vmul.f32 %v1177, 0.35355338
    %v1182 = vsel %vm379, %v1180, -inf
    %1183 = vmax.xlane.f32.xlu0 %v1182
    %v1184 = vpop.xlane.xlu0 %1183
    %v1185 = vsel %vm379, %v1181, -inf
    %1186 = vmax.xlane.f32.xlu0 %v1185
    %v1187 = vpop.xlane.xlu0 %1186
    %v1188 = vsub.f32 %v1180, %v1184
    %v1189 = vsub.f32 %v1181, %v1187
    %v1190 = vmul.f32 %v1188, 1.442695
    %v1191 = vpow.pop %v1190
    %v1192 = vmul.f32 %v1189, 1.442695
    %v1193 = vpow.pop %v1192
    %v1194 = vsel %vm379, %v1191, 0.0
    %1195 = vadd.xlane.f32.xlu0 %v1194
    %v1196 = vpop.xlane.xlu0 %1195
    %v1197 = vsel %vm379, %v1193, 0.0
    %1198 = vadd.xlane.f32.xlu0 %v1197
    %v1199 = vpop.xlane.xlu0 %1198
    %v1200 = vrcp.pop %v1196
    %v1201 = vrcp.pop %v1199
    %v1202 = vmul.f32 %v1191, %v1200
    %v1203 = vmul.f32 %v1193, %v1201
    %s1204 = scalar_lea.vmem [#allocation4], 16
    %1205 = vst.msk [vmem:[%s1204] sm:$0xff] %vm379, %v1202
    %1206 = vst.msk [vmem:[%s1204 + $0x8] sm:$0xff] %vm379, %v1203
    %v1208 = vsel %vm379, %v1202, 0
    %1210 = vmatprep.subr.mxu0 0.0
    %1211 = vmatpush1.msra.mxu0 0.0
    %1212 = vmatprep.subr.mxu0 0.0
    %1213 = vmatpush1.msra.mxu0 0.0
    %1214 = vmatprep.subr.mxu0 0.0
    %1215 = vmatpush1.msra.mxu0 0.0
    %1216 = vmatprep.subr.mxu0 0.0
    %1217 = vmatpush1.msra.mxu0 0.0
    %1218 = vmatprep.subr.mxu0 0.0
    %1219 = vmatpush1.msra.mxu0 0.0
    %1220 = vmatprep.subr.mxu0 0.0
    %1221 = vmatpush1.msra.mxu0 0.0
    %1222 = vmatprep.subr.mxu0 0.0
    %1223 = vmatpush1.msra.mxu0 0.0
    %1224 = vmatprep.subr.mxu0 0.0
    %1225 = vmatpush1.msra.mxu0 0.0
    %1226 = vmatprep.subr.mxu0 0.0
    %1227 = vmatpush1.msra.mxu0 0.0
    %1228 = vmatprep.subr.mxu0 0.0
    %1229 = vmatpush1.msra.mxu0 0.0
    %1230 = vmatprep.subr.mxu0 0.0
    %1231 = vmatpush1.msra.mxu0 0.0
    %1232 = vmatprep.subr.mxu0 0.0
    %1233 = vmatpush1.msra.mxu0 0.0
    %1234 = vmatprep.subr.mxu0 0.0
    %1235 = vmatpush1.msra.mxu0 0.0
    %1236 = vmatprep.subr.mxu0 0.0
    %1237 = vmatpush1.msra.mxu0 0.0
    %1238 = vmatprep.subr.mxu0 0.0
    %1239 = vmatpush1.msra.mxu0 0.0
    %1240 = vmatprep.subr.mxu0 0.0
    %1241 = vmatpush1.msra.mxu0 %v940
    %1242 = vmatprep.subr.mxu0 0.0
    %1243 = vmatpush2.msra.mxu0 0.0
    %1244 = vmatprep.subr.mxu0 0.0
    %1245 = vmatpush2.msra.mxu0 0.0
    %1246 = vmatprep.subr.mxu0 0.0
    %1247 = vmatpush2.msra.mxu0 0.0
    %1248 = vmatprep.subr.mxu0 0.0
    %1249 = vmatpush2.msra.mxu0 0.0
    %1250 = vmatprep.subr.mxu0 0.0
    %1251 = vmatpush2.msra.mxu0 0.0
    %1252 = vmatprep.subr.mxu0 0.0
    %1253 = vmatpush2.msra.mxu0 0.0
    %1254 = vmatprep.subr.mxu0 0.0
    %1255 = vmatpush2.msra.mxu0 0.0
    %1256 = vmatprep.subr.mxu0 0.0
    %1257 = vmatpush2.msra.mxu0 0.0
    %1258 = vmatprep.subr.mxu0 0.0
    %1259 = vmatpush2.msra.mxu0 0.0
    %1260 = vmatprep.subr.mxu0 0.0
    %1261 = vmatpush2.msra.mxu0 0.0
    %1262 = vmatprep.subr.mxu0 0.0
    %1263 = vmatpush2.msra.mxu0 0.0
    %1264 = vmatprep.subr.mxu0 0.0
    %1265 = vmatpush2.msra.mxu0 0.0
    %1266 = vmatprep.subr.mxu0 0.0
    %1267 = vmatpush2.msra.mxu0 0.0
    %1268 = vmatprep.subr.mxu0 0.0
    %1269 = vmatpush2.msra.mxu0 0.0
    %1270 = vmatprep.subr.mxu0 0.0
    %1271 = vmatpush2.msra.mxu0 0.0
    %1272 = vmatprep.subr.mxu0 0.0
    %1273 = vmatpush2.msra.mxu0 0.0
    %1274 = vmatprep.mubr.f32.mxu0 0.0
    %1275 = vmatmul.mubr.f32.gmra.mxu0 %v1208
    %v1276 = vpop.f32.mrf.mxu0
    %v1277 = vadd.f32 0.0, %v1276
    %v1278 = vpop.f32.mrf.mxu0
    %1279 = vdwg.mxu0
    %v1281 = vsel %vm379, %v1203, 0
    %1283 = vmatprep.subr.mxu0 0.0
    %1284 = vmatpush1.msra.mxu0 0.0
    %1285 = vmatprep.subr.mxu0 0.0
    %1286 = vmatpush1.msra.mxu0 0.0
    %1287 = vmatprep.subr.mxu0 0.0
    %1288 = vmatpush1.msra.mxu0 0.0
    %1289 = vmatprep.subr.mxu0 0.0
    %1290 = vmatpush1.msra.mxu0 0.0
    %1291 = vmatprep.subr.mxu0 0.0
    %1292 = vmatpush1.msra.mxu0 0.0
    %1293 = vmatprep.subr.mxu0 0.0
    %1294 = vmatpush1.msra.mxu0 0.0
    %1295 = vmatprep.subr.mxu0 0.0
    %1296 = vmatpush1.msra.mxu0 0.0
    %1297 = vmatprep.subr.mxu0 0.0
    %1298 = vmatpush1.msra.mxu0 0.0
    %1299 = vmatprep.subr.mxu0 0.0
    %1300 = vmatpush1.msra.mxu0 0.0
    %1301 = vmatprep.subr.mxu0 0.0
    %1302 = vmatpush1.msra.mxu0 0.0
    %1303 = vmatprep.subr.mxu0 0.0
    %1304 = vmatpush1.msra.mxu0 0.0
    %1305 = vmatprep.subr.mxu0 0.0
    %1306 = vmatpush1.msra.mxu0 0.0
    %1307 = vmatprep.subr.mxu0 0.0
    %1308 = vmatpush1.msra.mxu0 0.0
    %1309 = vmatprep.subr.mxu0 0.0
    %1310 = vmatpush1.msra.mxu0 0.0
    %1311 = vmatprep.subr.mxu0 0.0
    %1312 = vmatpush1.msra.mxu0 0.0
    %1313 = vmatprep.subr.mxu0 0.0
    %1314 = vmatpush1.msra.mxu0 %v945
    %1315 = vmatprep.subr.mxu0 0.0
    %1316 = vmatpush2.msra.mxu0 0.0
    %1317 = vmatprep.subr.mxu0 0.0
    %1318 = vmatpush2.msra.mxu0 0.0
    %1319 = vmatprep.subr.mxu0 0.0
    %1320 = vmatpush2.msra.mxu0 0.0
    %1321 = vmatprep.subr.mxu0 0.0
    %1322 = vmatpush2.msra.mxu0 0.0
    %1323 = vmatprep.subr.mxu0 0.0
    %1324 = vmatpush2.msra.mxu0 0.0
    %1325 = vmatprep.subr.mxu0 0.0
    %1326 = vmatpush2.msra.mxu0 0.0
    %1327 = vmatprep.subr.mxu0 0.0
    %1328 = vmatpush2.msra.mxu0 0.0
    %1329 = vmatprep.subr.mxu0 0.0
    %1330 = vmatpush2.msra.mxu0 0.0
    %1331 = vmatprep.subr.mxu0 0.0
    %1332 = vmatpush2.msra.mxu0 0.0
    %1333 = vmatprep.subr.mxu0 0.0
    %1334 = vmatpush2.msra.mxu0 0.0
    %1335 = vmatprep.subr.mxu0 0.0
    %1336 = vmatpush2.msra.mxu0 0.0
    %1337 = vmatprep.subr.mxu0 0.0
    %1338 = vmatpush2.msra.mxu0 0.0
    %1339 = vmatprep.subr.mxu0 0.0
    %1340 = vmatpush2.msra.mxu0 0.0
    %1341 = vmatprep.subr.mxu0 0.0
    %1342 = vmatpush2.msra.mxu0 0.0
    %1343 = vmatprep.subr.mxu0 0.0
    %1344 = vmatpush2.msra.mxu0 0.0
    %1345 = vmatprep.subr.mxu0 0.0
    %1346 = vmatpush2.msra.mxu0 0.0
    %1347 = vmatprep.mubr.f32.mxu0 0.0
    %1348 = vmatmul.mubr.f32.gmra.mxu0 %v1281
    %v1349 = vpop.f32.mrf.mxu0
    %v1350 = vadd.f32 0.0, %v1349
    %v1351 = vpop.f32.mrf.mxu0
    %1352 = vdwg.mxu0
    %s1353 = scalar_lea.vmem %s6, 8
    %v1354 = vld [vmem:[%s1353] sm:$0xff]
    %v1356 = vsel %vm379, %v1277, 0
    %v1359 = vsel %vm379, %v1350, 0
    %1361 = vmatprep.subr.mxu0 0.0
    %1362 = vmatpush1.msra.mxu0 0.0
    %1363 = vmatprep.subr.mxu0 0.0
    %1364 = vmatpush1.msra.mxu0 0.0
    %1365 = vmatprep.subr.mxu0 0.0
    %1366 = vmatpush1.msra.mxu0 0.0
    %1367 = vmatprep.subr.mxu0 0.0
    %1368 = vmatpush1.msra.mxu0 0.0
    %1369 = vmatprep.subr.mxu0 0.0
    %1370 = vmatpush1.msra.mxu0 0.0
    %1371 = vmatprep.subr.mxu0 0.0
    %1372 = vmatpush1.msra.mxu0 0.0
    %1373 = vmatprep.subr.mxu0 0.0
    %1374 = vmatpush1.msra.mxu0 0.0
    %1375 = vmatprep.subr.mxu0 0.0
    %1376 = vmatpush1.msra.mxu0 0.0
    %1377 = vmatprep.subr.mxu0 0.0
    %1378 = vmatpush1.msra.mxu0 0.0
    %1379 = vmatprep.subr.mxu0 0.0
    %1380 = vmatpush1.msra.mxu0 0.0
    %1381 = vmatprep.subr.mxu0 0.0
    %1382 = vmatpush1.msra.mxu0 0.0
    %1383 = vmatprep.subr.mxu0 0.0
    %1384 = vmatpush1.msra.mxu0 0.0
    %1385 = vmatprep.subr.mxu0 0.0
    %1386 = vmatpush1.msra.mxu0 0.0
    %1387 = vmatprep.subr.mxu0 0.0
    %1388 = vmatpush1.msra.mxu0 0.0
    %1389 = vmatprep.subr.mxu0 0.0
    %1390 = vmatpush1.msra.mxu0 0.0
    %1391 = vmatprep.subr.mxu0 0.0
    %1392 = vmatpush1.msra.mxu0 %v1354
    %1393 = vmatprep.subr.mxu0 0.0
    %1394 = vmatpush2.msra.mxu0 0.0
    %1395 = vmatprep.subr.mxu0 0.0
    %1396 = vmatpush2.msra.mxu0 0.0
    %1397 = vmatprep.subr.mxu0 0.0
    %1398 = vmatpush2.msra.mxu0 0.0
    %1399 = vmatprep.subr.mxu0 0.0
    %1400 = vmatpush2.msra.mxu0 0.0
    %1401 = vmatprep.subr.mxu0 0.0
    %1402 = vmatpush2.msra.mxu0 0.0
    %1403 = vmatprep.subr.mxu0 0.0
    %1404 = vmatpush2.msra.mxu0 0.0
    %1405 = vmatprep.subr.mxu0 0.0
    %1406 = vmatpush2.msra.mxu0 0.0
    %1407 = vmatprep.subr.mxu0 0.0
    %1408 = vmatpush2.msra.mxu0 0.0
    %1409 = vmatprep.subr.mxu0 0.0
    %1410 = vmatpush2.msra.mxu0 0.0
    %1411 = vmatprep.subr.mxu0 0.0
    %1412 = vmatpush2.msra.mxu0 0.0
    %1413 = vmatprep.subr.mxu0 0.0
    %1414 = vmatpush2.msra.mxu0 0.0
    %1415 = vmatprep.subr.mxu0 0.0
    %1416 = vmatpush2.msra.mxu0 0.0
    %1417 = vmatprep.subr.mxu0 0.0
    %1418 = vmatpush2.msra.mxu0 0.0
    %1419 = vmatprep.subr.mxu0 0.0
    %1420 = vmatpush2.msra.mxu0 0.0
    %1421 = vmatprep.subr.mxu0 0.0
    %1422 = vmatpush2.msra.mxu0 0.0
    %1423 = vmatprep.subr.mxu0 0.0
    %1424 = vmatpush2.msra.mxu0 0.0
    %1425 = vmatprep.mubr.f32.mxu0 0.0
    %1426 = vmatmul.mubr.f32.gmra.mxu0 %v1356
    %v1427 = vpop.f32.mrf.mxu0
    %v1428 = vadd.f32 0.0, %v1427
    %v1429 = vpop.f32.mrf.mxu0
    %1430 = vmatprep.mubr.f32.mxu0 0.0
    %1431 = vmatmul.mubr.f32.gmra.mxu0 %v1359
    %v1432 = vpop.f32.mrf.mxu0
    %v1433 = vadd.f32 0.0, %v1432
    %v1434 = vpop.f32.mrf.mxu0
    %1435 = vdwg.mxu0
    %v1436 = vadd.f32 %v786, %v1428
    %v1437 = vadd.f32 %v787, %v1433
    %s1438 = scalar_lea.vmem %s2, 64
    %v1439 = vld [vmem:[%s1438] sm:$0xff]
    %v1440 = vld [vmem:[%s1438 + $0x8] sm:$0xff]
    %v1441 = vld [vmem:[%s1438 + $0x10] sm:$0xff]
    %v1442 = vld [vmem:[%s1438 + $0x18] sm:$0xff]
    %1443 = vmatprep.subr.mxu0 0.0
    %1444 = vmatpush1.msra.mxu0 0.0
    %1445 = vmatprep.subr.mxu0 0.0
    %1446 = vmatpush1.msra.mxu0 0.0
    %1447 = vmatprep.subr.mxu0 0.0
    %1448 = vmatpush1.msra.mxu0 0.0
    %1449 = vmatprep.subr.mxu0 0.0
    %1450 = vmatpush1.msra.mxu0 0.0
    %1451 = vmatprep.subr.mxu0 0.0
    %1452 = vmatpush1.msra.mxu0 0.0
    %1453 = vmatprep.subr.mxu0 0.0
    %1454 = vmatpush1.msra.mxu0 0.0
    %1455 = vmatprep.subr.mxu0 0.0
    %1456 = vmatpush1.msra.mxu0 0.0
    %1457 = vmatprep.subr.mxu0 0.0
    %1458 = vmatpush1.msra.mxu0 0.0
    %1459 = vmatprep.subr.mxu0 0.0
    %1460 = vmatpush1.msra.mxu0 0.0
    %1461 = vmatprep.subr.mxu0 0.0
    %1462 = vmatpush1.msra.mxu0 0.0
    %1463 = vmatprep.subr.mxu0 0.0
    %1464 = vmatpush1.msra.mxu0 0.0
    %1465 = vmatprep.subr.mxu0 0.0
    %1466 = vmatpush1.msra.mxu0 0.0
    %1467 = vmatprep.subr.mxu0 0.0
    %1468 = vmatpush1.msra.mxu0 %v1442
    %1469 = vmatprep.subr.mxu0 0.0
    %1470 = vmatpush1.msra.mxu0 %v1441
    %1471 = vmatprep.subr.mxu0 0.0
    %1472 = vmatpush1.msra.mxu0 %v1440
    %1473 = vmatprep.subr.mxu0 0.0
    %1474 = vmatpush1.msra.mxu0 %v1439
    %1475 = vmatprep.subr.mxu0 0.0
    %1476 = vmatpush2.msra.mxu0 0.0
    %1477 = vmatprep.subr.mxu0 0.0
    %1478 = vmatpush2.msra.mxu0 0.0
    %1479 = vmatprep.subr.mxu0 0.0
    %1480 = vmatpush2.msra.mxu0 0.0
    %1481 = vmatprep.subr.mxu0 0.0
    %1482 = vmatpush2.msra.mxu0 0.0
    %1483 = vmatprep.subr.mxu0 0.0
    %1484 = vmatpush2.msra.mxu0 0.0
    %1485 = vmatprep.subr.mxu0 0.0
    %1486 = vmatpush2.msra.mxu0 0.0
    %1487 = vmatprep.subr.mxu0 0.0
    %1488 = vmatpush2.msra.mxu0 0.0
    %1489 = vmatprep.subr.mxu0 0.0
    %1490 = vmatpush2.msra.mxu0 0.0
    %1491 = vmatprep.subr.mxu0 0.0
    %1492 = vmatpush2.msra.mxu0 0.0
    %1493 = vmatprep.subr.mxu0 0.0
    %1494 = vmatpush2.msra.mxu0 0.0
    %1495 = vmatprep.subr.mxu0 0.0
    %1496 = vmatpush2.msra.mxu0 0.0
    %1497 = vmatprep.subr.mxu0 0.0
    %1498 = vmatpush2.msra.mxu0 0.0
    %1499 = vmatprep.subr.mxu0 0.0
    %1500 = vmatpush2.msra.mxu0 0.0
    %1501 = vmatprep.subr.mxu0 0.0
    %1502 = vmatpush2.msra.mxu0 0.0
    %1503 = vmatprep.subr.mxu0 0.0
    %1504 = vmatpush2.msra.mxu0 0.0
    %1505 = vmatprep.subr.mxu0 0.0
    %1506 = vmatpush2.msra.mxu0 0.0
    %1507 = vmatprep.mubr.f32.mxu0 0.0
    %1508 = vmatmul.mubr.f32.gmra.mxu0 %v141
    %v1509 = vpop.f32.mrf.mxu0
    %v1510 = vadd.f32 0.0, %v1509
    %v1511 = vpop.f32.mrf.mxu0
    %1512 = vmatprep.mubr.f32.mxu0 0.0
    %1513 = vmatmul.mubr.f32.gmra.mxu0 %v144
    %v1514 = vpop.f32.mrf.mxu0
    %v1515 = vadd.f32 0.0, %v1514
    %v1516 = vpop.f32.mrf.mxu0
    %1517 = vdwg.mxu0
    %s1518 = scalar_lea.vmem %s3, 64
    %v1519 = vld [vmem:[%s1518] sm:$0xff]
    %v1520 = vld [vmem:[%s1518 + $0x8] sm:$0xff]
    %v1521 = vld [vmem:[%s1518 + $0x10] sm:$0xff]
    %v1522 = vld [vmem:[%s1518 + $0x18] sm:$0xff]
    %1523 = vmatprep.subr.mxu0 0.0
    %1524 = vmatpush1.msra.mxu0 0.0
    %1525 = vmatprep.subr.mxu0 0.0
    %1526 = vmatpush1.msra.mxu0 0.0
    %1527 = vmatprep.subr.mxu0 0.0
    %1528 = vmatpush1.msra.mxu0 0.0
    %1529 = vmatprep.subr.mxu0 0.0
    %1530 = vmatpush1.msra.mxu0 0.0
    %1531 = vmatprep.subr.mxu0 0.0
    %1532 = vmatpush1.msra.mxu0 0.0
    %1533 = vmatprep.subr.mxu0 0.0
    %1534 = vmatpush1.msra.mxu0 0.0
    %1535 = vmatprep.subr.mxu0 0.0
    %1536 = vmatpush1.msra.mxu0 0.0
    %1537 = vmatprep.subr.mxu0 0.0
    %1538 = vmatpush1.msra.mxu0 0.0
    %1539 = vmatprep.subr.mxu0 0.0
    %1540 = vmatpush1.msra.mxu0 0.0
    %1541 = vmatprep.subr.mxu0 0.0
    %1542 = vmatpush1.msra.mxu0 0.0
    %1543 = vmatprep.subr.mxu0 0.0
    %1544 = vmatpush1.msra.mxu0 0.0
    %1545 = vmatprep.subr.mxu0 0.0
    %1546 = vmatpush1.msra.mxu0 0.0
    %1547 = vmatprep.subr.mxu0 0.0
    %1548 = vmatpush1.msra.mxu0 %v1522
    %1549 = vmatprep.subr.mxu0 0.0
    %1550 = vmatpush1.msra.mxu0 %v1521
    %1551 = vmatprep.subr.mxu0 0.0
    %1552 = vmatpush1.msra.mxu0 %v1520
    %1553 = vmatprep.subr.mxu0 0.0
    %1554 = vmatpush1.msra.mxu0 %v1519
    %1555 = vmatprep.subr.mxu0 0.0
    %1556 = vmatpush2.msra.mxu0 0.0
    %1557 = vmatprep.subr.mxu0 0.0
    %1558 = vmatpush2.msra.mxu0 0.0
    %1559 = vmatprep.subr.mxu0 0.0
    %1560 = vmatpush2.msra.mxu0 0.0
    %1561 = vmatprep.subr.mxu0 0.0
    %1562 = vmatpush2.msra.mxu0 0.0
    %1563 = vmatprep.subr.mxu0 0.0
    %1564 = vmatpush2.msra.mxu0 0.0
    %1565 = vmatprep.subr.mxu0 0.0
    %1566 = vmatpush2.msra.mxu0 0.0
    %1567 = vmatprep.subr.mxu0 0.0
    %1568 = vmatpush2.msra.mxu0 0.0
    %1569 = vmatprep.subr.mxu0 0.0
    %1570 = vmatpush2.msra.mxu0 0.0
    %1571 = vmatprep.subr.mxu0 0.0
    %1572 = vmatpush2.msra.mxu0 0.0
    %1573 = vmatprep.subr.mxu0 0.0
    %1574 = vmatpush2.msra.mxu0 0.0
    %1575 = vmatprep.subr.mxu0 0.0
    %1576 = vmatpush2.msra.mxu0 0.0
    %1577 = vmatprep.subr.mxu0 0.0
    %1578 = vmatpush2.msra.mxu0 0.0
    %1579 = vmatprep.subr.mxu0 0.0
    %1580 = vmatpush2.msra.mxu0 0.0
    %1581 = vmatprep.subr.mxu0 0.0
    %1582 = vmatpush2.msra.mxu0 0.0
    %1583 = vmatprep.subr.mxu0 0.0
    %1584 = vmatpush2.msra.mxu0 0.0
    %1585 = vmatprep.subr.mxu0 0.0
    %1586 = vmatpush2.msra.mxu0 0.0
    %1587 = vmatprep.mubr.f32.mxu0 0.0
    %1588 = vmatmul.mubr.f32.gmra.mxu0 %v141
    %v1589 = vpop.f32.mrf.mxu0
    %v1590 = vadd.f32 0.0, %v1589
    %v1591 = vpop.f32.mrf.mxu0
    %1592 = vmatprep.mubr.f32.mxu0 0.0
    %1593 = vmatmul.mubr.f32.gmra.mxu0 %v144
    %v1594 = vpop.f32.mrf.mxu0
    %v1595 = vadd.f32 0.0, %v1594
    %v1596 = vpop.f32.mrf.mxu0
    %1597 = vdwg.mxu0
    %s1598 = scalar_lea.vmem %s4, 64
    %v1599 = vld [vmem:[%s1598] sm:$0xff]
    %v1600 = vld [vmem:[%s1598 + $0x8] sm:$0xff]
    %v1601 = vld [vmem:[%s1598 + $0x10] sm:$0xff]
    %v1602 = vld [vmem:[%s1598 + $0x18] sm:$0xff]
    %1603 = vmatprep.subr.mxu0 0.0
    %1604 = vmatpush1.msra.mxu0 0.0
    %1605 = vmatprep.subr.mxu0 0.0
    %1606 = vmatpush1.msra.mxu0 0.0
    %1607 = vmatprep.subr.mxu0 0.0
    %1608 = vmatpush1.msra.mxu0 0.0
    %1609 = vmatprep.subr.mxu0 0.0
    %1610 = vmatpush1.msra.mxu0 0.0
    %1611 = vmatprep.subr.mxu0 0.0
    %1612 = vmatpush1.msra.mxu0 0.0
    %1613 = vmatprep.subr.mxu0 0.0
    %1614 = vmatpush1.msra.mxu0 0.0
    %1615 = vmatprep.subr.mxu0 0.0
    %1616 = vmatpush1.msra.mxu0 0.0
    %1617 = vmatprep.subr.mxu0 0.0
    %1618 = vmatpush1.msra.mxu0 0.0
    %1619 = vmatprep.subr.mxu0 0.0
    %1620 = vmatpush1.msra.mxu0 0.0
    %1621 = vmatprep.subr.mxu0 0.0
    %1622 = vmatpush1.msra.mxu0 0.0
    %1623 = vmatprep.subr.mxu0 0.0
    %1624 = vmatpush1.msra.mxu0 0.0
    %1625 = vmatprep.subr.mxu0 0.0
    %1626 = vmatpush1.msra.mxu0 0.0
    %1627 = vmatprep.subr.mxu0 0.0
    %1628 = vmatpush1.msra.mxu0 %v1602
    %1629 = vmatprep.subr.mxu0 0.0
    %1630 = vmatpush1.msra.mxu0 %v1601
    %1631 = vmatprep.subr.mxu0 0.0
    %1632 = vmatpush1.msra.mxu0 %v1600
    %1633 = vmatprep.subr.mxu0 0.0
    %1634 = vmatpush1.msra.mxu0 %v1599
    %1635 = vmatprep.subr.mxu0 0.0
    %1636 = vmatpush2.msra.mxu0 0.0
    %1637 = vmatprep.subr.mxu0 0.0
    %1638 = vmatpush2.msra.mxu0 0.0
    %1639 = vmatprep.subr.mxu0 0.0
    %1640 = vmatpush2.msra.mxu0 0.0
    %1641 = vmatprep.subr.mxu0 0.0
    %1642 = vmatpush2.msra.mxu0 0.0
    %1643 = vmatprep.subr.mxu0 0.0
    %1644 = vmatpush2.msra.mxu0 0.0
    %1645 = vmatprep.subr.mxu0 0.0
    %1646 = vmatpush2.msra.mxu0 0.0
    %1647 = vmatprep.subr.mxu0 0.0
    %1648 = vmatpush2.msra.mxu0 0.0
    %1649 = vmatprep.subr.mxu0 0.0
    %1650 = vmatpush2.msra.mxu0 0.0
    %1651 = vmatprep.subr.mxu0 0.0
    %1652 = vmatpush2.msra.mxu0 0.0
    %1653 = vmatprep.subr.mxu0 0.0
    %1654 = vmatpush2.msra.mxu0 0.0
    %1655 = vmatprep.subr.mxu0 0.0
    %1656 = vmatpush2.msra.mxu0 0.0
    %1657 = vmatprep.subr.mxu0 0.0
    %1658 = vmatpush2.msra.mxu0 0.0
    %1659 = vmatprep.subr.mxu0 0.0
    %1660 = vmatpush2.msra.mxu0 0.0
    %1661 = vmatprep.subr.mxu0 0.0
    %1662 = vmatpush2.msra.mxu0 0.0
    %1663 = vmatprep.subr.mxu0 0.0
    %1664 = vmatpush2.msra.mxu0 0.0
    %1665 = vmatprep.subr.mxu0 0.0
    %1666 = vmatpush2.msra.mxu0 0.0
    %1667 = vmatprep.mubr.f32.mxu0 0.0
    %1668 = vmatmul.mubr.f32.gmra.mxu0 %v56
    %v1669 = vpop.f32.mrf.mxu0
    %v1670 = vadd.f32 0.0, %v1669
    %v1671 = vpop.f32.mrf.mxu0
    %1672 = vmatprep.mubr.f32.mxu0 0.0
    %1673 = vmatmul.mubr.f32.gmra.mxu0 %v59
    %v1674 = vpop.f32.mrf.mxu0
    %v1675 = vadd.f32 0.0, %v1674
    %v1676 = vpop.f32.mrf.mxu0
    %1677 = vdwg.mxu0
    %v1679 = vsel %vm379, %v1670, 0
    %v1682 = vsel %vm379, %v1510, 0
    %1684 = vmatprep.subr.mxu0 0.0
    %1685 = vmatpush1.xpose.msra.mxu0 0.0
    %1686 = vmatprep.subr.mxu0 0.0
    %1687 = vmatpush1.xpose.msra.mxu0 0.0
    %1688 = vmatprep.subr.mxu0 0.0
    %1689 = vmatpush1.xpose.msra.mxu0 0.0
    %1690 = vmatprep.subr.mxu0 0.0
    %1691 = vmatpush1.xpose.msra.mxu0 0.0
    %1692 = vmatprep.subr.mxu0 0.0
    %1693 = vmatpush1.xpose.msra.mxu0 0.0
    %1694 = vmatprep.subr.mxu0 0.0
    %1695 = vmatpush1.xpose.msra.mxu0 0.0
    %1696 = vmatprep.subr.mxu0 0.0
    %1697 = vmatpush1.xpose.msra.mxu0 0.0
    %1698 = vmatprep.subr.mxu0 0.0
    %1699 = vmatpush1.xpose.msra.mxu0 0.0
    %1700 = vmatprep.subr.mxu0 0.0
    %1701 = vmatpush1.xpose.msra.mxu0 0.0
    %1702 = vmatprep.subr.mxu0 0.0
    %1703 = vmatpush1.xpose.msra.mxu0 0.0
    %1704 = vmatprep.subr.mxu0 0.0
    %1705 = vmatpush1.xpose.msra.mxu0 0.0
    %1706 = vmatprep.subr.mxu0 0.0
    %1707 = vmatpush1.xpose.msra.mxu0 0.0
    %1708 = vmatprep.subr.mxu0 0.0
    %1709 = vmatpush1.xpose.msra.mxu0 0.0
    %1710 = vmatprep.subr.mxu0 0.0
    %1711 = vmatpush1.xpose.msra.mxu0 0.0
    %1712 = vmatprep.subr.mxu0 0.0
    %1713 = vmatpush1.xpose.msra.mxu0 0.0
    %1714 = vmatprep.subr.mxu0 0.0
    %1715 = vmatpush1.xpose.msra.mxu0 %v1682
    %1716 = vmatprep.subr.mxu0 0.0
    %1717 = vmatpush2.xpose.msra.mxu0 0.0
    %1718 = vmatprep.subr.mxu0 0.0
    %1719 = vmatpush2.xpose.msra.mxu0 0.0
    %1720 = vmatprep.subr.mxu0 0.0
    %1721 = vmatpush2.xpose.msra.mxu0 0.0
    %1722 = vmatprep.subr.mxu0 0.0
    %1723 = vmatpush2.xpose.msra.mxu0 0.0
    %1724 = vmatprep.subr.mxu0 0.0
    %1725 = vmatpush2.xpose.msra.mxu0 0.0
    %1726 = vmatprep.subr.mxu0 0.0
    %1727 = vmatpush2.xpose.msra.mxu0 0.0
    %1728 = vmatprep.subr.mxu0 0.0
    %1729 = vmatpush2.xpose.msra.mxu0 0.0
    %1730 = vmatprep.subr.mxu0 0.0
    %1731 = vmatpush2.xpose.msra.mxu0 0.0
    %1732 = vmatprep.subr.mxu0 0.0
    %1733 = vmatpush2.xpose.msra.mxu0 0.0
    %1734 = vmatprep.subr.mxu0 0.0
    %1735 = vmatpush2.xpose.msra.mxu0 0.0
    %1736 = vmatprep.subr.mxu0 0.0
    %1737 = vmatpush2.xpose.msra.mxu0 0.0
    %1738 = vmatprep.subr.mxu0 0.0
    %1739 = vmatpush2.xpose.msra.mxu0 0.0
    %1740 = vmatprep.subr.mxu0 0.0
    %1741 = vmatpush2.xpose.msra.mxu0 0.0
    %1742 = vmatprep.subr.mxu0 0.0
    %1743 = vmatpush2.xpose.msra.mxu0 0.0
    %1744 = vmatprep.subr.mxu0 0.0
    %1745 = vmatpush2.xpose.msra.mxu0 0.0
    %1746 = vmatprep.subr.mxu0 0.0
    %1747 = vmatpush2.xpose.msra.mxu0 0.0
    %1748 = vmatprep.mubr.f32.mxu0 0.0
    %1749 = vmatmul.mubr.f32.gmra.mxu0 %v1679
    %v1750 = vpop.f32.mrf.mxu0
    %v1751 = vadd.f32 0.0, %v1750
    %v1752 = vpop.f32.mrf.mxu0
    %1753 = vdwg.mxu0
    %v1755 = vsel %vm379, %v1675, 0
    %v1758 = vsel %vm379, %v1515, 0
    %1760 = vmatprep.subr.mxu0 0.0
    %1761 = vmatpush1.xpose.msra.mxu0 0.0
    %1762 = vmatprep.subr.mxu0 0.0
    %1763 = vmatpush1.xpose.msra.mxu0 0.0
    %1764 = vmatprep.subr.mxu0 0.0
    %1765 = vmatpush1.xpose.msra.mxu0 0.0
    %1766 = vmatprep.subr.mxu0 0.0
    %1767 = vmatpush1.xpose.msra.mxu0 0.0
    %1768 = vmatprep.subr.mxu0 0.0
    %1769 = vmatpush1.xpose.msra.mxu0 0.0
    %1770 = vmatprep.subr.mxu0 0.0
    %1771 = vmatpush1.xpose.msra.mxu0 0.0
    %1772 = vmatprep.subr.mxu0 0.0
    %1773 = vmatpush1.xpose.msra.mxu0 0.0
    %1774 = vmatprep.subr.mxu0 0.0
    %1775 = vmatpush1.xpose.msra.mxu0 0.0
    %1776 = vmatprep.subr.mxu0 0.0
    %1777 = vmatpush1.xpose.msra.mxu0 0.0
    %1778 = vmatprep.subr.mxu0 0.0
    %1779 = vmatpush1.xpose.msra.mxu0 0.0
    %1780 = vmatprep.subr.mxu0 0.0
    %1781 = vmatpush1.xpose.msra.mxu0 0.0
    %1782 = vmatprep.subr.mxu0 0.0
    %1783 = vmatpush1.xpose.msra.mxu0 0.0
    %1784 = vmatprep.subr.mxu0 0.0
    %1785 = vmatpush1.xpose.msra.mxu0 0.0
    %1786 = vmatprep.subr.mxu0 0.0
    %1787 = vmatpush1.xpose.msra.mxu0 0.0
    %1788 = vmatprep.subr.mxu0 0.0
    %1789 = vmatpush1.xpose.msra.mxu0 0.0
    %1790 = vmatprep.subr.mxu0 0.0
    %1791 = vmatpush1.xpose.msra.mxu0 %v1758
    %1792 = vmatprep.subr.mxu0 0.0
    %1793 = vmatpush2.xpose.msra.mxu0 0.0
    %1794 = vmatprep.subr.mxu0 0.0
    %1795 = vmatpush2.xpose.msra.mxu0 0.0
    %1796 = vmatprep.subr.mxu0 0.0
    %1797 = vmatpush2.xpose.msra.mxu0 0.0
    %1798 = vmatprep.subr.mxu0 0.0
    %1799 = vmatpush2.xpose.msra.mxu0 0.0
    %1800 = vmatprep.subr.mxu0 0.0
    %1801 = vmatpush2.xpose.msra.mxu0 0.0
    %1802 = vmatprep.subr.mxu0 0.0
    %1803 = vmatpush2.xpose.msra.mxu0 0.0
    %1804 = vmatprep.subr.mxu0 0.0
    %1805 = vmatpush2.xpose.msra.mxu0 0.0
    %1806 = vmatprep.subr.mxu0 0.0
    %1807 = vmatpush2.xpose.msra.mxu0 0.0
    %1808 = vmatprep.subr.mxu0 0.0
    %1809 = vmatpush2.xpose.msra.mxu0 0.0
    %1810 = vmatprep.subr.mxu0 0.0
    %1811 = vmatpush2.xpose.msra.mxu0 0.0
    %1812 = vmatprep.subr.mxu0 0.0
    %1813 = vmatpush2.xpose.msra.mxu0 0.0
    %1814 = vmatprep.subr.mxu0 0.0
    %1815 = vmatpush2.xpose.msra.mxu0 0.0
    %1816 = vmatprep.subr.mxu0 0.0
    %1817 = vmatpush2.xpose.msra.mxu0 0.0
    %1818 = vmatprep.subr.mxu0 0.0
    %1819 = vmatpush2.xpose.msra.mxu0 0.0
    %1820 = vmatprep.subr.mxu0 0.0
    %1821 = vmatpush2.xpose.msra.mxu0 0.0
    %1822 = vmatprep.subr.mxu0 0.0
    %1823 = vmatpush2.xpose.msra.mxu0 0.0
    %1824 = vmatprep.mubr.f32.mxu0 0.0
    %1825 = vmatmul.mubr.f32.gmra.mxu0 %v1755
    %v1826 = vpop.f32.mrf.mxu0
    %v1827 = vadd.f32 0.0, %v1826
    %v1828 = vpop.f32.mrf.mxu0
    %1829 = vdwg.mxu0
    %v1830 = vmul.f32 %v1751, 0.35355338
    %v1831 = vmul.f32 %v1827, 0.35355338
    %v1832 = vsel %vm379, %v1830, -inf
    %1833 = vmax.xlane.f32.xlu0 %v1832
    %v1834 = vpop.xlane.xlu0 %1833
    %v1835 = vsel %vm379, %v1831, -inf
    %1836 = vmax.xlane.f32.xlu0 %v1835
    %v1837 = vpop.xlane.xlu0 %1836
    %v1838 = vsub.f32 %v1830, %v1834
    %v1839 = vsub.f32 %v1831, %v1837
    %v1840 = vmul.f32 %v1838, 1.442695
    %v1841 = vpow.pop %v1840
    %v1842 = vmul.f32 %v1839, 1.442695
    %v1843 = vpow.pop %v1842
    %v1844 = vsel %vm379, %v1841, 0.0
    %1845 = vadd.xlane.f32.xlu0 %v1844
    %v1846 = vpop.xlane.xlu0 %1845
    %v1847 = vsel %vm379, %v1843, 0.0
    %1848 = vadd.xlane.f32.xlu0 %v1847
    %v1849 = vpop.xlane.xlu0 %1848
    %v1850 = vrcp.pop %v1846
    %v1851 = vrcp.pop %v1849
    %v1852 = vmul.f32 %v1841, %v1850
    %v1853 = vmul.f32 %v1843, %v1851
    %s1854 = scalar_lea.vmem [#allocation4], 32
    %1855 = vst.msk [vmem:[%s1854] sm:$0xff] %vm379, %v1852
    %1856 = vst.msk [vmem:[%s1854 + $0x8] sm:$0xff] %vm379, %v1853
    %v1858 = vsel %vm379, %v1852, 0
    %1860 = vmatprep.subr.mxu0 0.0
    %1861 = vmatpush1.msra.mxu0 0.0
    %1862 = vmatprep.subr.mxu0 0.0
    %1863 = vmatpush1.msra.mxu0 0.0
    %1864 = vmatprep.subr.mxu0 0.0
    %1865 = vmatpush1.msra.mxu0 0.0
    %1866 = vmatprep.subr.mxu0 0.0
    %1867 = vmatpush1.msra.mxu0 0.0
    %1868 = vmatprep.subr.mxu0 0.0
    %1869 = vmatpush1.msra.mxu0 0.0
    %1870 = vmatprep.subr.mxu0 0.0
    %1871 = vmatpush1.msra.mxu0 0.0
    %1872 = vmatprep.subr.mxu0 0.0
    %1873 = vmatpush1.msra.mxu0 0.0
    %1874 = vmatprep.subr.mxu0 0.0
    %1875 = vmatpush1.msra.mxu0 0.0
    %1876 = vmatprep.subr.mxu0 0.0
    %1877 = vmatpush1.msra.mxu0 0.0
    %1878 = vmatprep.subr.mxu0 0.0
    %1879 = vmatpush1.msra.mxu0 0.0
    %1880 = vmatprep.subr.mxu0 0.0
    %1881 = vmatpush1.msra.mxu0 0.0
    %1882 = vmatprep.subr.mxu0 0.0
    %1883 = vmatpush1.msra.mxu0 0.0
    %1884 = vmatprep.subr.mxu0 0.0
    %1885 = vmatpush1.msra.mxu0 0.0
    %1886 = vmatprep.subr.mxu0 0.0
    %1887 = vmatpush1.msra.mxu0 0.0
    %1888 = vmatprep.subr.mxu0 0.0
    %1889 = vmatpush1.msra.mxu0 0.0
    %1890 = vmatprep.subr.mxu0 0.0
    %1891 = vmatpush1.msra.mxu0 %v1590
    %1892 = vmatprep.subr.mxu0 0.0
    %1893 = vmatpush2.msra.mxu0 0.0
    %1894 = vmatprep.subr.mxu0 0.0
    %1895 = vmatpush2.msra.mxu0 0.0
    %1896 = vmatprep.subr.mxu0 0.0
    %1897 = vmatpush2.msra.mxu0 0.0
    %1898 = vmatprep.subr.mxu0 0.0
    %1899 = vmatpush2.msra.mxu0 0.0
    %1900 = vmatprep.subr.mxu0 0.0
    %1901 = vmatpush2.msra.mxu0 0.0
    %1902 = vmatprep.subr.mxu0 0.0
    %1903 = vmatpush2.msra.mxu0 0.0
    %1904 = vmatprep.subr.mxu0 0.0
    %1905 = vmatpush2.msra.mxu0 0.0
    %1906 = vmatprep.subr.mxu0 0.0
    %1907 = vmatpush2.msra.mxu0 0.0
    %1908 = vmatprep.subr.mxu0 0.0
    %1909 = vmatpush2.msra.mxu0 0.0
    %1910 = vmatprep.subr.mxu0 0.0
    %1911 = vmatpush2.msra.mxu0 0.0
    %1912 = vmatprep.subr.mxu0 0.0
    %1913 = vmatpush2.msra.mxu0 0.0
    %1914 = vmatprep.subr.mxu0 0.0
    %1915 = vmatpush2.msra.mxu0 0.0
    %1916 = vmatprep.subr.mxu0 0.0
    %1917 = vmatpush2.msra.mxu0 0.0
    %1918 = vmatprep.subr.mxu0 0.0
    %1919 = vmatpush2.msra.mxu0 0.0
    %1920 = vmatprep.subr.mxu0 0.0
    %1921 = vmatpush2.msra.mxu0 0.0
    %1922 = vmatprep.subr.mxu0 0.0
    %1923 = vmatpush2.msra.mxu0 0.0
    %1924 = vmatprep.mubr.f32.mxu0 0.0
    %1925 = vmatmul.mubr.f32.gmra.mxu0 %v1858
    %v1926 = vpop.f32.mrf.mxu0
    %v1927 = vadd.f32 0.0, %v1926
    %v1928 = vpop.f32.mrf.mxu0
    %1929 = vdwg.mxu0
    %v1931 = vsel %vm379, %v1853, 0
    %1933 = vmatprep.subr.mxu0 0.0
    %1934 = vmatpush1.msra.mxu0 0.0
    %1935 = vmatprep.subr.mxu0 0.0
    %1936 = vmatpush1.msra.mxu0 0.0
    %1937 = vmatprep.subr.mxu0 0.0
    %1938 = vmatpush1.msra.mxu0 0.0
    %1939 = vmatprep.subr.mxu0 0.0
    %1940 = vmatpush1.msra.mxu0 0.0
    %1941 = vmatprep.subr.mxu0 0.0
    %1942 = vmatpush1.msra.mxu0 0.0
    %1943 = vmatprep.subr.mxu0 0.0
    %1944 = vmatpush1.msra.mxu0 0.0
    %1945 = vmatprep.subr.mxu0 0.0
    %1946 = vmatpush1.msra.mxu0 0.0
    %1947 = vmatprep.subr.mxu0 0.0
    %1948 = vmatpush1.msra.mxu0 0.0
    %1949 = vmatprep.subr.mxu0 0.0
    %1950 = vmatpush1.msra.mxu0 0.0
    %1951 = vmatprep.subr.mxu0 0.0
    %1952 = vmatpush1.msra.mxu0 0.0
    %1953 = vmatprep.subr.mxu0 0.0
    %1954 = vmatpush1.msra.mxu0 0.0
    %1955 = vmatprep.subr.mxu0 0.0
    %1956 = vmatpush1.msra.mxu0 0.0
    %1957 = vmatprep.subr.mxu0 0.0
    %1958 = vmatpush1.msra.mxu0 0.0
    %1959 = vmatprep.subr.mxu0 0.0
    %1960 = vmatpush1.msra.mxu0 0.0
    %1961 = vmatprep.subr.mxu0 0.0
    %1962 = vmatpush1.msra.mxu0 0.0
    %1963 = vmatprep.subr.mxu0 0.0
    %1964 = vmatpush1.msra.mxu0 %v1595
    %1965 = vmatprep.subr.mxu0 0.0
    %1966 = vmatpush2.msra.mxu0 0.0
    %1967 = vmatprep.subr.mxu0 0.0
    %1968 = vmatpush2.msra.mxu0 0.0
    %1969 = vmatprep.subr.mxu0 0.0
    %1970 = vmatpush2.msra.mxu0 0.0
    %1971 = vmatprep.subr.mxu0 0.0
    %1972 = vmatpush2.msra.mxu0 0.0
    %1973 = vmatprep.subr.mxu0 0.0
    %1974 = vmatpush2.msra.mxu0 0.0
    %1975 = vmatprep.subr.mxu0 0.0
    %1976 = vmatpush2.msra.mxu0 0.0
    %1977 = vmatprep.subr.mxu0 0.0
    %1978 = vmatpush2.msra.mxu0 0.0
    %1979 = vmatprep.subr.mxu0 0.0
    %1980 = vmatpush2.msra.mxu0 0.0
    %1981 = vmatprep.subr.mxu0 0.0
    %1982 = vmatpush2.msra.mxu0 0.0
    %1983 = vmatprep.subr.mxu0 0.0
    %1984 = vmatpush2.msra.mxu0 0.0
    %1985 = vmatprep.subr.mxu0 0.0
    %1986 = vmatpush2.msra.mxu0 0.0
    %1987 = vmatprep.subr.mxu0 0.0
    %1988 = vmatpush2.msra.mxu0 0.0
    %1989 = vmatprep.subr.mxu0 0.0
    %1990 = vmatpush2.msra.mxu0 0.0
    %1991 = vmatprep.subr.mxu0 0.0
    %1992 = vmatpush2.msra.mxu0 0.0
    %1993 = vmatprep.subr.mxu0 0.0
    %1994 = vmatpush2.msra.mxu0 0.0
    %1995 = vmatprep.subr.mxu0 0.0
    %1996 = vmatpush2.msra.mxu0 0.0
    %1997 = vmatprep.mubr.f32.mxu0 0.0
    %1998 = vmatmul.mubr.f32.gmra.mxu0 %v1931
    %v1999 = vpop.f32.mrf.mxu0
    %v2000 = vadd.f32 0.0, %v1999
    %v2001 = vpop.f32.mrf.mxu0
    %2002 = vdwg.mxu0
    %s2003 = scalar_lea.vmem %s6, 16
    %v2004 = vld [vmem:[%s2003] sm:$0xff]
    %v2006 = vsel %vm379, %v1927, 0
    %v2009 = vsel %vm379, %v2000, 0
    %2011 = vmatprep.subr.mxu0 0.0
    %2012 = vmatpush1.msra.mxu0 0.0
    %2013 = vmatprep.subr.mxu0 0.0
    %2014 = vmatpush1.msra.mxu0 0.0
    %2015 = vmatprep.subr.mxu0 0.0
    %2016 = vmatpush1.msra.mxu0 0.0
    %2017 = vmatprep.subr.mxu0 0.0
    %2018 = vmatpush1.msra.mxu0 0.0
    %2019 = vmatprep.subr.mxu0 0.0
    %2020 = vmatpush1.msra.mxu0 0.0
    %2021 = vmatprep.subr.mxu0 0.0
    %2022 = vmatpush1.msra.mxu0 0.0
    %2023 = vmatprep.subr.mxu0 0.0
    %2024 = vmatpush1.msra.mxu0 0.0
    %2025 = vmatprep.subr.mxu0 0.0
    %2026 = vmatpush1.msra.mxu0 0.0
    %2027 = vmatprep.subr.mxu0 0.0
    %2028 = vmatpush1.msra.mxu0 0.0
    %2029 = vmatprep.subr.mxu0 0.0
    %2030 = vmatpush1.msra.mxu0 0.0
    %2031 = vmatprep.subr.mxu0 0.0
    %2032 = vmatpush1.msra.mxu0 0.0
    %2033 = vmatprep.subr.mxu0 0.0
    %2034 = vmatpush1.msra.mxu0 0.0
    %2035 = vmatprep.subr.mxu0 0.0
    %2036 = vmatpush1.msra.mxu0 0.0
    %2037 = vmatprep.subr.mxu0 0.0
    %2038 = vmatpush1.msra.mxu0 0.0
    %2039 = vmatprep.subr.mxu0 0.0
    %2040 = vmatpush1.msra.mxu0 0.0
    %2041 = vmatprep.subr.mxu0 0.0
    %2042 = vmatpush1.msra.mxu0 %v2004
    %2043 = vmatprep.subr.mxu0 0.0
    %2044 = vmatpush2.msra.mxu0 0.0
    %2045 = vmatprep.subr.mxu0 0.0
    %2046 = vmatpush2.msra.mxu0 0.0
    %2047 = vmatprep.subr.mxu0 0.0
    %2048 = vmatpush2.msra.mxu0 0.0
    %2049 = vmatprep.subr.mxu0 0.0
    %2050 = vmatpush2.msra.mxu0 0.0
    %2051 = vmatprep.subr.mxu0 0.0
    %2052 = vmatpush2.msra.mxu0 0.0
    %2053 = vmatprep.subr.mxu0 0.0
    %2054 = vmatpush2.msra.mxu0 0.0
    %2055 = vmatprep.subr.mxu0 0.0
    %2056 = vmatpush2.msra.mxu0 0.0
    %2057 = vmatprep.subr.mxu0 0.0
    %2058 = vmatpush2.msra.mxu0 0.0
    %2059 = vmatprep.subr.mxu0 0.0
    %2060 = vmatpush2.msra.mxu0 0.0
    %2061 = vmatprep.subr.mxu0 0.0
    %2062 = vmatpush2.msra.mxu0 0.0
    %2063 = vmatprep.subr.mxu0 0.0
    %2064 = vmatpush2.msra.mxu0 0.0
    %2065 = vmatprep.subr.mxu0 0.0
    %2066 = vmatpush2.msra.mxu0 0.0
    %2067 = vmatprep.subr.mxu0 0.0
    %2068 = vmatpush2.msra.mxu0 0.0
    %2069 = vmatprep.subr.mxu0 0.0
    %2070 = vmatpush2.msra.mxu0 0.0
    %2071 = vmatprep.subr.mxu0 0.0
    %2072 = vmatpush2.msra.mxu0 0.0
    %2073 = vmatprep.subr.mxu0 0.0
    %2074 = vmatpush2.msra.mxu0 0.0
    %2075 = vmatprep.mubr.f32.mxu0 0.0
    %2076 = vmatmul.mubr.f32.gmra.mxu0 %v2006
    %v2077 = vpop.f32.mrf.mxu0
    %v2078 = vadd.f32 0.0, %v2077
    %v2079 = vpop.f32.mrf.mxu0
    %2080 = vmatprep.mubr.f32.mxu0 0.0
    %2081 = vmatmul.mubr.f32.gmra.mxu0 %v2009
    %v2082 = vpop.f32.mrf.mxu0
    %v2083 = vadd.f32 0.0, %v2082
    %v2084 = vpop.f32.mrf.mxu0
    %2085 = vdwg.mxu0
    %v2086 = vadd.f32 %v1436, %v2078
    %v2087 = vadd.f32 %v1437, %v2083
    %s2088 = scalar_lea.vmem %s2, 96
    %v2089 = vld [vmem:[%s2088] sm:$0xff]
    %v2090 = vld [vmem:[%s2088 + $0x8] sm:$0xff]
    %v2091 = vld [vmem:[%s2088 + $0x10] sm:$0xff]
    %v2092 = vld [vmem:[%s2088 + $0x18] sm:$0xff]
    %2093 = vmatprep.subr.mxu0 0.0
    %2094 = vmatpush1.msra.mxu0 0.0
    %2095 = vmatprep.subr.mxu0 0.0
    %2096 = vmatpush1.msra.mxu0 0.0
    %2097 = vmatprep.subr.mxu0 0.0
    %2098 = vmatpush1.msra.mxu0 0.0
    %2099 = vmatprep.subr.mxu0 0.0
    %2100 = vmatpush1.msra.mxu0 0.0
    %2101 = vmatprep.subr.mxu0 0.0
    %2102 = vmatpush1.msra.mxu0 0.0
    %2103 = vmatprep.subr.mxu0 0.0
    %2104 = vmatpush1.msra.mxu0 0.0
    %2105 = vmatprep.subr.mxu0 0.0
    %2106 = vmatpush1.msra.mxu0 0.0
    %2107 = vmatprep.subr.mxu0 0.0
    %2108 = vmatpush1.msra.mxu0 0.0
    %2109 = vmatprep.subr.mxu0 0.0
    %2110 = vmatpush1.msra.mxu0 0.0
    %2111 = vmatprep.subr.mxu0 0.0
    %2112 = vmatpush1.msra.mxu0 0.0
    %2113 = vmatprep.subr.mxu0 0.0
    %2114 = vmatpush1.msra.mxu0 0.0
    %2115 = vmatprep.subr.mxu0 0.0
    %2116 = vmatpush1.msra.mxu0 0.0
    %2117 = vmatprep.subr.mxu0 0.0
    %2118 = vmatpush1.msra.mxu0 %v2092
    %2119 = vmatprep.subr.mxu0 0.0
    %2120 = vmatpush1.msra.mxu0 %v2091
    %2121 = vmatprep.subr.mxu0 0.0
    %2122 = vmatpush1.msra.mxu0 %v2090
    %2123 = vmatprep.subr.mxu0 0.0
    %2124 = vmatpush1.msra.mxu0 %v2089
    %2125 = vmatprep.subr.mxu0 0.0
    %2126 = vmatpush2.msra.mxu0 0.0
    %2127 = vmatprep.subr.mxu0 0.0
    %2128 = vmatpush2.msra.mxu0 0.0
    %2129 = vmatprep.subr.mxu0 0.0
    %2130 = vmatpush2.msra.mxu0 0.0
    %2131 = vmatprep.subr.mxu0 0.0
    %2132 = vmatpush2.msra.mxu0 0.0
    %2133 = vmatprep.subr.mxu0 0.0
    %2134 = vmatpush2.msra.mxu0 0.0
    %2135 = vmatprep.subr.mxu0 0.0
    %2136 = vmatpush2.msra.mxu0 0.0
    %2137 = vmatprep.subr.mxu0 0.0
    %2138 = vmatpush2.msra.mxu0 0.0
    %2139 = vmatprep.subr.mxu0 0.0
    %2140 = vmatpush2.msra.mxu0 0.0
    %2141 = vmatprep.subr.mxu0 0.0
    %2142 = vmatpush2.msra.mxu0 0.0
    %2143 = vmatprep.subr.mxu0 0.0
    %2144 = vmatpush2.msra.mxu0 0.0
    %2145 = vmatprep.subr.mxu0 0.0
    %2146 = vmatpush2.msra.mxu0 0.0
    %2147 = vmatprep.subr.mxu0 0.0
    %2148 = vmatpush2.msra.mxu0 0.0
    %2149 = vmatprep.subr.mxu0 0.0
    %2150 = vmatpush2.msra.mxu0 0.0
    %2151 = vmatprep.subr.mxu0 0.0
    %2152 = vmatpush2.msra.mxu0 0.0
    %2153 = vmatprep.subr.mxu0 0.0
    %2154 = vmatpush2.msra.mxu0 0.0
    %2155 = vmatprep.subr.mxu0 0.0
    %2156 = vmatpush2.msra.mxu0 0.0
    %2157 = vmatprep.mubr.f32.mxu0 0.0
    %2158 = vmatmul.mubr.f32.gmra.mxu0 %v141
    %v2159 = vpop.f32.mrf.mxu0
    %v2160 = vadd.f32 0.0, %v2159
    %v2161 = vpop.f32.mrf.mxu0
    %2162 = vmatprep.mubr.f32.mxu0 0.0
    %2163 = vmatmul.mubr.f32.gmra.mxu0 %v144
    %v2164 = vpop.f32.mrf.mxu0
    %v2165 = vadd.f32 0.0, %v2164
    %v2166 = vpop.f32.mrf.mxu0
    %2167 = vdwg.mxu0
    %s2168 = scalar_lea.vmem %s3, 96
    %v2169 = vld [vmem:[%s2168] sm:$0xff]
    %v2170 = vld [vmem:[%s2168 + $0x8] sm:$0xff]
    %v2171 = vld [vmem:[%s2168 + $0x10] sm:$0xff]
    %v2172 = vld [vmem:[%s2168 + $0x18] sm:$0xff]
    %2173 = vmatprep.subr.mxu0 0.0
    %2174 = vmatpush1.msra.mxu0 0.0
    %2175 = vmatprep.subr.mxu0 0.0
    %2176 = vmatpush1.msra.mxu0 0.0
    %2177 = vmatprep.subr.mxu0 0.0
    %2178 = vmatpush1.msra.mxu0 0.0
    %2179 = vmatprep.subr.mxu0 0.0
    %2180 = vmatpush1.msra.mxu0 0.0
    %2181 = vmatprep.subr.mxu0 0.0
    %2182 = vmatpush1.msra.mxu0 0.0
    %2183 = vmatprep.subr.mxu0 0.0
    %2184 = vmatpush1.msra.mxu0 0.0
    %2185 = vmatprep.subr.mxu0 0.0
    %2186 = vmatpush1.msra.mxu0 0.0
    %2187 = vmatprep.subr.mxu0 0.0
    %2188 = vmatpush1.msra.mxu0 0.0
    %2189 = vmatprep.subr.mxu0 0.0
    %2190 = vmatpush1.msra.mxu0 0.0
    %2191 = vmatprep.subr.mxu0 0.0
    %2192 = vmatpush1.msra.mxu0 0.0
    %2193 = vmatprep.subr.mxu0 0.0
    %2194 = vmatpush1.msra.mxu0 0.0
    %2195 = vmatprep.subr.mxu0 0.0
    %2196 = vmatpush1.msra.mxu0 0.0
    %2197 = vmatprep.subr.mxu0 0.0
    %2198 = vmatpush1.msra.mxu0 %v2172
    %2199 = vmatprep.subr.mxu0 0.0
    %2200 = vmatpush1.msra.mxu0 %v2171
    %2201 = vmatprep.subr.mxu0 0.0
    %2202 = vmatpush1.msra.mxu0 %v2170
    %2203 = vmatprep.subr.mxu0 0.0
    %2204 = vmatpush1.msra.mxu0 %v2169
    %2205 = vmatprep.subr.mxu0 0.0
    %2206 = vmatpush2.msra.mxu0 0.0
    %2207 = vmatprep.subr.mxu0 0.0
    %2208 = vmatpush2.msra.mxu0 0.0
    %2209 = vmatprep.subr.mxu0 0.0
    %2210 = vmatpush2.msra.mxu0 0.0
    %2211 = vmatprep.subr.mxu0 0.0
    %2212 = vmatpush2.msra.mxu0 0.0
    %2213 = vmatprep.subr.mxu0 0.0
    %2214 = vmatpush2.msra.mxu0 0.0
    %2215 = vmatprep.subr.mxu0 0.0
    %2216 = vmatpush2.msra.mxu0 0.0
    %2217 = vmatprep.subr.mxu0 0.0
    %2218 = vmatpush2.msra.mxu0 0.0
    %2219 = vmatprep.subr.mxu0 0.0
    %2220 = vmatpush2.msra.mxu0 0.0
    %2221 = vmatprep.subr.mxu0 0.0
    %2222 = vmatpush2.msra.mxu0 0.0
    %2223 = vmatprep.subr.mxu0 0.0
    %2224 = vmatpush2.msra.mxu0 0.0
    %2225 = vmatprep.subr.mxu0 0.0
    %2226 = vmatpush2.msra.mxu0 0.0
    %2227 = vmatprep.subr.mxu0 0.0
    %2228 = vmatpush2.msra.mxu0 0.0
    %2229 = vmatprep.subr.mxu0 0.0
    %2230 = vmatpush2.msra.mxu0 0.0
    %2231 = vmatprep.subr.mxu0 0.0
    %2232 = vmatpush2.msra.mxu0 0.0
    %2233 = vmatprep.subr.mxu0 0.0
    %2234 = vmatpush2.msra.mxu0 0.0
    %2235 = vmatprep.subr.mxu0 0.0
    %2236 = vmatpush2.msra.mxu0 0.0
    %2237 = vmatprep.mubr.f32.mxu0 0.0
    %2238 = vmatmul.mubr.f32.gmra.mxu0 %v141
    %v2239 = vpop.f32.mrf.mxu0
    %v2240 = vadd.f32 0.0, %v2239
    %v2241 = vpop.f32.mrf.mxu0
    %2242 = vmatprep.mubr.f32.mxu0 0.0
    %2243 = vmatmul.mubr.f32.gmra.mxu0 %v144
    %v2244 = vpop.f32.mrf.mxu0
    %v2245 = vadd.f32 0.0, %v2244
    %v2246 = vpop.f32.mrf.mxu0
    %2247 = vdwg.mxu0
    %s2248 = scalar_lea.vmem %s4, 96
    %v2249 = vld [vmem:[%s2248] sm:$0xff]
    %v2250 = vld [vmem:[%s2248 + $0x8] sm:$0xff]
    %v2251 = vld [vmem:[%s2248 + $0x10] sm:$0xff]
    %v2252 = vld [vmem:[%s2248 + $0x18] sm:$0xff]
    %2253 = vmatprep.subr.mxu0 0.0
    %2254 = vmatpush1.msra.mxu0 0.0
    %2255 = vmatprep.subr.mxu0 0.0
    %2256 = vmatpush1.msra.mxu0 0.0
    %2257 = vmatprep.subr.mxu0 0.0
    %2258 = vmatpush1.msra.mxu0 0.0
    %2259 = vmatprep.subr.mxu0 0.0
    %2260 = vmatpush1.msra.mxu0 0.0
    %2261 = vmatprep.subr.mxu0 0.0
    %2262 = vmatpush1.msra.mxu0 0.0
    %2263 = vmatprep.subr.mxu0 0.0
    %2264 = vmatpush1.msra.mxu0 0.0
    %2265 = vmatprep.subr.mxu0 0.0
    %2266 = vmatpush1.msra.mxu0 0.0
    %2267 = vmatprep.subr.mxu0 0.0
    %2268 = vmatpush1.msra.mxu0 0.0
    %2269 = vmatprep.subr.mxu0 0.0
    %2270 = vmatpush1.msra.mxu0 0.0
    %2271 = vmatprep.subr.mxu0 0.0
    %2272 = vmatpush1.msra.mxu0 0.0
    %2273 = vmatprep.subr.mxu0 0.0
    %2274 = vmatpush1.msra.mxu0 0.0
    %2275 = vmatprep.subr.mxu0 0.0
    %2276 = vmatpush1.msra.mxu0 0.0
    %2277 = vmatprep.subr.mxu0 0.0
    %2278 = vmatpush1.msra.mxu0 %v2252
    %2279 = vmatprep.subr.mxu0 0.0
    %2280 = vmatpush1.msra.mxu0 %v2251
    %2281 = vmatprep.subr.mxu0 0.0
    %2282 = vmatpush1.msra.mxu0 %v2250
    %2283 = vmatprep.subr.mxu0 0.0
    %2284 = vmatpush1.msra.mxu0 %v2249
    %2285 = vmatprep.subr.mxu0 0.0
    %2286 = vmatpush2.msra.mxu0 0.0
    %2287 = vmatprep.subr.mxu0 0.0
    %2288 = vmatpush2.msra.mxu0 0.0
    %2289 = vmatprep.subr.mxu0 0.0
    %2290 = vmatpush2.msra.mxu0 0.0
    %2291 = vmatprep.subr.mxu0 0.0
    %2292 = vmatpush2.msra.mxu0 0.0
    %2293 = vmatprep.subr.mxu0 0.0
    %2294 = vmatpush2.msra.mxu0 0.0
    %2295 = vmatprep.subr.mxu0 0.0
    %2296 = vmatpush2.msra.mxu0 0.0
    %2297 = vmatprep.subr.mxu0 0.0
    %2298 = vmatpush2.msra.mxu0 0.0
    %2299 = vmatprep.subr.mxu0 0.0
    %2300 = vmatpush2.msra.mxu0 0.0
    %2301 = vmatprep.subr.mxu0 0.0
    %2302 = vmatpush2.msra.mxu0 0.0
    %2303 = vmatprep.subr.mxu0 0.0
    %2304 = vmatpush2.msra.mxu0 0.0
    %2305 = vmatprep.subr.mxu0 0.0
    %2306 = vmatpush2.msra.mxu0 0.0
    %2307 = vmatprep.subr.mxu0 0.0
    %2308 = vmatpush2.msra.mxu0 0.0
    %2309 = vmatprep.subr.mxu0 0.0
    %2310 = vmatpush2.msra.mxu0 0.0
    %2311 = vmatprep.subr.mxu0 0.0
    %2312 = vmatpush2.msra.mxu0 0.0
    %2313 = vmatprep.subr.mxu0 0.0
    %2314 = vmatpush2.msra.mxu0 0.0
    %2315 = vmatprep.subr.mxu0 0.0
    %2316 = vmatpush2.msra.mxu0 0.0
    %2317 = vmatprep.mubr.f32.mxu0 0.0
    %2318 = vmatmul.mubr.f32.gmra.mxu0 %v56
    %v2319 = vpop.f32.mrf.mxu0
    %v2320 = vadd.f32 0.0, %v2319
    %v2321 = vpop.f32.mrf.mxu0
    %2322 = vmatprep.mubr.f32.mxu0 0.0
    %2323 = vmatmul.mubr.f32.gmra.mxu0 %v59
    %v2324 = vpop.f32.mrf.mxu0
    %v2325 = vadd.f32 0.0, %v2324
    %v2326 = vpop.f32.mrf.mxu0
    %2327 = vdwg.mxu0
    %v2329 = vsel %vm379, %v2320, 0
    %v2332 = vsel %vm379, %v2160, 0
    %2334 = vmatprep.subr.mxu0 0.0
    %2335 = vmatpush1.xpose.msra.mxu0 0.0
    %2336 = vmatprep.subr.mxu0 0.0
    %2337 = vmatpush1.xpose.msra.mxu0 0.0
    %2338 = vmatprep.subr.mxu0 0.0
    %2339 = vmatpush1.xpose.msra.mxu0 0.0
    %2340 = vmatprep.subr.mxu0 0.0
    %2341 = vmatpush1.xpose.msra.mxu0 0.0
    %2342 = vmatprep.subr.mxu0 0.0
    %2343 = vmatpush1.xpose.msra.mxu0 0.0
    %2344 = vmatprep.subr.mxu0 0.0
    %2345 = vmatpush1.xpose.msra.mxu0 0.0
    %2346 = vmatprep.subr.mxu0 0.0
    %2347 = vmatpush1.xpose.msra.mxu0 0.0
    %2348 = vmatprep.subr.mxu0 0.0
    %2349 = vmatpush1.xpose.msra.mxu0 0.0
    %2350 = vmatprep.subr.mxu0 0.0
    %2351 = vmatpush1.xpose.msra.mxu0 0.0
    %2352 = vmatprep.subr.mxu0 0.0
    %2353 = vmatpush1.xpose.msra.mxu0 0.0
    %2354 = vmatprep.subr.mxu0 0.0
    %2355 = vmatpush1.xpose.msra.mxu0 0.0
    %2356 = vmatprep.subr.mxu0 0.0
    %2357 = vmatpush1.xpose.msra.mxu0 0.0
    %2358 = vmatprep.subr.mxu0 0.0
    %2359 = vmatpush1.xpose.msra.mxu0 0.0
    %2360 = vmatprep.subr.mxu0 0.0
    %2361 = vmatpush1.xpose.msra.mxu0 0.0
    %2362 = vmatprep.subr.mxu0 0.0
    %2363 = vmatpush1.xpose.msra.mxu0 0.0
    %2364 = vmatprep.subr.mxu0 0.0
    %2365 = vmatpush1.xpose.msra.mxu0 %v2332
    %2366 = vmatprep.subr.mxu0 0.0
    %2367 = vmatpush2.xpose.msra.mxu0 0.0
    %2368 = vmatprep.subr.mxu0 0.0
    %2369 = vmatpush2.xpose.msra.mxu0 0.0
    %2370 = vmatprep.subr.mxu0 0.0
    %2371 = vmatpush2.xpose.msra.mxu0 0.0
    %2372 = vmatprep.subr.mxu0 0.0
    %2373 = vmatpush2.xpose.msra.mxu0 0.0
    %2374 = vmatprep.subr.mxu0 0.0
    %2375 = vmatpush2.xpose.msra.mxu0 0.0
    %2376 = vmatprep.subr.mxu0 0.0
    %2377 = vmatpush2.xpose.msra.mxu0 0.0
    %2378 = vmatprep.subr.mxu0 0.0
    %2379 = vmatpush2.xpose.msra.mxu0 0.0
    %2380 = vmatprep.subr.mxu0 0.0
    %2381 = vmatpush2.xpose.msra.mxu0 0.0
    %2382 = vmatprep.subr.mxu0 0.0
    %2383 = vmatpush2.xpose.msra.mxu0 0.0
    %2384 = vmatprep.subr.mxu0 0.0
    %2385 = vmatpush2.xpose.msra.mxu0 0.0
    %2386 = vmatprep.subr.mxu0 0.0
    %2387 = vmatpush2.xpose.msra.mxu0 0.0
    %2388 = vmatprep.subr.mxu0 0.0
    %2389 = vmatpush2.xpose.msra.mxu0 0.0
    %2390 = vmatprep.subr.mxu0 0.0
    %2391 = vmatpush2.xpose.msra.mxu0 0.0
    %2392 = vmatprep.subr.mxu0 0.0
    %2393 = vmatpush2.xpose.msra.mxu0 0.0
    %2394 = vmatprep.subr.mxu0 0.0
    %2395 = vmatpush2.xpose.msra.mxu0 0.0
    %2396 = vmatprep.subr.mxu0 0.0
    %2397 = vmatpush2.xpose.msra.mxu0 0.0
    %2398 = vmatprep.mubr.f32.mxu0 0.0
    %2399 = vmatmul.mubr.f32.gmra.mxu0 %v2329
    %v2400 = vpop.f32.mrf.mxu0
    %v2401 = vadd.f32 0.0, %v2400
    %v2402 = vpop.f32.mrf.mxu0
    %2403 = vdwg.mxu0
    %v2405 = vsel %vm379, %v2325, 0
    %v2408 = vsel %vm379, %v2165, 0
    %2410 = vmatprep.subr.mxu0 0.0
    %2411 = vmatpush1.xpose.msra.mxu0 0.0
    %2412 = vmatprep.subr.mxu0 0.0
    %2413 = vmatpush1.xpose.msra.mxu0 0.0
    %2414 = vmatprep.subr.mxu0 0.0
    %2415 = vmatpush1.xpose.msra.mxu0 0.0
    %2416 = vmatprep.subr.mxu0 0.0
    %2417 = vmatpush1.xpose.msra.mxu0 0.0
    %2418 = vmatprep.subr.mxu0 0.0
    %2419 = vmatpush1.xpose.msra.mxu0 0.0
    %2420 = vmatprep.subr.mxu0 0.0
    %2421 = vmatpush1.xpose.msra.mxu0 0.0
    %2422 = vmatprep.subr.mxu0 0.0
    %2423 = vmatpush1.xpose.msra.mxu0 0.0
    %2424 = vmatprep.subr.mxu0 0.0
    %2425 = vmatpush1.xpose.msra.mxu0 0.0
    %2426 = vmatprep.subr.mxu0 0.0
    %2427 = vmatpush1.xpose.msra.mxu0 0.0
    %2428 = vmatprep.subr.mxu0 0.0
    %2429 = vmatpush1.xpose.msra.mxu0 0.0
    %2430 = vmatprep.subr.mxu0 0.0
    %2431 = vmatpush1.xpose.msra.mxu0 0.0
    %2432 = vmatprep.subr.mxu0 0.0
    %2433 = vmatpush1.xpose.msra.mxu0 0.0
    %2434 = vmatprep.subr.mxu0 0.0
    %2435 = vmatpush1.xpose.msra.mxu0 0.0
    %2436 = vmatprep.subr.mxu0 0.0
    %2437 = vmatpush1.xpose.msra.mxu0 0.0
    %2438 = vmatprep.subr.mxu0 0.0
    %2439 = vmatpush1.xpose.msra.mxu0 0.0
    %2440 = vmatprep.subr.mxu0 0.0
    %2441 = vmatpush1.xpose.msra.mxu0 %v2408
    %2442 = vmatprep.subr.mxu0 0.0
    %2443 = vmatpush2.xpose.msra.mxu0 0.0
    %2444 = vmatprep.subr.mxu0 0.0
    %2445 = vmatpush2.xpose.msra.mxu0 0.0
    %2446 = vmatprep.subr.mxu0 0.0
    %2447 = vmatpush2.xpose.msra.mxu0 0.0
    %2448 = vmatprep.subr.mxu0 0.0
    %2449 = vmatpush2.xpose.msra.mxu0 0.0
    %2450 = vmatprep.subr.mxu0 0.0
    %2451 = vmatpush2.xpose.msra.mxu0 0.0
    %2452 = vmatprep.subr.mxu0 0.0
    %2453 = vmatpush2.xpose.msra.mxu0 0.0
    %2454 = vmatprep.subr.mxu0 0.0
    %2455 = vmatpush2.xpose.msra.mxu0 0.0
    %2456 = vmatprep.subr.mxu0 0.0
    %2457 = vmatpush2.xpose.msra.mxu0 0.0
    %2458 = vmatprep.subr.mxu0 0.0
    %2459 = vmatpush2.xpose.msra.mxu0 0.0
    %2460 = vmatprep.subr.mxu0 0.0
    %2461 = vmatpush2.xpose.msra.mxu0 0.0
    %2462 = vmatprep.subr.mxu0 0.0
    %2463 = vmatpush2.xpose.msra.mxu0 0.0
    %2464 = vmatprep.subr.mxu0 0.0
    %2465 = vmatpush2.xpose.msra.mxu0 0.0
    %2466 = vmatprep.subr.mxu0 0.0
    %2467 = vmatpush2.xpose.msra.mxu0 0.0
    %2468 = vmatprep.subr.mxu0 0.0
    %2469 = vmatpush2.xpose.msra.mxu0 0.0
    %2470 = vmatprep.subr.mxu0 0.0
    %2471 = vmatpush2.xpose.msra.mxu0 0.0
    %2472 = vmatprep.subr.mxu0 0.0
    %2473 = vmatpush2.xpose.msra.mxu0 0.0
    %2474 = vmatprep.mubr.f32.mxu0 0.0
    %2475 = vmatmul.mubr.f32.gmra.mxu0 %v2405
    %v2476 = vpop.f32.mrf.mxu0
    %v2477 = vadd.f32 0.0, %v2476
    %v2478 = vpop.f32.mrf.mxu0
    %2479 = vdwg.mxu0
    %v2480 = vmul.f32 %v2401, 0.35355338
    %v2481 = vmul.f32 %v2477, 0.35355338
    %v2482 = vsel %vm379, %v2480, -inf
    %2483 = vmax.xlane.f32.xlu0 %v2482
    %v2484 = vpop.xlane.xlu0 %2483
    %v2485 = vsel %vm379, %v2481, -inf
    %2486 = vmax.xlane.f32.xlu0 %v2485
    %v2487 = vpop.xlane.xlu0 %2486
    %v2488 = vsub.f32 %v2480, %v2484
    %v2489 = vsub.f32 %v2481, %v2487
    %v2490 = vmul.f32 %v2488, 1.442695
    %v2491 = vpow.pop %v2490
    %v2492 = vmul.f32 %v2489, 1.442695
    %v2493 = vpow.pop %v2492
    %v2494 = vsel %vm379, %v2491, 0.0
    %2495 = vadd.xlane.f32.xlu0 %v2494
    %v2496 = vpop.xlane.xlu0 %2495
    %v2497 = vsel %vm379, %v2493, 0.0
    %2498 = vadd.xlane.f32.xlu0 %v2497
    %v2499 = vpop.xlane.xlu0 %2498
    %v2500 = vrcp.pop %v2496
    %v2501 = vrcp.pop %v2499
    %v2502 = vmul.f32 %v2491, %v2500
    %v2503 = vmul.f32 %v2493, %v2501
    %s2504 = scalar_lea.vmem [#allocation4], 48
    %2505 = vst.msk [vmem:[%s2504] sm:$0xff] %vm379, %v2502
    %2506 = vst.msk [vmem:[%s2504 + $0x8] sm:$0xff] %vm379, %v2503
    %v2508 = vsel %vm379, %v2502, 0
    %2510 = vmatprep.subr.mxu0 0.0
    %2511 = vmatpush1.msra.mxu0 0.0
    %2512 = vmatprep.subr.mxu0 0.0
    %2513 = vmatpush1.msra.mxu0 0.0
    %2514 = vmatprep.subr.mxu0 0.0
    %2515 = vmatpush1.msra.mxu0 0.0
    %2516 = vmatprep.subr.mxu0 0.0
    %2517 = vmatpush1.msra.mxu0 0.0
    %2518 = vmatprep.subr.mxu0 0.0
    %2519 = vmatpush1.msra.mxu0 0.0
    %2520 = vmatprep.subr.mxu0 0.0
    %2521 = vmatpush1.msra.mxu0 0.0
    %2522 = vmatprep.subr.mxu0 0.0
    %2523 = vmatpush1.msra.mxu0 0.0
    %2524 = vmatprep.subr.mxu0 0.0
    %2525 = vmatpush1.msra.mxu0 0.0
    %2526 = vmatprep.subr.mxu0 0.0
    %2527 = vmatpush1.msra.mxu0 0.0
    %2528 = vmatprep.subr.mxu0 0.0
    %2529 = vmatpush1.msra.mxu0 0.0
    %2530 = vmatprep.subr.mxu0 0.0
    %2531 = vmatpush1.msra.mxu0 0.0
    %2532 = vmatprep.subr.mxu0 0.0
    %2533 = vmatpush1.msra.mxu0 0.0
    %2534 = vmatprep.subr.mxu0 0.0
    %2535 = vmatpush1.msra.mxu0 0.0
    %2536 = vmatprep.subr.mxu0 0.0
    %2537 = vmatpush1.msra.mxu0 0.0
    %2538 = vmatprep.subr.mxu0 0.0
    %2539 = vmatpush1.msra.mxu0 0.0
    %2540 = vmatprep.subr.mxu0 0.0
    %2541 = vmatpush1.msra.mxu0 %v2240
    %2542 = vmatprep.subr.mxu0 0.0
    %2543 = vmatpush2.msra.mxu0 0.0
    %2544 = vmatprep.subr.mxu0 0.0
    %2545 = vmatpush2.msra.mxu0 0.0
    %2546 = vmatprep.subr.mxu0 0.0
    %2547 = vmatpush2.msra.mxu0 0.0
    %2548 = vmatprep.subr.mxu0 0.0
    %2549 = vmatpush2.msra.mxu0 0.0
    %2550 = vmatprep.subr.mxu0 0.0
    %2551 = vmatpush2.msra.mxu0 0.0
    %2552 = vmatprep.subr.mxu0 0.0
    %2553 = vmatpush2.msra.mxu0 0.0
    %2554 = vmatprep.subr.mxu0 0.0
    %2555 = vmatpush2.msra.mxu0 0.0
    %2556 = vmatprep.subr.mxu0 0.0
    %2557 = vmatpush2.msra.mxu0 0.0
    %2558 = vmatprep.subr.mxu0 0.0
    %2559 = vmatpush2.msra.mxu0 0.0
    %2560 = vmatprep.subr.mxu0 0.0
    %2561 = vmatpush2.msra.mxu0 0.0
    %2562 = vmatprep.subr.mxu0 0.0
    %2563 = vmatpush2.msra.mxu0 0.0
    %2564 = vmatprep.subr.mxu0 0.0
    %2565 = vmatpush2.msra.mxu0 0.0
    %2566 = vmatprep.subr.mxu0 0.0
    %2567 = vmatpush2.msra.mxu0 0.0
    %2568 = vmatprep.subr.mxu0 0.0
    %2569 = vmatpush2.msra.mxu0 0.0
    %2570 = vmatprep.subr.mxu0 0.0
    %2571 = vmatpush2.msra.mxu0 0.0
    %2572 = vmatprep.subr.mxu0 0.0
    %2573 = vmatpush2.msra.mxu0 0.0
    %2574 = vmatprep.mubr.f32.mxu0 0.0
    %2575 = vmatmul.mubr.f32.gmra.mxu0 %v2508
    %v2576 = vpop.f32.mrf.mxu0
    %v2577 = vadd.f32 0.0, %v2576
    %v2578 = vpop.f32.mrf.mxu0
    %2579 = vdwg.mxu0
    %v2581 = vsel %vm379, %v2503, 0
    %2583 = vmatprep.subr.mxu0 0.0
    %2584 = vmatpush1.msra.mxu0 0.0
    %2585 = vmatprep.subr.mxu0 0.0
    %2586 = vmatpush1.msra.mxu0 0.0
    %2587 = vmatprep.subr.mxu0 0.0
    %2588 = vmatpush1.msra.mxu0 0.0
    %2589 = vmatprep.subr.mxu0 0.0
    %2590 = vmatpush1.msra.mxu0 0.0
    %2591 = vmatprep.subr.mxu0 0.0
    %2592 = vmatpush1.msra.mxu0 0.0
    %2593 = vmatprep.subr.mxu0 0.0
    %2594 = vmatpush1.msra.mxu0 0.0
    %2595 = vmatprep.subr.mxu0 0.0
    %2596 = vmatpush1.msra.mxu0 0.0
    %2597 = vmatprep.subr.mxu0 0.0
    %2598 = vmatpush1.msra.mxu0 0.0
    %2599 = vmatprep.subr.mxu0 0.0
    %2600 = vmatpush1.msra.mxu0 0.0
    %2601 = vmatprep.subr.mxu0 0.0
    %2602 = vmatpush1.msra.mxu0 0.0
    %2603 = vmatprep.subr.mxu0 0.0
    %2604 = vmatpush1.msra.mxu0 0.0
    %2605 = vmatprep.subr.mxu0 0.0
    %2606 = vmatpush1.msra.mxu0 0.0
    %2607 = vmatprep.subr.mxu0 0.0
    %2608 = vmatpush1.msra.mxu0 0.0
    %2609 = vmatprep.subr.mxu0 0.0
    %2610 = vmatpush1.msra.mxu0 0.0
    %2611 = vmatprep.subr.mxu0 0.0
    %2612 = vmatpush1.msra.mxu0 0.0
    %2613 = vmatprep.subr.mxu0 0.0
    %2614 = vmatpush1.msra.mxu0 %v2245
    %2615 = vmatprep.subr.mxu0 0.0
    %2616 = vmatpush2.msra.mxu0 0.0
    %2617 = vmatprep.subr.mxu0 0.0
    %2618 = vmatpush2.msra.mxu0 0.0
    %2619 = vmatprep.subr.mxu0 0.0
    %2620 = vmatpush2.msra.mxu0 0.0
    %2621 = vmatprep.subr.mxu0 0.0
    %2622 = vmatpush2.msra.mxu0 0.0
    %2623 = vmatprep.subr.mxu0 0.0
    %2624 = vmatpush2.msra.mxu0 0.0
    %2625 = vmatprep.subr.mxu0 0.0
    %2626 = vmatpush2.msra.mxu0 0.0
    %2627 = vmatprep.subr.mxu0 0.0
    %2628 = vmatpush2.msra.mxu0 0.0
    %2629 = vmatprep.subr.mxu0 0.0
    %2630 = vmatpush2.msra.mxu0 0.0
    %2631 = vmatprep.subr.mxu0 0.0
    %2632 = vmatpush2.msra.mxu0 0.0
    %2633 = vmatprep.subr.mxu0 0.0
    %2634 = vmatpush2.msra.mxu0 0.0
    %2635 = vmatprep.subr.mxu0 0.0
    %2636 = vmatpush2.msra.mxu0 0.0
    %2637 = vmatprep.subr.mxu0 0.0
    %2638 = vmatpush2.msra.mxu0 0.0
    %2639 = vmatprep.subr.mxu0 0.0
    %2640 = vmatpush2.msra.mxu0 0.0
    %2641 = vmatprep.subr.mxu0 0.0
    %2642 = vmatpush2.msra.mxu0 0.0
    %2643 = vmatprep.subr.mxu0 0.0
    %2644 = vmatpush2.msra.mxu0 0.0
    %2645 = vmatprep.subr.mxu0 0.0
    %2646 = vmatpush2.msra.mxu0 0.0
    %2647 = vmatprep.mubr.f32.mxu0 0.0
    %2648 = vmatmul.mubr.f32.gmra.mxu0 %v2581
    %v2649 = vpop.f32.mrf.mxu0
    %v2650 = vadd.f32 0.0, %v2649
    %v2651 = vpop.f32.mrf.mxu0
    %2652 = vdwg.mxu0
    %s2653 = scalar_lea.vmem %s6, 24
    %v2654 = vld [vmem:[%s2653] sm:$0xff]
    %v2656 = vsel %vm379, %v2577, 0
    %v2659 = vsel %vm379, %v2650, 0
    %2661 = vmatprep.subr.mxu0 0.0
    %2662 = vmatpush1.msra.mxu0 0.0
    %2663 = vmatprep.subr.mxu0 0.0
    %2664 = vmatpush1.msra.mxu0 0.0
    %2665 = vmatprep.subr.mxu0 0.0
    %2666 = vmatpush1.msra.mxu0 0.0
    %2667 = vmatprep.subr.mxu0 0.0
    %2668 = vmatpush1.msra.mxu0 0.0
    %2669 = vmatprep.subr.mxu0 0.0
    %2670 = vmatpush1.msra.mxu0 0.0
    %2671 = vmatprep.subr.mxu0 0.0
    %2672 = vmatpush1.msra.mxu0 0.0
    %2673 = vmatprep.subr.mxu0 0.0
    %2674 = vmatpush1.msra.mxu0 0.0
    %2675 = vmatprep.subr.mxu0 0.0
    %2676 = vmatpush1.msra.mxu0 0.0
    %2677 = vmatprep.subr.mxu0 0.0
    %2678 = vmatpush1.msra.mxu0 0.0
    %2679 = vmatprep.subr.mxu0 0.0
    %2680 = vmatpush1.msra.mxu0 0.0
    %2681 = vmatprep.subr.mxu0 0.0
    %2682 = vmatpush1.msra.mxu0 0.0
    %2683 = vmatprep.subr.mxu0 0.0
    %2684 = vmatpush1.msra.mxu0 0.0
    %2685 = vmatprep.subr.mxu0 0.0
    %2686 = vmatpush1.msra.mxu0 0.0
    %2687 = vmatprep.subr.mxu0 0.0
    %2688 = vmatpush1.msra.mxu0 0.0
    %2689 = vmatprep.subr.mxu0 0.0
    %2690 = vmatpush1.msra.mxu0 0.0
    %2691 = vmatprep.subr.mxu0 0.0
    %2692 = vmatpush1.msra.mxu0 %v2654
    %2693 = vmatprep.subr.mxu0 0.0
    %2694 = vmatpush2.msra.mxu0 0.0
    %2695 = vmatprep.subr.mxu0 0.0
    %2696 = vmatpush2.msra.mxu0 0.0
    %2697 = vmatprep.subr.mxu0 0.0
    %2698 = vmatpush2.msra.mxu0 0.0
    %2699 = vmatprep.subr.mxu0 0.0
    %2700 = vmatpush2.msra.mxu0 0.0
    %2701 = vmatprep.subr.mxu0 0.0
    %2702 = vmatpush2.msra.mxu0 0.0
    %2703 = vmatprep.subr.mxu0 0.0
    %2704 = vmatpush2.msra.mxu0 0.0
    %2705 = vmatprep.subr.mxu0 0.0
    %2706 = vmatpush2.msra.mxu0 0.0
    %2707 = vmatprep.subr.mxu0 0.0
    %2708 = vmatpush2.msra.mxu0 0.0
    %2709 = vmatprep.subr.mxu0 0.0
    %2710 = vmatpush2.msra.mxu0 0.0
    %2711 = vmatprep.subr.mxu0 0.0
    %2712 = vmatpush2.msra.mxu0 0.0
    %2713 = vmatprep.subr.mxu0 0.0
    %2714 = vmatpush2.msra.mxu0 0.0
    %2715 = vmatprep.subr.mxu0 0.0
    %2716 = vmatpush2.msra.mxu0 0.0
    %2717 = vmatprep.subr.mxu0 0.0
    %2718 = vmatpush2.msra.mxu0 0.0
    %2719 = vmatprep.subr.mxu0 0.0
    %2720 = vmatpush2.msra.mxu0 0.0
    %2721 = vmatprep.subr.mxu0 0.0
    %2722 = vmatpush2.msra.mxu0 0.0
    %2723 = vmatprep.subr.mxu0 0.0
    %2724 = vmatpush2.msra.mxu0 0.0
    %2725 = vmatprep.mubr.f32.mxu0 0.0
    %2726 = vmatmul.mubr.f32.gmra.mxu0 %v2656
    %v2727 = vpop.f32.mrf.mxu0
    %v2728 = vadd.f32 0.0, %v2727
    %v2729 = vpop.f32.mrf.mxu0
    %2730 = vmatprep.mubr.f32.mxu0 0.0
    %2731 = vmatmul.mubr.f32.gmra.mxu0 %v2659
    %v2732 = vpop.f32.mrf.mxu0
    %v2733 = vadd.f32 0.0, %v2732
    %v2734 = vpop.f32.mrf.mxu0
    %2735 = vdwg.mxu0
    %v2736 = vadd.f32 %v2086, %v2728
    %v2737 = vadd.f32 %v2087, %v2733
    %v2738 = vadd.f32 %v2736, %v41
    %v2739 = vadd.f32 %v2737, %v42
    %v2740 = vsel %vm54, %v2738, 0.0
    %2741 = vadd.xlane.f32.xlu0 %v2740
    %v2742 = vpop.xlane.xlu0 %2741
    %v2743 = vsel %vm54, %v2739, 0.0
    %2744 = vadd.xlane.f32.xlu0 %v2743
    %v2745 = vpop.xlane.xlu0 %2744
    %v2746 = vrcp.pop 32.0
    %v2747 = vmul.f32 %v2742, %v2746
    %v2748 = vmul.f32 %v2745, %v2746
    %v2749 = vsub.f32 %v2738, %v2747
    %v2750 = vsub.f32 %v2739, %v2748
    %v2751 = vmul.f32 %v2749, %v2749
    %v2752 = vmul.f32 %v2750, %v2750
    %v2753 = vsel %vm54, %v2751, 0.0
    %2754 = vadd.xlane.f32.xlu0 %v2753
    %v2755 = vpop.xlane.xlu0 %2754
    %v2756 = vsel %vm54, %v2752, 0.0
    %2757 = vadd.xlane.f32.xlu0 %v2756
    %v2758 = vpop.xlane.xlu0 %2757
    %v2759 = vmul.f32 %v2755, %v2746
    %v2760 = vmul.f32 %v2758, %v2746
    %v2761 = vadd.f32 %v2759, 1e-05
    %v2762 = vadd.f32 %v2760, 1e-05
    %v2763 = vrsqrt.pop %v2761
    %v2764 = vrsqrt.pop %v2762
    %v2765 = vmul.f32 %v2749, %v2763
    %v2766 = vmul.f32 %v2750, %v2764
    %v2767 = vld [vmem:[%s8] sm:$0x1]
    %v2769 = vlaneseq
    %v2770 = vshrl.u32 %v2769, 7
    %v2771 = vsub.s32 0, %v2770
    %v2772 = vrot.slane %v2767, %v2771
    %v2774 = vmul.f32 %v2765, %v2772
    %v2775 = vmul.f32 %v2766, %v2772
    %v2776 = vld [vmem:[%s9] sm:$0x1]
    %v2778 = vlaneseq
    %v2779 = vshrl.u32 %v2778, 7
    %v2780 = vsub.s32 0, %v2779
    %v2781 = vrot.slane %v2776, %v2780
    %v2783 = vadd.f32 %v2774, %v2781
    %v2784 = vadd.f32 %v2775, %v2781
    %2785 = vst.msk [vmem:[#allocation2] sm:$0xff] %vm54, %v2783
    %2786 = vst.msk [vmem:[#allocation2 + $0x8] sm:$0xff] %vm54, %v2784
    // Predicated region
    $region42: #{tpu_custom_call.1} parent=1 // pred_check
      _
    $region43: #{tpu_custom_call.1} parent=1 // pred_check_branch
      %2788 = sbr.rel (0) target = $region45
    $region44: #{tpu_custom_call.1} parent=1 // pred_region
      %s2790 = ssub.s32 256, 256
      %2791 = vsyncadd [#allocation3], %s2790
      %s2792 = sshll.u32 [#allocation2], 4
      %s2793 = int_to_ptr.vmem [resolvable:$true] %s2792
      %2798 = dma.vmem_to_hbm [thread:$0]  %s2793, 256, %s10, [#allocation3], 128, 128, 8
    $region45: #{tpu_custom_call.1} parent=1 // pred_fallthru
      _
    // Predicated region
    $region46: #{tpu_custom_call.1} parent=1 // pred_check
      _
    $region47: #{tpu_custom_call.1} parent=1 // pred_check_branch
      %2800 = sbr.rel (0) target = $region49
    $region48: #{tpu_custom_call.1} parent=1 // pred_region
      %s2802 = ssub.s32 1024, 1024
      %2803 = vsyncadd [#allocation5], %s2802
      %s2804 = sshll.u32 [#allocation4], 4
      %s2805 = int_to_ptr.vmem [resolvable:$true] %s2804
      %2810 = dma.vmem_to_hbm [thread:$0]  %s2805, 1024, %s11, [#allocation5], 128, 128, 8
    $region49: #{tpu_custom_call.1} parent=1 // pred_fallthru
      _
    // Predicated region
    $region50: #{tpu_custom_call.1} parent=1 // pred_check
      _
    $region51: #{tpu_custom_call.1} parent=1 // pred_check_branch
      %2812 = sbr.rel (0) target = $region53
    $region52: #{tpu_custom_call.1} parent=1 // pred_region
      %2813 = dma.done [#allocation3], 256
    $region53: #{tpu_custom_call.1} parent=1 // pred_fallthru
      _
    // Predicated region
    $region54: #{tpu_custom_call.1} parent=1 // pred_check
      _
    $region55: #{tpu_custom_call.1} parent=1 // pred_check_branch
      %2815 = sbr.rel (0) target = $region57
    $region56: #{tpu_custom_call.1} parent=1 // pred_region
      %2816 = dma.done [#allocation5], 1024
    $region57: #{tpu_custom_call.1} parent=1 // pred_fallthru
      _
    %2817 = vsyncpa [#allocation3], 1
    %2818 = vsyncpa [#allocation5], 1

</llo_original>
